<compile_context>
chip_gen: v7x
topology: tpu7x:2x2x1
jax: 0.10.0
libtpu: 0.0.40
codegen_flags: <defaults>
</compile_context>

<pallas_src>
import numpy as np
import jax
import jax.numpy as jnp
from jax import lax
from jax.experimental import pallas as pl
from jax.experimental.pallas import tpu as pltpu

RNN_STEPS = 16
N_TRI = 15
LANES = 128
SUB = 8          # sublane rows of one f32/int32 vreg


# --- fabric wiring (transcribed verbatim from one_layer_net.forward) ---------
def _P(t, s):
    return ("prev", t, s)


_A = ("a",)
_B = ("b",)
_NEG1 = ("neg1",)

WIRING = [
    (_P(1, 0),  _P(12, 1), _P(5, 2)),   # fabric[0]
    (_P(0, 0),  _P(2, 1),  _P(9, 2)),   # fabric[1]
    (_P(7, 0),  _P(1, 1),  _P(3, 2)),   # fabric[2]
    (_P(4, 0),  _P(6, 1),  _P(2, 2)),   # fabric[3]
    (_P(3, 0),  _P(5, 1),  _B),         # fabric[4]
    (_P(8, 0),  _P(4, 1),  _P(0, 2)),   # fabric[5]
    (_NEG1,     _P(3, 1),  _A),         # fabric[6]
    (_P(2, 0),  _NEG1,     _NEG1),      # fabric[7]
    (_P(5, 0),  _P(14, 1), _NEG1),      # fabric[8]
    (_NEG1,     _P(10, 1), _P(1, 2)),   # fabric[9]
    (_P(11, 0), _P(9, 1),  _NEG1),      # fabric[10]
    (_P(10, 0), _NEG1,     _P(12, 2)),  # fabric[11]
    (_P(13, 0), _P(0, 1),  _P(11, 2)),  # fabric[12]
    (_P(12, 0), _NEG1,     _P(14, 2)),  # fabric[13]
    (_NEG1,     _P(8, 1),  _P(13, 2)),  # fabric[14]
]

# Triangle.forward(x0,x1,x2) = [lut0(x1,x2), lut1(x0,x2), lut2(x0,x1)]
_LUT_IN = ((1, 2), (0, 2), (0, 1))
# module output = [prev[11][1], prev[10][2], prev[7][2]]
OUTPUT_KEYS = ((11, 1), (10, 2), (7, 2))


def _lut_inputs(t, l):
    srcs = WIRING[t]
    ia, ib = _LUT_IN[l]
    return srcs[ia], srcs[ib]


# Signals consumed by the recurrence (the rest are dead and never computed).
WIRED = tuple(sorted({(s[1], s[2]) for tri in WIRING for s in tri
                      if s[0] == "prev"}))
# Wired signals whose own inputs contain no `prev` source: constant from
# step 1 onward -> hoisted out of the recurrence ((7,0) and (6,1) here).
INVARIANT = tuple(k for k in WIRED
                  if all(src[0] != "prev" for src in _lut_inputs(*k)))
# Time-varying recurrent signals -> one bit each in the packed state word.
CARRIED = tuple(k for k in WIRED if k not in INVARIANT)
assert len(CARRIED) <= 32, "bit-packed recurrence needs <= 32 live signals"
BIT = {k: i for i, k in enumerate(CARRIED)}


def _i32(mask):
    """Python int bit pattern -> python int that is a valid int32 literal."""
    return int(np.array(mask & 0xFFFFFFFF, dtype=np.uint32).view(np.int32))


def _build_side(which):
    """Static routing/constant tables for LUT input `which` (0 = a, 1 = b)."""
    route = {}                             # shift delta -> mask of SOURCE bits
    prim_a = 0                             # dest bits fed by primary input a
    prim_b = 0                             # dest bits fed by primary input b
    inv_bits = {k: 0 for k in INVARIANT}   # dest bits fed by invariant signals
    for key in CARRIED:
        i = BIT[key]
        src = _lut_inputs(*key)[which]
        kind = src[0]
        if kind == "neg1":
            continue
        if kind == "a":
            prim_a |= 1 << i
        elif kind == "b":
            prim_b |= 1 << i
        else:
            sk = (src[1], src[2])
            if sk in BIT:
                j = BIT[sk]
                route[i - j] = route.get(i - j, 0) | (1 << j)
            else:
                inv_bits[sk] |= 1 << i
    return tuple(sorted(route.items())), prim_a, prim_b, inv_bits


ROUTE_A, PRIM_A_A, PRIM_B_A, INV_A_BITS = _build_side(0)
ROUTE_B, PRIM_A_B, PRIM_B_B, INV_B_BITS = _build_side(1)


# --- Pallas kernel ------------------------------------------------------------
def fabric_kernel(packed_ref, w_ref, x_ref, out_ref):
    """packed_ref: SMEM int32 (4 + 4*len(INVARIANT),)
         [0:4]      bit-packed weight-sign words S0..S3 (bit i = carried LUT i)
         [4+4n+k]   sign bit (0/1) of weight k of invariant LUT n
       w_ref   : SMEM f32 (180,)  flattened (15,3,4) weights
       x_ref   : VMEM f32 (2, spb, 8, 128)  [0]=a lanes, [1]=b lanes
       out_ref : VMEM f32 (3, spb, 8, 128)  rows = [prev[11][1], prev[10][2], prev[7][2]]
    """
    spb = x_ref.shape[1]
    vshape = (SUB, LANES)

    # --- hoisted, slice/step-invariant scalars & splats ----------------------
    s0 = packed_ref[0]
    s1 = packed_ref[1]
    s2 = packed_ref[2]
    s3 = packed_ref[3]
    s0v = jnp.broadcast_to(s0, vshape)
    s2v = jnp.broadcast_to(s2, vshape)
    x01v = jnp.broadcast_to(s0 ^ s1, vshape)
    x23v = jnp.broadcast_to(s2 ^ s3, vshape)

    inv_sgn = {key: tuple(packed_ref[4 + 4 * n + k] for k in range(4))
               for n, key in enumerate(INVARIANT)}
    out_w = {key: tuple(w_ref[(key[0] * 3 + key[1]) * 4 + k] for k in range(4))
             for key in OUTPUT_KEYS}

    def mux_int(c, hi, lo):
        # 2:1 mux on {0,1} ints; python-bool conditions fold at trace time.
        if c is False:
            return lo
        if c is True:
            return hi
        return lo + (hi - lo) * c

    def combine(ma, mb):
        # Per bit: mb ? (ma ? s3 : s2) : (ma ? s1 : s0)
        t0 = s0v ^ (x01v & ma)
        t1 = s2v ^ (x23v & ma)
        return t0 ^ ((t0 ^ t1) & mb)

    def route(state, table):
        # Gather each destination bit from its source bit (grouped by shift).
        acc = None
        for delta, smask in table:
            part = state & _i32(smask)
            if delta > 0:
                part = part << delta
            elif delta < 0:
                # arithmetic >> on int32, then mask away sign-extension bits
                part = (part >> (-delta)) & _i32(smask >> (-delta))
            acc = part if acc is None else (acc | part)
        return acc if acc is not None else jnp.int32(0)

    @pl.loop(0, spb)
    def _slice(si):
        a = x_ref[0, si, :, :]
        b = x_ref[1, si, :, :]
        a_i = (a > 0.0).astype(jnp.int32)       # 0/1 sign masks of the inputs
        b_i = (b > 0.0).astype(jnp.int32)

        prim = {"neg1": False, "a": a_i, "b": b_i}

        # Steady-state 0/1 masks of the invariant signals (valid from step 2).
        inv_m = {}
        for key in INVARIANT:
            g0, g1, g2, g3 = inv_sgn[key]
            sa, sb = _lut_inputs(*key)
            ma = prim[sa[0]]
            mb = prim[sb[0]]
            inv_m[key] = mux_int(mb, mux_int(ma, g3, g2), mux_int(ma, g1, g0))

        def const_word(pa_bits, pb_bits, inv_bits):
            acc = None
            if pa_bits:
                acc = a_i * _i32(pa_bits)
            if pb_bits:
                p = b_i * _i32(pb_bits)
                acc = p if acc is None else acc | p
            for key, bits in inv_bits.items():
                if bits:
                    p = inv_m[key] * _i32(bits)
                    acc = p if acc is None else acc | p
            return acc if acc is not None else jnp.int32(0)

        # Loop-invariant MA/MB contributions (primary inputs + invariant LUTs).
        inv_a = const_word(PRIM_A_A, PRIM_B_A, INV_A_BITS)
        inv_b = const_word(PRIM_A_B, PRIM_B_B, INV_B_BITS)

        # ---- step 1: the all-(-1) initial state folds to primaries only -----
        state1 = combine(const_word(PRIM_A_A, PRIM_B_A, {}),
                         const_word(PRIM_A_B, PRIM_B_B, {}))

        # ---- steps 2..15: boolean recurrence, one int32 vreg of carry -------
        def step(_, st):
            ma = inv_a | route(st, ROUTE_A)
            mb = inv_b | route(st, ROUTE_B)
            return combine(ma, mb)

        state = lax.fori_loop(0, RNN_STEPS - 2, step, state1, unroll=True)

        # ---- step 16: only the three output LUTs, materialized in f32 -------
        def sig_mask(src):
            kind = src[0]
            if kind == "neg1":
                return False
            if kind == "a":
                return a_i != 0
            if kind == "b":
                return b_i != 0
            sk = (src[1], src[2])
            if sk in BIT:
                return ((state >> BIT[sk]) & 1) != 0
            return inv_m[sk] != 0

        def mux_f32(c, hi, lo):
            if c is False:
                return lo
            if c is True:
                return hi
            return jnp.where(c, hi, lo)

        for r, key in enumerate(OUTPUT_KEYS):
            w0, w1, w2, w3 = out_w[key]
            sa, sb = _lut_inputs(*key)
            ma = sig_mask(sa)
            mb = sig_mask(sb)
            val = mux_f32(mb, mux_f32(ma, w3, w2), mux_f32(ma, w1, w0))
            out_ref[r, si, :, :] = jnp.broadcast_to(val, vshape).astype(jnp.float32)


# --- wrapper ------------------------------------------------------------------
def one_layer_net_forward(weights, x, block_slices=None):
    """weights: (15, 3, 4) f32.  x: (2, B) f32, each column one (a, b) input pair.
    Returns (3, B) f32 = [prev[11][1], prev[10][2], prev[7][2]] per column."""
    B = int(x.shape[1])
    n_slices = max(1, -(-B // (SUB * LANES)))     # number of (8,128) batch tiles
    if block_slices is None:
        if n_slices <= 1:
            spb = 1
        elif n_slices <= 15:
            spb = -(-n_slices // 2)               # >= 2 grid blocks (v7x dual-TC)
        else:
            spb = 8                               # 64 rows/block amortizes grid overhead
    else:
        spb = max(1, int(block_slices))
    total_slices = -(-n_slices // spb) * spb
    n_blocks = total_slices // spb
    Bp = total_slices * SUB * LANES

    xp = jnp.zeros((2, Bp), jnp.float32).at[:, :B].set(x.astype(jnp.float32))
    xp = xp.reshape(2, total_slices, SUB, LANES)

    w = weights.astype(jnp.float32).reshape(N_TRI * 3, 4)
    w_flat = w.reshape(-1)                         # (180,) f32 -> SMEM
    sgn = w > 0.0                                  # (45, 4) weight sign bits

    # Bit-packed sign words: bit i of word k = sign(weight k) of carried LUT i.
    bitpat = jnp.asarray(
        (np.ones(len(CARRIED), np.uint32)
         << np.arange(len(CARRIED), dtype=np.uint32)).view(np.int32))
    rows = np.array([t * 3 + l for (t, l) in CARRIED], np.int32)
    sc = sgn[rows]                                 # (n_carried, 4)
    s_words = [jnp.sum(jnp.where(sc[:, k], bitpat, 0), dtype=jnp.int32)
               for k in range(4)]
    inv_sign = [sgn[t * 3 + l, k].astype(jnp.int32)
                for (t, l) in INVARIANT for k in range(4)]
    packed = jnp.stack(s_words + inv_sign)         # (4 + 4*n_inv,) int32 -> SMEM

    out = pl.pallas_call(
        fabric_kernel,
        out_shape=jax.ShapeDtypeStruct((3, total_slices, SUB, LANES), jnp.float32),
        grid=(n_blocks,),
        in_specs=[
            pl.BlockSpec(memory_space=pltpu.MemorySpace.SMEM),           # packed signs
            pl.BlockSpec(memory_space=pltpu.MemorySpace.SMEM),           # weights
            pl.BlockSpec((2, spb, SUB, LANES), lambda i: (0, i, 0, 0)),  # a/b lanes
        ],
        out_specs=pl.BlockSpec((3, spb, SUB, LANES), lambda i: (0, i, 0, 0)),
        compiler_params=pltpu.CompilerParams(
            dimension_semantics=("parallel",)),    # batch blocks are independent
    )(packed, w_flat, xp)
    return out.reshape(3, Bp)[:, :B]


# --- pure-JAX reference (for correctness check) --------------------------------
def reference_forward(weights, x):
    a_in = x[0:1, :].astype(jnp.float32)
    b_in = x[1:2, :].astype(jnp.float32)
    neg1 = jnp.full_like(a_in, -1.0)

    def resolve(src, prev):
        if src[0] == "prev":
            return prev[src[1]][src[2]]
        if src[0] == "a":
            return a_in
        if src[0] == "b":
            return b_in
        return neg1

    def lut2(t, l, sa, sb):
        w0, w1, w2, w3 = [weights[t, l, k] for k in range(4)]
        inner1 = jnp.where(sa > 0, w1, w0)
        inner2 = jnp.where(sa > 0, w3, w2)
        return jnp.where(sb > 0, inner2, inner1)

    prev = [[neg1, neg1, neg1] for _ in range(N_TRI)]
    for _ in range(RNN_STEPS):
        nxt = []
        for t, (s0, s1, s2) in enumerate(WIRING):
            x0 = resolve(s0, prev)
            x1 = resolve(s1, prev)
            x2 = resolve(s2, prev)
            nxt.append([lut2(t, 0, x1, x2),
                        lut2(t, 1, x0, x2),
                        lut2(t, 2, x0, x1)])
        prev = nxt
    return jnp.concatenate([prev[11][1], prev[10][2], prev[7][2]], axis=0)


if __name__ == "__main__":
    key = jax.random.PRNGKey(0)
    kw, kx = jax.random.split(key)
    # Deterministic synthetic parameters (module init is zeros, which is
    # degenerate; use small deterministic random weights for a meaningful run).
    weights = jax.random.uniform(kw, (15, 3, 4), jnp.float32,
                                 minval=-1.0, maxval=1.0)

    # Batch of 8 independent (a, b) input pairs; each column == one PyTorch
    # forward call with x = [a, b]  (noise = 0.0, the module default).
    B = 8
    x = jax.random.uniform(kx, (2, B), jnp.float32, minval=-1.0, maxval=1.0)
    out = one_layer_net_forward(weights, x)
    jax.block_until_ready(out)
    ref = reference_forward(weights, x)
    assert out.shape == (3, B)
    assert jnp.allclose(out, ref, atol=1e-6), "mismatch vs reference (B=8)"

    # Larger batch exercising multiple (8,128) slices and >= 2 grid blocks.
    B2 = 2500
    x2 = jax.random.uniform(jax.random.PRNGKey(1), (2, B2), jnp.float32,
                            minval=-1.0, maxval=1.0)
    out2 = one_layer_net_forward(weights, x2)
    jax.block_until_ready(out2)
    ref2 = reference_forward(weights, x2)
    assert out2.shape == (3, B2)
    assert jnp.allclose(out2, ref2, atol=1e-6), "mismatch vs reference (B=2500)"

    print("KERNEL_OK")
</pallas_src>

<mosaic_0001>
module attributes {stable_mosaic.version = 11 : i64} {
  func.func @fabric_kernel(%arg0: i32, %arg1: memref<12xi32, #tpu.memory_space<smem>>, %arg2: memref<180xf32, #tpu.memory_space<smem>>, %arg3: memref<2x1x8x128xf32, #tpu.memory_space<vmem>>, %arg4: memref<3x1x8x128xf32, #tpu.memory_space<vmem>>) attributes {dimension_semantics = [#tpu.dimension_semantics<parallel>], iteration_bounds = array<i64: 1>, scalar_prefetch = 0 : i64, scratch_operands = 0 : i64, tpu.core_type = #tpu.core_type<tc>, window_params = [{transform_indices = @transform_0, window_bounds = array<i64: 12>}, {transform_indices = @transform_1, window_bounds = array<i64: 180>}, {transform_indices = @transform_2, window_bounds = array<i64: 2, 1, 8, 128>}, {transform_indices = @transform_3, window_bounds = array<i64: 3, 1, 8, 128>}]} {
    %c0 = arith.constant 0 : index
    %0 = memref.load %arg1[%c0] : memref<12xi32, #tpu.memory_space<smem>>
    %c1 = arith.constant 1 : index
    %1 = memref.load %arg1[%c1] : memref<12xi32, #tpu.memory_space<smem>>
    %c2 = arith.constant 2 : index
    %2 = memref.load %arg1[%c2] : memref<12xi32, #tpu.memory_space<smem>>
    %c3 = arith.constant 3 : index
    %3 = memref.load %arg1[%c3] : memref<12xi32, #tpu.memory_space<smem>>
    %4 = vector.broadcast %0 : i32 to vector<8x128xi32>
    %5 = vector.broadcast %2 : i32 to vector<8x128xi32>
    %6 = arith.xori %0, %1 : i32
    %7 = vector.broadcast %6 : i32 to vector<8x128xi32>
    %8 = arith.xori %2, %3 : i32
    %9 = vector.broadcast %8 : i32 to vector<8x128xi32>
    %c4 = arith.constant 4 : index
    %10 = memref.load %arg1[%c4] : memref<12xi32, #tpu.memory_space<smem>>
    %c6 = arith.constant 6 : index
    %11 = memref.load %arg1[%c6] : memref<12xi32, #tpu.memory_space<smem>>
    %c8 = arith.constant 8 : index
    %12 = memref.load %arg1[%c8] : memref<12xi32, #tpu.memory_space<smem>>
    %c136 = arith.constant 136 : index
    %13 = memref.load %arg2[%c136] : memref<180xf32, #tpu.memory_space<smem>>
    %c137 = arith.constant 137 : index
    %14 = memref.load %arg2[%c137] : memref<180xf32, #tpu.memory_space<smem>>
    %c138 = arith.constant 138 : index
    %15 = memref.load %arg2[%c138] : memref<180xf32, #tpu.memory_space<smem>>
    %c139 = arith.constant 139 : index
    %16 = memref.load %arg2[%c139] : memref<180xf32, #tpu.memory_space<smem>>
    %c128 = arith.constant 128 : index
    %17 = memref.load %arg2[%c128] : memref<180xf32, #tpu.memory_space<smem>>
    %c129 = arith.constant 129 : index
    %18 = memref.load %arg2[%c129] : memref<180xf32, #tpu.memory_space<smem>>
    %c130 = arith.constant 130 : index
    %19 = memref.load %arg2[%c130] : memref<180xf32, #tpu.memory_space<smem>>
    %c131 = arith.constant 131 : index
    %20 = memref.load %arg2[%c131] : memref<180xf32, #tpu.memory_space<smem>>
    %c92 = arith.constant 92 : index
    %21 = memref.load %arg2[%c92] : memref<180xf32, #tpu.memory_space<smem>>
    %c93 = arith.constant 93 : index
    %22 = memref.load %arg2[%c93] : memref<180xf32, #tpu.memory_space<smem>>
    %c0_i32 = arith.constant 0 : i32
    %c1_i32 = arith.constant 1 : i32
    %23 = arith.muli %c0_i32, %c1_i32 : i32
    %c0_i32_0 = arith.constant 0 : i32
    %24 = arith.addi %c0_i32_0, %23 : i32
    %c0_1 = arith.constant 0 : index
    %25 = arith.index_cast %24 : i32 to index
    %c0_2 = arith.constant 0 : index
    %c0_3 = arith.constant 0 : index
    %26 = vector.load %arg3[%c0_1, %25, %c0_2, %c0_3] : memref<2x1x8x128xf32, #tpu.memory_space<vmem>>, vector<1x1x8x128xf32>
    %27 = vector.shape_cast %26 : vector<1x1x8x128xf32> to vector<8x128xf32>
    %c1_4 = arith.constant 1 : index
    %28 = arith.index_cast %24 : i32 to index
    %c0_5 = arith.constant 0 : index
    %c0_6 = arith.constant 0 : index
    %29 = vector.load %arg3[%c1_4, %28, %c0_5, %c0_6] : memref<2x1x8x128xf32, #tpu.memory_space<vmem>>, vector<1x1x8x128xf32>
    %30 = vector.shape_cast %29 : vector<1x1x8x128xf32> to vector<8x128xf32>
    %cst = arith.constant 0.000000e+00 : f32
    %31 = vector.broadcast %cst : f32 to vector<8x128xf32>
    %32 = arith.cmpf ogt, %27, %31 : vector<8x128xf32>
    %33 = arith.extui %32 : vector<8x128xi1> to vector<8x128xi32>
    %cst_7 = arith.constant 0.000000e+00 : f32
    %34 = vector.broadcast %cst_7 : f32 to vector<8x128xf32>
    %35 = arith.cmpf ogt, %30, %34 : vector<8x128xf32>
    %36 = arith.extui %35 : vector<8x128xi1> to vector<8x128xi32>
    %37 = arith.subi %11, %10 : i32
    %38 = vector.broadcast %37 : i32 to vector<8x128xi32>
    %39 = arith.muli %38, %33 : vector<8x128xi32>
    %40 = vector.broadcast %10 : i32 to vector<8x128xi32>
    %41 = arith.addi %40, %39 : vector<8x128xi32>
    %c512_i32 = arith.constant 512 : i32
    %42 = vector.broadcast %c512_i32 : i32 to vector<8x128xi32>
    %43 = arith.muli %41, %42 : vector<8x128xi32>
    %c384_i32 = arith.constant 384 : i32
    %44 = arith.muli %12, %c384_i32 : i32
    %45 = vector.broadcast %44 : i32 to vector<8x128xi32>
    %46 = arith.ori %43, %45 : vector<8x128xi32>
    %c12288_i32 = arith.constant 12288 : i32
    %47 = vector.broadcast %c12288_i32 : i32 to vector<8x128xi32>
    %48 = arith.muli %36, %47 : vector<8x128xi32>
    %c2048_i32 = arith.constant 2048 : i32
    %49 = vector.broadcast %c2048_i32 : i32 to vector<8x128xi32>
    %50 = arith.muli %41, %49 : vector<8x128xi32>
    %51 = arith.ori %48, %50 : vector<8x128xi32>
    %c12288_i32_8 = arith.constant 12288 : i32
    %52 = vector.broadcast %c12288_i32_8 : i32 to vector<8x128xi32>
    %53 = arith.muli %36, %52 : vector<8x128xi32>
    %c0_i32_9 = arith.constant 0 : i32
    %54 = vector.broadcast %c0_i32_9 : i32 to vector<8x128xi32>
    %55 = arith.andi %7, %54 : vector<8x128xi32>
    %56 = arith.xori %4, %55 : vector<8x128xi32>
    %c0_i32_10 = arith.constant 0 : i32
    %57 = vector.broadcast %c0_i32_10 : i32 to vector<8x128xi32>
    %58 = arith.andi %9, %57 : vector<8x128xi32>
    %59 = arith.xori %5, %58 : vector<8x128xi32>
    %60 = arith.xori %56, %59 : vector<8x128xi32>
    %61 = arith.andi %60, %53 : vector<8x128xi32>
    %62 = arith.xori %56, %61 : vector<8x128xi32>
    %c0_i32_11 = arith.constant 0 : i32
    %c67108864_i32 = arith.constant 67108864 : i32
    %63 = vector.broadcast %c67108864_i32 : i32 to vector<8x128xi32>
    %64 = arith.andi %62, %63 : vector<8x128xi32>
    %c26_i32 = arith.constant 26 : i32
    %65 = vector.broadcast %c26_i32 : i32 to vector<8x128xi32>
    %66 = arith.shrsi %64, %65 : vector<8x128xi32>
    %c1_i32_12 = arith.constant 1 : i32
    %67 = vector.broadcast %c1_i32_12 : i32 to vector<8x128xi32>
    %68 = arith.andi %66, %67 : vector<8x128xi32>
    %c1073741824_i32 = arith.constant 1073741824 : i32
    %69 = vector.broadcast %c1073741824_i32 : i32 to vector<8x128xi32>
    %70 = arith.andi %62, %69 : vector<8x128xi32>
    %c13_i32 = arith.constant 13 : i32
    %71 = vector.broadcast %c13_i32 : i32 to vector<8x128xi32>
    %72 = arith.shrsi %70, %71 : vector<8x128xi32>
    %c131072_i32 = arith.constant 131072 : i32
    %73 = vector.broadcast %c131072_i32 : i32 to vector<8x128xi32>
    %74 = arith.andi %72, %73 : vector<8x128xi32>
    %75 = arith.ori %68, %74 : vector<8x128xi32>
    %c128_i32 = arith.constant 128 : i32
    %76 = vector.broadcast %c128_i32 : i32 to vector<8x128xi32>
    %77 = arith.andi %62, %76 : vector<8x128xi32>
    %c4_i32 = arith.constant 4 : i32
    %78 = vector.broadcast %c4_i32 : i32 to vector<8x128xi32>
    %79 = arith.shrsi %77, %78 : vector<8x128xi32>
    %c8_i32 = arith.constant 8 : i32
    %80 = vector.broadcast %c8_i32 : i32 to vector<8x128xi32>
    %81 = arith.andi %79, %80 : vector<8x128xi32>
    %82 = arith.ori %75, %81 : vector<8x128xi32>
    %c32768_i32 = arith.constant 32768 : i32
    %83 = vector.broadcast %c32768_i32 : i32 to vector<8x128xi32>
    %84 = arith.andi %62, %83 : vector<8x128xi32>
    %c3_i32 = arith.constant 3 : i32
    %85 = vector.broadcast %c3_i32 : i32 to vector<8x128xi32>
    %86 = arith.shrsi %84, %85 : vector<8x128xi32>
    %c4096_i32 = arith.constant 4096 : i32
    %87 = vector.broadcast %c4096_i32 : i32 to vector<8x128xi32>
    %88 = arith.andi %86, %87 : vector<8x128xi32>
    %89 = arith.ori %82, %88 : vector<8x128xi32>
    %c268570632_i32 = arith.constant 268570632 : i32
    %90 = vector.broadcast %c268570632_i32 : i32 to vector<8x128xi32>
    %91 = arith.andi %62, %90 : vector<8x128xi32>
    %c2_i32 = arith.constant 2 : i32
    %92 = vector.broadcast %c2_i32 : i32 to vector<8x128xi32>
    %93 = arith.shrsi %91, %92 : vector<8x128xi32>
    %c67142658_i32 = arith.constant 67142658 : i32
    %94 = vector.broadcast %c67142658_i32 : i32 to vector<8x128xi32>
    %95 = arith.andi %93, %94 : vector<8x128xi32>
    %96 = arith.ori %89, %95 : vector<8x128xi32>
    %c276959240_i32 = arith.constant 276959240 : i32
    %97 = vector.broadcast %c276959240_i32 : i32 to vector<8x128xi32>
    %98 = arith.andi %62, %97 : vector<8x128xi32>
    %c1_i32_13 = arith.constant 1 : i32
    %99 = vector.broadcast %c1_i32_13 : i32 to vector<8x128xi32>
    %100 = arith.shrsi %98, %99 : vector<8x128xi32>
    %c138479620_i32 = arith.constant 138479620 : i32
    %101 = vector.broadcast %c138479620_i32 : i32 to vector<8x128xi32>
    %102 = arith.andi %100, %101 : vector<8x128xi32>
    %103 = arith.ori %96, %102 : vector<8x128xi32>
    %c8192_i32 = arith.constant 8192 : i32
    %104 = vector.broadcast %c8192_i32 : i32 to vector<8x128xi32>
    %105 = arith.andi %62, %104 : vector<8x128xi32>
    %c1_i32_14 = arith.constant 1 : i32
    %106 = vector.broadcast %c1_i32_14 : i32 to vector<8x128xi32>
    %107 = arith.shli %105, %106 : vector<8x128xi32>
    %108 = arith.ori %103, %107 : vector<8x128xi32>
    %c524304_i32 = arith.constant 524304 : i32
    %109 = vector.broadcast %c524304_i32 : i32 to vector<8x128xi32>
    %110 = arith.andi %62, %109 : vector<8x128xi32>
    %c2_i32_15 = arith.constant 2 : i32
    %111 = vector.broadcast %c2_i32_15 : i32 to vector<8x128xi32>
    %112 = arith.shli %110, %111 : vector<8x128xi32>
    %113 = arith.ori %108, %112 : vector<8x128xi32>
    %c2097152_i32 = arith.constant 2097152 : i32
    %114 = vector.broadcast %c2097152_i32 : i32 to vector<8x128xi32>
    %115 = arith.andi %62, %114 : vector<8x128xi32>
    %c3_i32_16 = arith.constant 3 : i32
    %116 = vector.broadcast %c3_i32_16 : i32 to vector<8x128xi32>
    %117 = arith.shli %115, %116 : vector<8x128xi32>
    %118 = arith.ori %113, %117 : vector<8x128xi32>
    %c33571329_i32 = arith.constant 33571329 : i32
    %119 = vector.broadcast %c33571329_i32 : i32 to vector<8x128xi32>
    %120 = arith.andi %62, %119 : vector<8x128xi32>
    %c4_i32_17 = arith.constant 4 : i32
    %121 = vector.broadcast %c4_i32_17 : i32 to vector<8x128xi32>
    %122 = arith.shli %120, %121 : vector<8x128xi32>
    %123 = arith.ori %118, %122 : vector<8x128xi32>
    %c1_i32_18 = arith.constant 1 : i32
    %124 = vector.broadcast %c1_i32_18 : i32 to vector<8x128xi32>
    %125 = arith.andi %62, %124 : vector<8x128xi32>
    %c5_i32 = arith.constant 5 : i32
    %126 = vector.broadcast %c5_i32 : i32 to vector<8x128xi32>
    %127 = arith.shli %125, %126 : vector<8x128xi32>
    %128 = arith.ori %123, %127 : vector<8x128xi32>
    %c2_i32_19 = arith.constant 2 : i32
    %129 = vector.broadcast %c2_i32_19 : i32 to vector<8x128xi32>
    %130 = arith.andi %62, %129 : vector<8x128xi32>
    %c24_i32 = arith.constant 24 : i32
    %131 = vector.broadcast %c24_i32 : i32 to vector<8x128xi32>
    %132 = arith.shli %130, %131 : vector<8x128xi32>
    %133 = arith.ori %128, %132 : vector<8x128xi32>
    %134 = arith.ori %46, %133 : vector<8x128xi32>
    %c67108864_i32_20 = arith.constant 67108864 : i32
    %135 = vector.broadcast %c67108864_i32_20 : i32 to vector<8x128xi32>
    %136 = arith.andi %62, %135 : vector<8x128xi32>
    %c24_i32_21 = arith.constant 24 : i32
    %137 = vector.broadcast %c24_i32_21 : i32 to vector<8x128xi32>
    %138 = arith.shrsi %136, %137 : vector<8x128xi32>
    %c4_i32_22 = arith.constant 4 : i32
    %139 = vector.broadcast %c4_i32_22 : i32 to vector<8x128xi32>
    %140 = arith.andi %138, %139 : vector<8x128xi32>
    %c1048576_i32 = arith.constant 1048576 : i32
    %141 = vector.broadcast %c1048576_i32 : i32 to vector<8x128xi32>
    %142 = arith.andi %62, %141 : vector<8x128xi32>
    %c17_i32 = arith.constant 17 : i32
    %143 = vector.broadcast %c17_i32 : i32 to vector<8x128xi32>
    %144 = arith.shrsi %142, %143 : vector<8x128xi32>
    %c8_i32_23 = arith.constant 8 : i32
    %145 = vector.broadcast %c8_i32_23 : i32 to vector<8x128xi32>
    %146 = arith.andi %144, %145 : vector<8x128xi32>
    %147 = arith.ori %140, %146 : vector<8x128xi32>
    %c1114112_i32 = arith.constant 1114112 : i32
    %148 = vector.broadcast %c1114112_i32 : i32 to vector<8x128xi32>
    %149 = arith.andi %62, %148 : vector<8x128xi32>
    %c16_i32 = arith.constant 16 : i32
    %150 = vector.broadcast %c16_i32 : i32 to vector<8x128xi32>
    %151 = arith.shrsi %149, %150 : vector<8x128xi32>
    %c17_i32_24 = arith.constant 17 : i32
    %152 = vector.broadcast %c17_i32_24 : i32 to vector<8x128xi32>
    %153 = arith.andi %151, %152 : vector<8x128xi32>
    %154 = arith.ori %147, %153 : vector<8x128xi32>
    %c65536_i32 = arith.constant 65536 : i32
    %155 = vector.broadcast %c65536_i32 : i32 to vector<8x128xi32>
    %156 = arith.andi %62, %155 : vector<8x128xi32>
    %c15_i32 = arith.constant 15 : i32
    %157 = vector.broadcast %c15_i32 : i32 to vector<8x128xi32>
    %158 = arith.shrsi %156, %157 : vector<8x128xi32>
    %c2_i32_25 = arith.constant 2 : i32
    %159 = vector.broadcast %c2_i32_25 : i32 to vector<8x128xi32>
    %160 = arith.andi %158, %159 : vector<8x128xi32>
    %161 = arith.ori %154, %160 : vector<8x128xi32>
    %c2048_i32_26 = arith.constant 2048 : i32
    %162 = vector.broadcast %c2048_i32_26 : i32 to vector<8x128xi32>
    %163 = arith.andi %62, %162 : vector<8x128xi32>
    %c5_i32_27 = arith.constant 5 : i32
    %164 = vector.broadcast %c5_i32_27 : i32 to vector<8x128xi32>
    %165 = arith.shrsi %163, %164 : vector<8x128xi32>
    %c64_i32 = arith.constant 64 : i32
    %166 = vector.broadcast %c64_i32 : i32 to vector<8x128xi32>
    %167 = arith.andi %165, %166 : vector<8x128xi32>
    %168 = arith.ori %161, %167 : vector<8x128xi32>
    %c134219776_i32 = arith.constant 134219776 : i32
    %169 = vector.broadcast %c134219776_i32 : i32 to vector<8x128xi32>
    %170 = arith.andi %62, %169 : vector<8x128xi32>
    %c4_i32_28 = arith.constant 4 : i32
    %171 = vector.broadcast %c4_i32_28 : i32 to vector<8x128xi32>
    %172 = arith.shrsi %170, %171 : vector<8x128xi32>
    %c8388736_i32 = arith.constant 8388736 : i32
    %173 = vector.broadcast %c8388736_i32 : i32 to vector<8x128xi32>
    %174 = arith.andi %172, %173 : vector<8x128xi32>
    %175 = arith.ori %168, %174 : vector<8x128xi32>
    %c-2147483648_i32 = arith.constant -2147483648 : i32
    %176 = vector.broadcast %c-2147483648_i32 : i32 to vector<8x128xi32>
    %177 = arith.andi %62, %176 : vector<8x128xi32>
    %c3_i32_29 = arith.constant 3 : i32
    %178 = vector.broadcast %c3_i32_29 : i32 to vector<8x128xi32>
    %179 = arith.shrsi %177, %178 : vector<8x128xi32>
    %c268435456_i32 = arith.constant 268435456 : i32
    %180 = vector.broadcast %c268435456_i32 : i32 to vector<8x128xi32>
    %181 = arith.andi %179, %180 : vector<8x128xi32>
    %182 = arith.ori %175, %181 : vector<8x128xi32>
    %c4194432_i32 = arith.constant 4194432 : i32
    %183 = vector.broadcast %c4194432_i32 : i32 to vector<8x128xi32>
    %184 = arith.andi %62, %183 : vector<8x128xi32>
    %c2_i32_30 = arith.constant 2 : i32
    %185 = vector.broadcast %c2_i32_30 : i32 to vector<8x128xi32>
    %186 = arith.shrsi %184, %185 : vector<8x128xi32>
    %c1048608_i32 = arith.constant 1048608 : i32
    %187 = vector.broadcast %c1048608_i32 : i32 to vector<8x128xi32>
    %188 = arith.andi %186, %187 : vector<8x128xi32>
    %189 = arith.ori %182, %188 : vector<8x128xi32>
    %c553648384_i32 = arith.constant 553648384 : i32
    %190 = vector.broadcast %c553648384_i32 : i32 to vector<8x128xi32>
    %191 = arith.andi %62, %190 : vector<8x128xi32>
    %c1_i32_31 = arith.constant 1 : i32
    %192 = vector.broadcast %c1_i32_31 : i32 to vector<8x128xi32>
    %193 = arith.shli %191, %192 : vector<8x128xi32>
    %194 = arith.ori %189, %193 : vector<8x128xi32>
    %c16777472_i32 = arith.constant 16777472 : i32
    %195 = vector.broadcast %c16777472_i32 : i32 to vector<8x128xi32>
    %196 = arith.andi %62, %195 : vector<8x128xi32>
    %c2_i32_32 = arith.constant 2 : i32
    %197 = vector.broadcast %c2_i32_32 : i32 to vector<8x128xi32>
    %198 = arith.shli %196, %197 : vector<8x128xi32>
    %199 = arith.ori %194, %198 : vector<8x128xi32>
    %c8192_i32_33 = arith.constant 8192 : i32
    %200 = vector.broadcast %c8192_i32_33 : i32 to vector<8x128xi32>
    %201 = arith.andi %62, %200 : vector<8x128xi32>
    %c3_i32_34 = arith.constant 3 : i32
    %202 = vector.broadcast %c3_i32_34 : i32 to vector<8x128xi32>
    %203 = arith.shli %201, %202 : vector<8x128xi32>
    %204 = arith.ori %199, %203 : vector<8x128xi32>
    %c16_i32_35 = arith.constant 16 : i32
    %205 = vector.broadcast %c16_i32_35 : i32 to vector<8x128xi32>
    %206 = arith.andi %62, %205 : vector<8x128xi32>
    %c4_i32_36 = arith.constant 4 : i32
    %207 = vector.broadcast %c4_i32_36 : i32 to vector<8x128xi32>
    %208 = arith.shli %206, %207 : vector<8x128xi32>
    %209 = arith.ori %204, %208 : vector<8x128xi32>
    %c4_i32_37 = arith.constant 4 : i32
    %210 = vector.broadcast %c4_i32_37 : i32 to vector<8x128xi32>
    %211 = arith.andi %62, %210 : vector<8x128xi32>
    %c12_i32 = arith.constant 12 : i32
    %212 = vector.broadcast %c12_i32 : i32 to vector<8x128xi32>
    %213 = arith.shli %211, %212 : vector<8x128xi32>
    %214 = arith.ori %209, %213 : vector<8x128xi32>
    %c262148_i32 = arith.constant 262148 : i32
    %215 = vector.broadcast %c262148_i32 : i32 to vector<8x128xi32>
    %216 = arith.andi %62, %215 : vector<8x128xi32>
    %c13_i32_38 = arith.constant 13 : i32
    %217 = vector.broadcast %c13_i32_38 : i32 to vector<8x128xi32>
    %218 = arith.shli %216, %217 : vector<8x128xi32>
    %219 = arith.ori %214, %218 : vector<8x128xi32>
    %c32_i32 = arith.constant 32 : i32
    %220 = vector.broadcast %c32_i32 : i32 to vector<8x128xi32>
    %221 = arith.andi %62, %220 : vector<8x128xi32>
    %c14_i32 = arith.constant 14 : i32
    %222 = vector.broadcast %c14_i32 : i32 to vector<8x128xi32>
    %223 = arith.shli %221, %222 : vector<8x128xi32>
    %224 = arith.ori %219, %223 : vector<8x128xi32>
    %c2_i32_39 = arith.constant 2 : i32
    %225 = vector.broadcast %c2_i32_39 : i32 to vector<8x128xi32>
    %226 = arith.andi %62, %225 : vector<8x128xi32>
    %c26_i32_40 = arith.constant 26 : i32
    %227 = vector.broadcast %c26_i32_40 : i32 to vector<8x128xi32>
    %228 = arith.shli %226, %227 : vector<8x128xi32>
    %229 = arith.ori %224, %228 : vector<8x128xi32>
    %230 = arith.ori %51, %229 : vector<8x128xi32>
    %231 = arith.andi %7, %134 : vector<8x128xi32>
    %232 = arith.xori %4, %231 : vector<8x128xi32>
    %233 = arith.andi %9, %134 : vector<8x128xi32>
    %234 = arith.xori %5, %233 : vector<8x128xi32>
    %235 = arith.xori %232, %234 : vector<8x128xi32>
    %236 = arith.andi %235, %230 : vector<8x128xi32>
    %237 = arith.xori %232, %236 : vector<8x128xi32>
    %c1_i32_41 = arith.constant 1 : i32
    %c67108864_i32_42 = arith.constant 67108864 : i32
    %238 = vector.broadcast %c67108864_i32_42 : i32 to vector<8x128xi32>
    %239 = arith.andi %237, %238 : vector<8x128xi32>
    %c26_i32_43 = arith.constant 26 : i32
    %240 = vector.broadcast %c26_i32_43 : i32 to vector<8x128xi32>
    %241 = arith.shrsi %239, %240 : vector<8x128xi32>
    %c1_i32_44 = arith.constant 1 : i32
    %242 = vector.broadcast %c1_i32_44 : i32 to vector<8x128xi32>
    %243 = arith.andi %241, %242 : vector<8x128xi32>
    %c1073741824_i32_45 = arith.constant 1073741824 : i32
    %244 = vector.broadcast %c1073741824_i32_45 : i32 to vector<8x128xi32>
    %245 = arith.andi %237, %244 : vector<8x128xi32>
    %c13_i32_46 = arith.constant 13 : i32
    %246 = vector.broadcast %c13_i32_46 : i32 to vector<8x128xi32>
    %247 = arith.shrsi %245, %246 : vector<8x128xi32>
    %c131072_i32_47 = arith.constant 131072 : i32
    %248 = vector.broadcast %c131072_i32_47 : i32 to vector<8x128xi32>
    %249 = arith.andi %247, %248 : vector<8x128xi32>
    %250 = arith.ori %243, %249 : vector<8x128xi32>
    %c128_i32_48 = arith.constant 128 : i32
    %251 = vector.broadcast %c128_i32_48 : i32 to vector<8x128xi32>
    %252 = arith.andi %237, %251 : vector<8x128xi32>
    %c4_i32_49 = arith.constant 4 : i32
    %253 = vector.broadcast %c4_i32_49 : i32 to vector<8x128xi32>
    %254 = arith.shrsi %252, %253 : vector<8x128xi32>
    %c8_i32_50 = arith.constant 8 : i32
    %255 = vector.broadcast %c8_i32_50 : i32 to vector<8x128xi32>
    %256 = arith.andi %254, %255 : vector<8x128xi32>
    %257 = arith.ori %250, %256 : vector<8x128xi32>
    %c32768_i32_51 = arith.constant 32768 : i32
    %258 = vector.broadcast %c32768_i32_51 : i32 to vector<8x128xi32>
    %259 = arith.andi %237, %258 : vector<8x128xi32>
    %c3_i32_52 = arith.constant 3 : i32
    %260 = vector.broadcast %c3_i32_52 : i32 to vector<8x128xi32>
    %261 = arith.shrsi %259, %260 : vector<8x128xi32>
    %c4096_i32_53 = arith.constant 4096 : i32
    %262 = vector.broadcast %c4096_i32_53 : i32 to vector<8x128xi32>
    %263 = arith.andi %261, %262 : vector<8x128xi32>
    %264 = arith.ori %257, %263 : vector<8x128xi32>
    %c268570632_i32_54 = arith.constant 268570632 : i32
    %265 = vector.broadcast %c268570632_i32_54 : i32 to vector<8x128xi32>
    %266 = arith.andi %237, %265 : vector<8x128xi32>
    %c2_i32_55 = arith.constant 2 : i32
    %267 = vector.broadcast %c2_i32_55 : i32 to vector<8x128xi32>
    %268 = arith.shrsi %266, %267 : vector<8x128xi32>
    %c67142658_i32_56 = arith.constant 67142658 : i32
    %269 = vector.broadcast %c67142658_i32_56 : i32 to vector<8x128xi32>
    %270 = arith.andi %268, %269 : vector<8x128xi32>
    %271 = arith.ori %264, %270 : vector<8x128xi32>
    %c276959240_i32_57 = arith.constant 276959240 : i32
    %272 = vector.broadcast %c276959240_i32_57 : i32 to vector<8x128xi32>
    %273 = arith.andi %237, %272 : vector<8x128xi32>
    %c1_i32_58 = arith.constant 1 : i32
    %274 = vector.broadcast %c1_i32_58 : i32 to vector<8x128xi32>
    %275 = arith.shrsi %273, %274 : vector<8x128xi32>
    %c138479620_i32_59 = arith.constant 138479620 : i32
    %276 = vector.broadcast %c138479620_i32_59 : i32 to vector<8x128xi32>
    %277 = arith.andi %275, %276 : vector<8x128xi32>
    %278 = arith.ori %271, %277 : vector<8x128xi32>
    %c8192_i32_60 = arith.constant 8192 : i32
    %279 = vector.broadcast %c8192_i32_60 : i32 to vector<8x128xi32>
    %280 = arith.andi %237, %279 : vector<8x128xi32>
    %c1_i32_61 = arith.constant 1 : i32
    %281 = vector.broadcast %c1_i32_61 : i32 to vector<8x128xi32>
    %282 = arith.shli %280, %281 : vector<8x128xi32>
    %283 = arith.ori %278, %282 : vector<8x128xi32>
    %c524304_i32_62 = arith.constant 524304 : i32
    %284 = vector.broadcast %c524304_i32_62 : i32 to vector<8x128xi32>
    %285 = arith.andi %237, %284 : vector<8x128xi32>
    %c2_i32_63 = arith.constant 2 : i32
    %286 = vector.broadcast %c2_i32_63 : i32 to vector<8x128xi32>
    %287 = arith.shli %285, %286 : vector<8x128xi32>
    %288 = arith.ori %283, %287 : vector<8x128xi32>
    %c2097152_i32_64 = arith.constant 2097152 : i32
    %289 = vector.broadcast %c2097152_i32_64 : i32 to vector<8x128xi32>
    %290 = arith.andi %237, %289 : vector<8x128xi32>
    %c3_i32_65 = arith.constant 3 : i32
    %291 = vector.broadcast %c3_i32_65 : i32 to vector<8x128xi32>
    %292 = arith.shli %290, %291 : vector<8x128xi32>
    %293 = arith.ori %288, %292 : vector<8x128xi32>
    %c33571329_i32_66 = arith.constant 33571329 : i32
    %294 = vector.broadcast %c33571329_i32_66 : i32 to vector<8x128xi32>
    %295 = arith.andi %237, %294 : vector<8x128xi32>
    %c4_i32_67 = arith.constant 4 : i32
    %296 = vector.broadcast %c4_i32_67 : i32 to vector<8x128xi32>
    %297 = arith.shli %295, %296 : vector<8x128xi32>
    %298 = arith.ori %293, %297 : vector<8x128xi32>
    %c1_i32_68 = arith.constant 1 : i32
    %299 = vector.broadcast %c1_i32_68 : i32 to vector<8x128xi32>
    %300 = arith.andi %237, %299 : vector<8x128xi32>
    %c5_i32_69 = arith.constant 5 : i32
    %301 = vector.broadcast %c5_i32_69 : i32 to vector<8x128xi32>
    %302 = arith.shli %300, %301 : vector<8x128xi32>
    %303 = arith.ori %298, %302 : vector<8x128xi32>
    %c2_i32_70 = arith.constant 2 : i32
    %304 = vector.broadcast %c2_i32_70 : i32 to vector<8x128xi32>
    %305 = arith.andi %237, %304 : vector<8x128xi32>
    %c24_i32_71 = arith.constant 24 : i32
    %306 = vector.broadcast %c24_i32_71 : i32 to vector<8x128xi32>
    %307 = arith.shli %305, %306 : vector<8x128xi32>
    %308 = arith.ori %303, %307 : vector<8x128xi32>
    %309 = arith.ori %46, %308 : vector<8x128xi32>
    %c67108864_i32_72 = arith.constant 67108864 : i32
    %310 = vector.broadcast %c67108864_i32_72 : i32 to vector<8x128xi32>
    %311 = arith.andi %237, %310 : vector<8x128xi32>
    %c24_i32_73 = arith.constant 24 : i32
    %312 = vector.broadcast %c24_i32_73 : i32 to vector<8x128xi32>
    %313 = arith.shrsi %311, %312 : vector<8x128xi32>
    %c4_i32_74 = arith.constant 4 : i32
    %314 = vector.broadcast %c4_i32_74 : i32 to vector<8x128xi32>
    %315 = arith.andi %313, %314 : vector<8x128xi32>
    %c1048576_i32_75 = arith.constant 1048576 : i32
    %316 = vector.broadcast %c1048576_i32_75 : i32 to vector<8x128xi32>
    %317 = arith.andi %237, %316 : vector<8x128xi32>
    %c17_i32_76 = arith.constant 17 : i32
    %318 = vector.broadcast %c17_i32_76 : i32 to vector<8x128xi32>
    %319 = arith.shrsi %317, %318 : vector<8x128xi32>
    %c8_i32_77 = arith.constant 8 : i32
    %320 = vector.broadcast %c8_i32_77 : i32 to vector<8x128xi32>
    %321 = arith.andi %319, %320 : vector<8x128xi32>
    %322 = arith.ori %315, %321 : vector<8x128xi32>
    %c1114112_i32_78 = arith.constant 1114112 : i32
    %323 = vector.broadcast %c1114112_i32_78 : i32 to vector<8x128xi32>
    %324 = arith.andi %237, %323 : vector<8x128xi32>
    %c16_i32_79 = arith.constant 16 : i32
    %325 = vector.broadcast %c16_i32_79 : i32 to vector<8x128xi32>
    %326 = arith.shrsi %324, %325 : vector<8x128xi32>
    %c17_i32_80 = arith.constant 17 : i32
    %327 = vector.broadcast %c17_i32_80 : i32 to vector<8x128xi32>
    %328 = arith.andi %326, %327 : vector<8x128xi32>
    %329 = arith.ori %322, %328 : vector<8x128xi32>
    %c65536_i32_81 = arith.constant 65536 : i32
    %330 = vector.broadcast %c65536_i32_81 : i32 to vector<8x128xi32>
    %331 = arith.andi %237, %330 : vector<8x128xi32>
    %c15_i32_82 = arith.constant 15 : i32
    %332 = vector.broadcast %c15_i32_82 : i32 to vector<8x128xi32>
    %333 = arith.shrsi %331, %332 : vector<8x128xi32>
    %c2_i32_83 = arith.constant 2 : i32
    %334 = vector.broadcast %c2_i32_83 : i32 to vector<8x128xi32>
    %335 = arith.andi %333, %334 : vector<8x128xi32>
    %336 = arith.ori %329, %335 : vector<8x128xi32>
    %c2048_i32_84 = arith.constant 2048 : i32
    %337 = vector.broadcast %c2048_i32_84 : i32 to vector<8x128xi32>
    %338 = arith.andi %237, %337 : vector<8x128xi32>
    %c5_i32_85 = arith.constant 5 : i32
    %339 = vector.broadcast %c5_i32_85 : i32 to vector<8x128xi32>
    %340 = arith.shrsi %338, %339 : vector<8x128xi32>
    %c64_i32_86 = arith.constant 64 : i32
    %341 = vector.broadcast %c64_i32_86 : i32 to vector<8x128xi32>
    %342 = arith.andi %340, %341 : vector<8x128xi32>
    %343 = arith.ori %336, %342 : vector<8x128xi32>
    %c134219776_i32_87 = arith.constant 134219776 : i32
    %344 = vector.broadcast %c134219776_i32_87 : i32 to vector<8x128xi32>
    %345 = arith.andi %237, %344 : vector<8x128xi32>
    %c4_i32_88 = arith.constant 4 : i32
    %346 = vector.broadcast %c4_i32_88 : i32 to vector<8x128xi32>
    %347 = arith.shrsi %345, %346 : vector<8x128xi32>
    %c8388736_i32_89 = arith.constant 8388736 : i32
    %348 = vector.broadcast %c8388736_i32_89 : i32 to vector<8x128xi32>
    %349 = arith.andi %347, %348 : vector<8x128xi32>
    %350 = arith.ori %343, %349 : vector<8x128xi32>
    %c-2147483648_i32_90 = arith.constant -2147483648 : i32
    %351 = vector.broadcast %c-2147483648_i32_90 : i32 to vector<8x128xi32>
    %352 = arith.andi %237, %351 : vector<8x128xi32>
    %c3_i32_91 = arith.constant 3 : i32
    %353 = vector.broadcast %c3_i32_91 : i32 to vector<8x128xi32>
    %354 = arith.shrsi %352, %353 : vector<8x128xi32>
    %c268435456_i32_92 = arith.constant 268435456 : i32
    %355 = vector.broadcast %c268435456_i32_92 : i32 to vector<8x128xi32>
    %356 = arith.andi %354, %355 : vector<8x128xi32>
    %357 = arith.ori %350, %356 : vector<8x128xi32>
    %c4194432_i32_93 = arith.constant 4194432 : i32
    %358 = vector.broadcast %c4194432_i32_93 : i32 to vector<8x128xi32>
    %359 = arith.andi %237, %358 : vector<8x128xi32>
    %c2_i32_94 = arith.constant 2 : i32
    %360 = vector.broadcast %c2_i32_94 : i32 to vector<8x128xi32>
    %361 = arith.shrsi %359, %360 : vector<8x128xi32>
    %c1048608_i32_95 = arith.constant 1048608 : i32
    %362 = vector.broadcast %c1048608_i32_95 : i32 to vector<8x128xi32>
    %363 = arith.andi %361, %362 : vector<8x128xi32>
    %364 = arith.ori %357, %363 : vector<8x128xi32>
    %c553648384_i32_96 = arith.constant 553648384 : i32
    %365 = vector.broadcast %c553648384_i32_96 : i32 to vector<8x128xi32>
    %366 = arith.andi %237, %365 : vector<8x128xi32>
    %c1_i32_97 = arith.constant 1 : i32
    %367 = vector.broadcast %c1_i32_97 : i32 to vector<8x128xi32>
    %368 = arith.shli %366, %367 : vector<8x128xi32>
    %369 = arith.ori %364, %368 : vector<8x128xi32>
    %c16777472_i32_98 = arith.constant 16777472 : i32
    %370 = vector.broadcast %c16777472_i32_98 : i32 to vector<8x128xi32>
    %371 = arith.andi %237, %370 : vector<8x128xi32>
    %c2_i32_99 = arith.constant 2 : i32
    %372 = vector.broadcast %c2_i32_99 : i32 to vector<8x128xi32>
    %373 = arith.shli %371, %372 : vector<8x128xi32>
    %374 = arith.ori %369, %373 : vector<8x128xi32>
    %c8192_i32_100 = arith.constant 8192 : i32
    %375 = vector.broadcast %c8192_i32_100 : i32 to vector<8x128xi32>
    %376 = arith.andi %237, %375 : vector<8x128xi32>
    %c3_i32_101 = arith.constant 3 : i32
    %377 = vector.broadcast %c3_i32_101 : i32 to vector<8x128xi32>
    %378 = arith.shli %376, %377 : vector<8x128xi32>
    %379 = arith.ori %374, %378 : vector<8x128xi32>
    %c16_i32_102 = arith.constant 16 : i32
    %380 = vector.broadcast %c16_i32_102 : i32 to vector<8x128xi32>
    %381 = arith.andi %237, %380 : vector<8x128xi32>
    %c4_i32_103 = arith.constant 4 : i32
    %382 = vector.broadcast %c4_i32_103 : i32 to vector<8x128xi32>
    %383 = arith.shli %381, %382 : vector<8x128xi32>
    %384 = arith.ori %379, %383 : vector<8x128xi32>
    %c4_i32_104 = arith.constant 4 : i32
    %385 = vector.broadcast %c4_i32_104 : i32 to vector<8x128xi32>
    %386 = arith.andi %237, %385 : vector<8x128xi32>
    %c12_i32_105 = arith.constant 12 : i32
    %387 = vector.broadcast %c12_i32_105 : i32 to vector<8x128xi32>
    %388 = arith.shli %386, %387 : vector<8x128xi32>
    %389 = arith.ori %384, %388 : vector<8x128xi32>
    %c262148_i32_106 = arith.constant 262148 : i32
    %390 = vector.broadcast %c262148_i32_106 : i32 to vector<8x128xi32>
    %391 = arith.andi %237, %390 : vector<8x128xi32>
    %c13_i32_107 = arith.constant 13 : i32
    %392 = vector.broadcast %c13_i32_107 : i32 to vector<8x128xi32>
    %393 = arith.shli %391, %392 : vector<8x128xi32>
    %394 = arith.ori %389, %393 : vector<8x128xi32>
    %c32_i32_108 = arith.constant 32 : i32
    %395 = vector.broadcast %c32_i32_108 : i32 to vector<8x128xi32>
    %396 = arith.andi %237, %395 : vector<8x128xi32>
    %c14_i32_109 = arith.constant 14 : i32
    %397 = vector.broadcast %c14_i32_109 : i32 to vector<8x128xi32>
    %398 = arith.shli %396, %397 : vector<8x128xi32>
    %399 = arith.ori %394, %398 : vector<8x128xi32>
    %c2_i32_110 = arith.constant 2 : i32
    %400 = vector.broadcast %c2_i32_110 : i32 to vector<8x128xi32>
    %401 = arith.andi %237, %400 : vector<8x128xi32>
    %c26_i32_111 = arith.constant 26 : i32
    %402 = vector.broadcast %c26_i32_111 : i32 to vector<8x128xi32>
    %403 = arith.shli %401, %402 : vector<8x128xi32>
    %404 = arith.ori %399, %403 : vector<8x128xi32>
    %405 = arith.ori %51, %404 : vector<8x128xi32>
    %406 = arith.andi %7, %309 : vector<8x128xi32>
    %407 = arith.xori %4, %406 : vector<8x128xi32>
    %408 = arith.andi %9, %309 : vector<8x128xi32>
    %409 = arith.xori %5, %408 : vector<8x128xi32>
    %410 = arith.xori %407, %409 : vector<8x128xi32>
    %411 = arith.andi %410, %405 : vector<8x128xi32>
    %412 = arith.xori %407, %411 : vector<8x128xi32>
    %c2_i32_112 = arith.constant 2 : i32
    %c67108864_i32_113 = arith.constant 67108864 : i32
    %413 = vector.broadcast %c67108864_i32_113 : i32 to vector<8x128xi32>
    %414 = arith.andi %412, %413 : vector<8x128xi32>
    %c26_i32_114 = arith.constant 26 : i32
    %415 = vector.broadcast %c26_i32_114 : i32 to vector<8x128xi32>
    %416 = arith.shrsi %414, %415 : vector<8x128xi32>
    %c1_i32_115 = arith.constant 1 : i32
    %417 = vector.broadcast %c1_i32_115 : i32 to vector<8x128xi32>
    %418 = arith.andi %416, %417 : vector<8x128xi32>
    %c1073741824_i32_116 = arith.constant 1073741824 : i32
    %419 = vector.broadcast %c1073741824_i32_116 : i32 to vector<8x128xi32>
    %420 = arith.andi %412, %419 : vector<8x128xi32>
    %c13_i32_117 = arith.constant 13 : i32
    %421 = vector.broadcast %c13_i32_117 : i32 to vector<8x128xi32>
    %422 = arith.shrsi %420, %421 : vector<8x128xi32>
    %c131072_i32_118 = arith.constant 131072 : i32
    %423 = vector.broadcast %c131072_i32_118 : i32 to vector<8x128xi32>
    %424 = arith.andi %422, %423 : vector<8x128xi32>
    %425 = arith.ori %418, %424 : vector<8x128xi32>
    %c128_i32_119 = arith.constant 128 : i32
    %426 = vector.broadcast %c128_i32_119 : i32 to vector<8x128xi32>
    %427 = arith.andi %412, %426 : vector<8x128xi32>
    %c4_i32_120 = arith.constant 4 : i32
    %428 = vector.broadcast %c4_i32_120 : i32 to vector<8x128xi32>
    %429 = arith.shrsi %427, %428 : vector<8x128xi32>
    %c8_i32_121 = arith.constant 8 : i32
    %430 = vector.broadcast %c8_i32_121 : i32 to vector<8x128xi32>
    %431 = arith.andi %429, %430 : vector<8x128xi32>
    %432 = arith.ori %425, %431 : vector<8x128xi32>
    %c32768_i32_122 = arith.constant 32768 : i32
    %433 = vector.broadcast %c32768_i32_122 : i32 to vector<8x128xi32>
    %434 = arith.andi %412, %433 : vector<8x128xi32>
    %c3_i32_123 = arith.constant 3 : i32
    %435 = vector.broadcast %c3_i32_123 : i32 to vector<8x128xi32>
    %436 = arith.shrsi %434, %435 : vector<8x128xi32>
    %c4096_i32_124 = arith.constant 4096 : i32
    %437 = vector.broadcast %c4096_i32_124 : i32 to vector<8x128xi32>
    %438 = arith.andi %436, %437 : vector<8x128xi32>
    %439 = arith.ori %432, %438 : vector<8x128xi32>
    %c268570632_i32_125 = arith.constant 268570632 : i32
    %440 = vector.broadcast %c268570632_i32_125 : i32 to vector<8x128xi32>
    %441 = arith.andi %412, %440 : vector<8x128xi32>
    %c2_i32_126 = arith.constant 2 : i32
    %442 = vector.broadcast %c2_i32_126 : i32 to vector<8x128xi32>
    %443 = arith.shrsi %441, %442 : vector<8x128xi32>
    %c67142658_i32_127 = arith.constant 67142658 : i32
    %444 = vector.broadcast %c67142658_i32_127 : i32 to vector<8x128xi32>
    %445 = arith.andi %443, %444 : vector<8x128xi32>
    %446 = arith.ori %439, %445 : vector<8x128xi32>
    %c276959240_i32_128 = arith.constant 276959240 : i32
    %447 = vector.broadcast %c276959240_i32_128 : i32 to vector<8x128xi32>
    %448 = arith.andi %412, %447 : vector<8x128xi32>
    %c1_i32_129 = arith.constant 1 : i32
    %449 = vector.broadcast %c1_i32_129 : i32 to vector<8x128xi32>
    %450 = arith.shrsi %448, %449 : vector<8x128xi32>
    %c138479620_i32_130 = arith.constant 138479620 : i32
    %451 = vector.broadcast %c138479620_i32_130 : i32 to vector<8x128xi32>
    %452 = arith.andi %450, %451 : vector<8x128xi32>
    %453 = arith.ori %446, %452 : vector<8x128xi32>
    %c8192_i32_131 = arith.constant 8192 : i32
    %454 = vector.broadcast %c8192_i32_131 : i32 to vector<8x128xi32>
    %455 = arith.andi %412, %454 : vector<8x128xi32>
    %c1_i32_132 = arith.constant 1 : i32
    %456 = vector.broadcast %c1_i32_132 : i32 to vector<8x128xi32>
    %457 = arith.shli %455, %456 : vector<8x128xi32>
    %458 = arith.ori %453, %457 : vector<8x128xi32>
    %c524304_i32_133 = arith.constant 524304 : i32
    %459 = vector.broadcast %c524304_i32_133 : i32 to vector<8x128xi32>
    %460 = arith.andi %412, %459 : vector<8x128xi32>
    %c2_i32_134 = arith.constant 2 : i32
    %461 = vector.broadcast %c2_i32_134 : i32 to vector<8x128xi32>
    %462 = arith.shli %460, %461 : vector<8x128xi32>
    %463 = arith.ori %458, %462 : vector<8x128xi32>
    %c2097152_i32_135 = arith.constant 2097152 : i32
    %464 = vector.broadcast %c2097152_i32_135 : i32 to vector<8x128xi32>
    %465 = arith.andi %412, %464 : vector<8x128xi32>
    %c3_i32_136 = arith.constant 3 : i32
    %466 = vector.broadcast %c3_i32_136 : i32 to vector<8x128xi32>
    %467 = arith.shli %465, %466 : vector<8x128xi32>
    %468 = arith.ori %463, %467 : vector<8x128xi32>
    %c33571329_i32_137 = arith.constant 33571329 : i32
    %469 = vector.broadcast %c33571329_i32_137 : i32 to vector<8x128xi32>
    %470 = arith.andi %412, %469 : vector<8x128xi32>
    %c4_i32_138 = arith.constant 4 : i32
    %471 = vector.broadcast %c4_i32_138 : i32 to vector<8x128xi32>
    %472 = arith.shli %470, %471 : vector<8x128xi32>
    %473 = arith.ori %468, %472 : vector<8x128xi32>
    %c1_i32_139 = arith.constant 1 : i32
    %474 = vector.broadcast %c1_i32_139 : i32 to vector<8x128xi32>
    %475 = arith.andi %412, %474 : vector<8x128xi32>
    %c5_i32_140 = arith.constant 5 : i32
    %476 = vector.broadcast %c5_i32_140 : i32 to vector<8x128xi32>
    %477 = arith.shli %475, %476 : vector<8x128xi32>
    %478 = arith.ori %473, %477 : vector<8x128xi32>
    %c2_i32_141 = arith.constant 2 : i32
    %479 = vector.broadcast %c2_i32_141 : i32 to vector<8x128xi32>
    %480 = arith.andi %412, %479 : vector<8x128xi32>
    %c24_i32_142 = arith.constant 24 : i32
    %481 = vector.broadcast %c24_i32_142 : i32 to vector<8x128xi32>
    %482 = arith.shli %480, %481 : vector<8x128xi32>
    %483 = arith.ori %478, %482 : vector<8x128xi32>
    %484 = arith.ori %46, %483 : vector<8x128xi32>
    %c67108864_i32_143 = arith.constant 67108864 : i32
    %485 = vector.broadcast %c67108864_i32_143 : i32 to vector<8x128xi32>
    %486 = arith.andi %412, %485 : vector<8x128xi32>
    %c24_i32_144 = arith.constant 24 : i32
    %487 = vector.broadcast %c24_i32_144 : i32 to vector<8x128xi32>
    %488 = arith.shrsi %486, %487 : vector<8x128xi32>
    %c4_i32_145 = arith.constant 4 : i32
    %489 = vector.broadcast %c4_i32_145 : i32 to vector<8x128xi32>
    %490 = arith.andi %488, %489 : vector<8x128xi32>
    %c1048576_i32_146 = arith.constant 1048576 : i32
    %491 = vector.broadcast %c1048576_i32_146 : i32 to vector<8x128xi32>
    %492 = arith.andi %412, %491 : vector<8x128xi32>
    %c17_i32_147 = arith.constant 17 : i32
    %493 = vector.broadcast %c17_i32_147 : i32 to vector<8x128xi32>
    %494 = arith.shrsi %492, %493 : vector<8x128xi32>
    %c8_i32_148 = arith.constant 8 : i32
    %495 = vector.broadcast %c8_i32_148 : i32 to vector<8x128xi32>
    %496 = arith.andi %494, %495 : vector<8x128xi32>
    %497 = arith.ori %490, %496 : vector<8x128xi32>
    %c1114112_i32_149 = arith.constant 1114112 : i32
    %498 = vector.broadcast %c1114112_i32_149 : i32 to vector<8x128xi32>
    %499 = arith.andi %412, %498 : vector<8x128xi32>
    %c16_i32_150 = arith.constant 16 : i32
    %500 = vector.broadcast %c16_i32_150 : i32 to vector<8x128xi32>
    %501 = arith.shrsi %499, %500 : vector<8x128xi32>
    %c17_i32_151 = arith.constant 17 : i32
    %502 = vector.broadcast %c17_i32_151 : i32 to vector<8x128xi32>
    %503 = arith.andi %501, %502 : vector<8x128xi32>
    %504 = arith.ori %497, %503 : vector<8x128xi32>
    %c65536_i32_152 = arith.constant 65536 : i32
    %505 = vector.broadcast %c65536_i32_152 : i32 to vector<8x128xi32>
    %506 = arith.andi %412, %505 : vector<8x128xi32>
    %c15_i32_153 = arith.constant 15 : i32
    %507 = vector.broadcast %c15_i32_153 : i32 to vector<8x128xi32>
    %508 = arith.shrsi %506, %507 : vector<8x128xi32>
    %c2_i32_154 = arith.constant 2 : i32
    %509 = vector.broadcast %c2_i32_154 : i32 to vector<8x128xi32>
    %510 = arith.andi %508, %509 : vector<8x128xi32>
    %511 = arith.ori %504, %510 : vector<8x128xi32>
    %c2048_i32_155 = arith.constant 2048 : i32
    %512 = vector.broadcast %c2048_i32_155 : i32 to vector<8x128xi32>
    %513 = arith.andi %412, %512 : vector<8x128xi32>
    %c5_i32_156 = arith.constant 5 : i32
    %514 = vector.broadcast %c5_i32_156 : i32 to vector<8x128xi32>
    %515 = arith.shrsi %513, %514 : vector<8x128xi32>
    %c64_i32_157 = arith.constant 64 : i32
    %516 = vector.broadcast %c64_i32_157 : i32 to vector<8x128xi32>
    %517 = arith.andi %515, %516 : vector<8x128xi32>
    %518 = arith.ori %511, %517 : vector<8x128xi32>
    %c134219776_i32_158 = arith.constant 134219776 : i32
    %519 = vector.broadcast %c134219776_i32_158 : i32 to vector<8x128xi32>
    %520 = arith.andi %412, %519 : vector<8x128xi32>
    %c4_i32_159 = arith.constant 4 : i32
    %521 = vector.broadcast %c4_i32_159 : i32 to vector<8x128xi32>
    %522 = arith.shrsi %520, %521 : vector<8x128xi32>
    %c8388736_i32_160 = arith.constant 8388736 : i32
    %523 = vector.broadcast %c8388736_i32_160 : i32 to vector<8x128xi32>
    %524 = arith.andi %522, %523 : vector<8x128xi32>
    %525 = arith.ori %518, %524 : vector<8x128xi32>
    %c-2147483648_i32_161 = arith.constant -2147483648 : i32
    %526 = vector.broadcast %c-2147483648_i32_161 : i32 to vector<8x128xi32>
    %527 = arith.andi %412, %526 : vector<8x128xi32>
    %c3_i32_162 = arith.constant 3 : i32
    %528 = vector.broadcast %c3_i32_162 : i32 to vector<8x128xi32>
    %529 = arith.shrsi %527, %528 : vector<8x128xi32>
    %c268435456_i32_163 = arith.constant 268435456 : i32
    %530 = vector.broadcast %c268435456_i32_163 : i32 to vector<8x128xi32>
    %531 = arith.andi %529, %530 : vector<8x128xi32>
    %532 = arith.ori %525, %531 : vector<8x128xi32>
    %c4194432_i32_164 = arith.constant 4194432 : i32
    %533 = vector.broadcast %c4194432_i32_164 : i32 to vector<8x128xi32>
    %534 = arith.andi %412, %533 : vector<8x128xi32>
    %c2_i32_165 = arith.constant 2 : i32
    %535 = vector.broadcast %c2_i32_165 : i32 to vector<8x128xi32>
    %536 = arith.shrsi %534, %535 : vector<8x128xi32>
    %c1048608_i32_166 = arith.constant 1048608 : i32
    %537 = vector.broadcast %c1048608_i32_166 : i32 to vector<8x128xi32>
    %538 = arith.andi %536, %537 : vector<8x128xi32>
    %539 = arith.ori %532, %538 : vector<8x128xi32>
    %c553648384_i32_167 = arith.constant 553648384 : i32
    %540 = vector.broadcast %c553648384_i32_167 : i32 to vector<8x128xi32>
    %541 = arith.andi %412, %540 : vector<8x128xi32>
    %c1_i32_168 = arith.constant 1 : i32
    %542 = vector.broadcast %c1_i32_168 : i32 to vector<8x128xi32>
    %543 = arith.shli %541, %542 : vector<8x128xi32>
    %544 = arith.ori %539, %543 : vector<8x128xi32>
    %c16777472_i32_169 = arith.constant 16777472 : i32
    %545 = vector.broadcast %c16777472_i32_169 : i32 to vector<8x128xi32>
    %546 = arith.andi %412, %545 : vector<8x128xi32>
    %c2_i32_170 = arith.constant 2 : i32
    %547 = vector.broadcast %c2_i32_170 : i32 to vector<8x128xi32>
    %548 = arith.shli %546, %547 : vector<8x128xi32>
    %549 = arith.ori %544, %548 : vector<8x128xi32>
    %c8192_i32_171 = arith.constant 8192 : i32
    %550 = vector.broadcast %c8192_i32_171 : i32 to vector<8x128xi32>
    %551 = arith.andi %412, %550 : vector<8x128xi32>
    %c3_i32_172 = arith.constant 3 : i32
    %552 = vector.broadcast %c3_i32_172 : i32 to vector<8x128xi32>
    %553 = arith.shli %551, %552 : vector<8x128xi32>
    %554 = arith.ori %549, %553 : vector<8x128xi32>
    %c16_i32_173 = arith.constant 16 : i32
    %555 = vector.broadcast %c16_i32_173 : i32 to vector<8x128xi32>
    %556 = arith.andi %412, %555 : vector<8x128xi32>
    %c4_i32_174 = arith.constant 4 : i32
    %557 = vector.broadcast %c4_i32_174 : i32 to vector<8x128xi32>
    %558 = arith.shli %556, %557 : vector<8x128xi32>
    %559 = arith.ori %554, %558 : vector<8x128xi32>
    %c4_i32_175 = arith.constant 4 : i32
    %560 = vector.broadcast %c4_i32_175 : i32 to vector<8x128xi32>
    %561 = arith.andi %412, %560 : vector<8x128xi32>
    %c12_i32_176 = arith.constant 12 : i32
    %562 = vector.broadcast %c12_i32_176 : i32 to vector<8x128xi32>
    %563 = arith.shli %561, %562 : vector<8x128xi32>
    %564 = arith.ori %559, %563 : vector<8x128xi32>
    %c262148_i32_177 = arith.constant 262148 : i32
    %565 = vector.broadcast %c262148_i32_177 : i32 to vector<8x128xi32>
    %566 = arith.andi %412, %565 : vector<8x128xi32>
    %c13_i32_178 = arith.constant 13 : i32
    %567 = vector.broadcast %c13_i32_178 : i32 to vector<8x128xi32>
    %568 = arith.shli %566, %567 : vector<8x128xi32>
    %569 = arith.ori %564, %568 : vector<8x128xi32>
    %c32_i32_179 = arith.constant 32 : i32
    %570 = vector.broadcast %c32_i32_179 : i32 to vector<8x128xi32>
    %571 = arith.andi %412, %570 : vector<8x128xi32>
    %c14_i32_180 = arith.constant 14 : i32
    %572 = vector.broadcast %c14_i32_180 : i32 to vector<8x128xi32>
    %573 = arith.shli %571, %572 : vector<8x128xi32>
    %574 = arith.ori %569, %573 : vector<8x128xi32>
    %c2_i32_181 = arith.constant 2 : i32
    %575 = vector.broadcast %c2_i32_181 : i32 to vector<8x128xi32>
    %576 = arith.andi %412, %575 : vector<8x128xi32>
    %c26_i32_182 = arith.constant 26 : i32
    %577 = vector.broadcast %c26_i32_182 : i32 to vector<8x128xi32>
    %578 = arith.shli %576, %577 : vector<8x128xi32>
    %579 = arith.ori %574, %578 : vector<8x128xi32>
    %580 = arith.ori %51, %579 : vector<8x128xi32>
    %581 = arith.andi %7, %484 : vector<8x128xi32>
    %582 = arith.xori %4, %581 : vector<8x128xi32>
    %583 = arith.andi %9, %484 : vector<8x128xi32>
    %584 = arith.xori %5, %583 : vector<8x128xi32>
    %585 = arith.xori %582, %584 : vector<8x128xi32>
    %586 = arith.andi %585, %580 : vector<8x128xi32>
    %587 = arith.xori %582, %586 : vector<8x128xi32>
    %c3_i32_183 = arith.constant 3 : i32
    %c67108864_i32_184 = arith.constant 67108864 : i32
    %588 = vector.broadcast %c67108864_i32_184 : i32 to vector<8x128xi32>
    %589 = arith.andi %587, %588 : vector<8x128xi32>
    %c26_i32_185 = arith.constant 26 : i32
    %590 = vector.broadcast %c26_i32_185 : i32 to vector<8x128xi32>
    %591 = arith.shrsi %589, %590 : vector<8x128xi32>
    %c1_i32_186 = arith.constant 1 : i32
    %592 = vector.broadcast %c1_i32_186 : i32 to vector<8x128xi32>
    %593 = arith.andi %591, %592 : vector<8x128xi32>
    %c1073741824_i32_187 = arith.constant 1073741824 : i32
    %594 = vector.broadcast %c1073741824_i32_187 : i32 to vector<8x128xi32>
    %595 = arith.andi %587, %594 : vector<8x128xi32>
    %c13_i32_188 = arith.constant 13 : i32
    %596 = vector.broadcast %c13_i32_188 : i32 to vector<8x128xi32>
    %597 = arith.shrsi %595, %596 : vector<8x128xi32>
    %c131072_i32_189 = arith.constant 131072 : i32
    %598 = vector.broadcast %c131072_i32_189 : i32 to vector<8x128xi32>
    %599 = arith.andi %597, %598 : vector<8x128xi32>
    %600 = arith.ori %593, %599 : vector<8x128xi32>
    %c128_i32_190 = arith.constant 128 : i32
    %601 = vector.broadcast %c128_i32_190 : i32 to vector<8x128xi32>
    %602 = arith.andi %587, %601 : vector<8x128xi32>
    %c4_i32_191 = arith.constant 4 : i32
    %603 = vector.broadcast %c4_i32_191 : i32 to vector<8x128xi32>
    %604 = arith.shrsi %602, %603 : vector<8x128xi32>
    %c8_i32_192 = arith.constant 8 : i32
    %605 = vector.broadcast %c8_i32_192 : i32 to vector<8x128xi32>
    %606 = arith.andi %604, %605 : vector<8x128xi32>
    %607 = arith.ori %600, %606 : vector<8x128xi32>
    %c32768_i32_193 = arith.constant 32768 : i32
    %608 = vector.broadcast %c32768_i32_193 : i32 to vector<8x128xi32>
    %609 = arith.andi %587, %608 : vector<8x128xi32>
    %c3_i32_194 = arith.constant 3 : i32
    %610 = vector.broadcast %c3_i32_194 : i32 to vector<8x128xi32>
    %611 = arith.shrsi %609, %610 : vector<8x128xi32>
    %c4096_i32_195 = arith.constant 4096 : i32
    %612 = vector.broadcast %c4096_i32_195 : i32 to vector<8x128xi32>
    %613 = arith.andi %611, %612 : vector<8x128xi32>
    %614 = arith.ori %607, %613 : vector<8x128xi32>
    %c268570632_i32_196 = arith.constant 268570632 : i32
    %615 = vector.broadcast %c268570632_i32_196 : i32 to vector<8x128xi32>
    %616 = arith.andi %587, %615 : vector<8x128xi32>
    %c2_i32_197 = arith.constant 2 : i32
    %617 = vector.broadcast %c2_i32_197 : i32 to vector<8x128xi32>
    %618 = arith.shrsi %616, %617 : vector<8x128xi32>
    %c67142658_i32_198 = arith.constant 67142658 : i32
    %619 = vector.broadcast %c67142658_i32_198 : i32 to vector<8x128xi32>
    %620 = arith.andi %618, %619 : vector<8x128xi32>
    %621 = arith.ori %614, %620 : vector<8x128xi32>
    %c276959240_i32_199 = arith.constant 276959240 : i32
    %622 = vector.broadcast %c276959240_i32_199 : i32 to vector<8x128xi32>
    %623 = arith.andi %587, %622 : vector<8x128xi32>
    %c1_i32_200 = arith.constant 1 : i32
    %624 = vector.broadcast %c1_i32_200 : i32 to vector<8x128xi32>
    %625 = arith.shrsi %623, %624 : vector<8x128xi32>
    %c138479620_i32_201 = arith.constant 138479620 : i32
    %626 = vector.broadcast %c138479620_i32_201 : i32 to vector<8x128xi32>
    %627 = arith.andi %625, %626 : vector<8x128xi32>
    %628 = arith.ori %621, %627 : vector<8x128xi32>
    %c8192_i32_202 = arith.constant 8192 : i32
    %629 = vector.broadcast %c8192_i32_202 : i32 to vector<8x128xi32>
    %630 = arith.andi %587, %629 : vector<8x128xi32>
    %c1_i32_203 = arith.constant 1 : i32
    %631 = vector.broadcast %c1_i32_203 : i32 to vector<8x128xi32>
    %632 = arith.shli %630, %631 : vector<8x128xi32>
    %633 = arith.ori %628, %632 : vector<8x128xi32>
    %c524304_i32_204 = arith.constant 524304 : i32
    %634 = vector.broadcast %c524304_i32_204 : i32 to vector<8x128xi32>
    %635 = arith.andi %587, %634 : vector<8x128xi32>
    %c2_i32_205 = arith.constant 2 : i32
    %636 = vector.broadcast %c2_i32_205 : i32 to vector<8x128xi32>
    %637 = arith.shli %635, %636 : vector<8x128xi32>
    %638 = arith.ori %633, %637 : vector<8x128xi32>
    %c2097152_i32_206 = arith.constant 2097152 : i32
    %639 = vector.broadcast %c2097152_i32_206 : i32 to vector<8x128xi32>
    %640 = arith.andi %587, %639 : vector<8x128xi32>
    %c3_i32_207 = arith.constant 3 : i32
    %641 = vector.broadcast %c3_i32_207 : i32 to vector<8x128xi32>
    %642 = arith.shli %640, %641 : vector<8x128xi32>
    %643 = arith.ori %638, %642 : vector<8x128xi32>
    %c33571329_i32_208 = arith.constant 33571329 : i32
    %644 = vector.broadcast %c33571329_i32_208 : i32 to vector<8x128xi32>
    %645 = arith.andi %587, %644 : vector<8x128xi32>
    %c4_i32_209 = arith.constant 4 : i32
    %646 = vector.broadcast %c4_i32_209 : i32 to vector<8x128xi32>
    %647 = arith.shli %645, %646 : vector<8x128xi32>
    %648 = arith.ori %643, %647 : vector<8x128xi32>
    %c1_i32_210 = arith.constant 1 : i32
    %649 = vector.broadcast %c1_i32_210 : i32 to vector<8x128xi32>
    %650 = arith.andi %587, %649 : vector<8x128xi32>
    %c5_i32_211 = arith.constant 5 : i32
    %651 = vector.broadcast %c5_i32_211 : i32 to vector<8x128xi32>
    %652 = arith.shli %650, %651 : vector<8x128xi32>
    %653 = arith.ori %648, %652 : vector<8x128xi32>
    %c2_i32_212 = arith.constant 2 : i32
    %654 = vector.broadcast %c2_i32_212 : i32 to vector<8x128xi32>
    %655 = arith.andi %587, %654 : vector<8x128xi32>
    %c24_i32_213 = arith.constant 24 : i32
    %656 = vector.broadcast %c24_i32_213 : i32 to vector<8x128xi32>
    %657 = arith.shli %655, %656 : vector<8x128xi32>
    %658 = arith.ori %653, %657 : vector<8x128xi32>
    %659 = arith.ori %46, %658 : vector<8x128xi32>
    %c67108864_i32_214 = arith.constant 67108864 : i32
    %660 = vector.broadcast %c67108864_i32_214 : i32 to vector<8x128xi32>
    %661 = arith.andi %587, %660 : vector<8x128xi32>
    %c24_i32_215 = arith.constant 24 : i32
    %662 = vector.broadcast %c24_i32_215 : i32 to vector<8x128xi32>
    %663 = arith.shrsi %661, %662 : vector<8x128xi32>
    %c4_i32_216 = arith.constant 4 : i32
    %664 = vector.broadcast %c4_i32_216 : i32 to vector<8x128xi32>
    %665 = arith.andi %663, %664 : vector<8x128xi32>
    %c1048576_i32_217 = arith.constant 1048576 : i32
    %666 = vector.broadcast %c1048576_i32_217 : i32 to vector<8x128xi32>
    %667 = arith.andi %587, %666 : vector<8x128xi32>
    %c17_i32_218 = arith.constant 17 : i32
    %668 = vector.broadcast %c17_i32_218 : i32 to vector<8x128xi32>
    %669 = arith.shrsi %667, %668 : vector<8x128xi32>
    %c8_i32_219 = arith.constant 8 : i32
    %670 = vector.broadcast %c8_i32_219 : i32 to vector<8x128xi32>
    %671 = arith.andi %669, %670 : vector<8x128xi32>
    %672 = arith.ori %665, %671 : vector<8x128xi32>
    %c1114112_i32_220 = arith.constant 1114112 : i32
    %673 = vector.broadcast %c1114112_i32_220 : i32 to vector<8x128xi32>
    %674 = arith.andi %587, %673 : vector<8x128xi32>
    %c16_i32_221 = arith.constant 16 : i32
    %675 = vector.broadcast %c16_i32_221 : i32 to vector<8x128xi32>
    %676 = arith.shrsi %674, %675 : vector<8x128xi32>
    %c17_i32_222 = arith.constant 17 : i32
    %677 = vector.broadcast %c17_i32_222 : i32 to vector<8x128xi32>
    %678 = arith.andi %676, %677 : vector<8x128xi32>
    %679 = arith.ori %672, %678 : vector<8x128xi32>
    %c65536_i32_223 = arith.constant 65536 : i32
    %680 = vector.broadcast %c65536_i32_223 : i32 to vector<8x128xi32>
    %681 = arith.andi %587, %680 : vector<8x128xi32>
    %c15_i32_224 = arith.constant 15 : i32
    %682 = vector.broadcast %c15_i32_224 : i32 to vector<8x128xi32>
    %683 = arith.shrsi %681, %682 : vector<8x128xi32>
    %c2_i32_225 = arith.constant 2 : i32
    %684 = vector.broadcast %c2_i32_225 : i32 to vector<8x128xi32>
    %685 = arith.andi %683, %684 : vector<8x128xi32>
    %686 = arith.ori %679, %685 : vector<8x128xi32>
    %c2048_i32_226 = arith.constant 2048 : i32
    %687 = vector.broadcast %c2048_i32_226 : i32 to vector<8x128xi32>
    %688 = arith.andi %587, %687 : vector<8x128xi32>
    %c5_i32_227 = arith.constant 5 : i32
    %689 = vector.broadcast %c5_i32_227 : i32 to vector<8x128xi32>
    %690 = arith.shrsi %688, %689 : vector<8x128xi32>
    %c64_i32_228 = arith.constant 64 : i32
    %691 = vector.broadcast %c64_i32_228 : i32 to vector<8x128xi32>
    %692 = arith.andi %690, %691 : vector<8x128xi32>
    %693 = arith.ori %686, %692 : vector<8x128xi32>
    %c134219776_i32_229 = arith.constant 134219776 : i32
    %694 = vector.broadcast %c134219776_i32_229 : i32 to vector<8x128xi32>
    %695 = arith.andi %587, %694 : vector<8x128xi32>
    %c4_i32_230 = arith.constant 4 : i32
    %696 = vector.broadcast %c4_i32_230 : i32 to vector<8x128xi32>
    %697 = arith.shrsi %695, %696 : vector<8x128xi32>
    %c8388736_i32_231 = arith.constant 8388736 : i32
    %698 = vector.broadcast %c8388736_i32_231 : i32 to vector<8x128xi32>
    %699 = arith.andi %697, %698 : vector<8x128xi32>
    %700 = arith.ori %693, %699 : vector<8x128xi32>
    %c-2147483648_i32_232 = arith.constant -2147483648 : i32
    %701 = vector.broadcast %c-2147483648_i32_232 : i32 to vector<8x128xi32>
    %702 = arith.andi %587, %701 : vector<8x128xi32>
    %c3_i32_233 = arith.constant 3 : i32
    %703 = vector.broadcast %c3_i32_233 : i32 to vector<8x128xi32>
    %704 = arith.shrsi %702, %703 : vector<8x128xi32>
    %c268435456_i32_234 = arith.constant 268435456 : i32
    %705 = vector.broadcast %c268435456_i32_234 : i32 to vector<8x128xi32>
    %706 = arith.andi %704, %705 : vector<8x128xi32>
    %707 = arith.ori %700, %706 : vector<8x128xi32>
    %c4194432_i32_235 = arith.constant 4194432 : i32
    %708 = vector.broadcast %c4194432_i32_235 : i32 to vector<8x128xi32>
    %709 = arith.andi %587, %708 : vector<8x128xi32>
    %c2_i32_236 = arith.constant 2 : i32
    %710 = vector.broadcast %c2_i32_236 : i32 to vector<8x128xi32>
    %711 = arith.shrsi %709, %710 : vector<8x128xi32>
    %c1048608_i32_237 = arith.constant 1048608 : i32
    %712 = vector.broadcast %c1048608_i32_237 : i32 to vector<8x128xi32>
    %713 = arith.andi %711, %712 : vector<8x128xi32>
    %714 = arith.ori %707, %713 : vector<8x128xi32>
    %c553648384_i32_238 = arith.constant 553648384 : i32
    %715 = vector.broadcast %c553648384_i32_238 : i32 to vector<8x128xi32>
    %716 = arith.andi %587, %715 : vector<8x128xi32>
    %c1_i32_239 = arith.constant 1 : i32
    %717 = vector.broadcast %c1_i32_239 : i32 to vector<8x128xi32>
    %718 = arith.shli %716, %717 : vector<8x128xi32>
    %719 = arith.ori %714, %718 : vector<8x128xi32>
    %c16777472_i32_240 = arith.constant 16777472 : i32
    %720 = vector.broadcast %c16777472_i32_240 : i32 to vector<8x128xi32>
    %721 = arith.andi %587, %720 : vector<8x128xi32>
    %c2_i32_241 = arith.constant 2 : i32
    %722 = vector.broadcast %c2_i32_241 : i32 to vector<8x128xi32>
    %723 = arith.shli %721, %722 : vector<8x128xi32>
    %724 = arith.ori %719, %723 : vector<8x128xi32>
    %c8192_i32_242 = arith.constant 8192 : i32
    %725 = vector.broadcast %c8192_i32_242 : i32 to vector<8x128xi32>
    %726 = arith.andi %587, %725 : vector<8x128xi32>
    %c3_i32_243 = arith.constant 3 : i32
    %727 = vector.broadcast %c3_i32_243 : i32 to vector<8x128xi32>
    %728 = arith.shli %726, %727 : vector<8x128xi32>
    %729 = arith.ori %724, %728 : vector<8x128xi32>
    %c16_i32_244 = arith.constant 16 : i32
    %730 = vector.broadcast %c16_i32_244 : i32 to vector<8x128xi32>
    %731 = arith.andi %587, %730 : vector<8x128xi32>
    %c4_i32_245 = arith.constant 4 : i32
    %732 = vector.broadcast %c4_i32_245 : i32 to vector<8x128xi32>
    %733 = arith.shli %731, %732 : vector<8x128xi32>
    %734 = arith.ori %729, %733 : vector<8x128xi32>
    %c4_i32_246 = arith.constant 4 : i32
    %735 = vector.broadcast %c4_i32_246 : i32 to vector<8x128xi32>
    %736 = arith.andi %587, %735 : vector<8x128xi32>
    %c12_i32_247 = arith.constant 12 : i32
    %737 = vector.broadcast %c12_i32_247 : i32 to vector<8x128xi32>
    %738 = arith.shli %736, %737 : vector<8x128xi32>
    %739 = arith.ori %734, %738 : vector<8x128xi32>
    %c262148_i32_248 = arith.constant 262148 : i32
    %740 = vector.broadcast %c262148_i32_248 : i32 to vector<8x128xi32>
    %741 = arith.andi %587, %740 : vector<8x128xi32>
    %c13_i32_249 = arith.constant 13 : i32
    %742 = vector.broadcast %c13_i32_249 : i32 to vector<8x128xi32>
    %743 = arith.shli %741, %742 : vector<8x128xi32>
    %744 = arith.ori %739, %743 : vector<8x128xi32>
    %c32_i32_250 = arith.constant 32 : i32
    %745 = vector.broadcast %c32_i32_250 : i32 to vector<8x128xi32>
    %746 = arith.andi %587, %745 : vector<8x128xi32>
    %c14_i32_251 = arith.constant 14 : i32
    %747 = vector.broadcast %c14_i32_251 : i32 to vector<8x128xi32>
    %748 = arith.shli %746, %747 : vector<8x128xi32>
    %749 = arith.ori %744, %748 : vector<8x128xi32>
    %c2_i32_252 = arith.constant 2 : i32
    %750 = vector.broadcast %c2_i32_252 : i32 to vector<8x128xi32>
    %751 = arith.andi %587, %750 : vector<8x128xi32>
    %c26_i32_253 = arith.constant 26 : i32
    %752 = vector.broadcast %c26_i32_253 : i32 to vector<8x128xi32>
    %753 = arith.shli %751, %752 : vector<8x128xi32>
    %754 = arith.ori %749, %753 : vector<8x128xi32>
    %755 = arith.ori %51, %754 : vector<8x128xi32>
    %756 = arith.andi %7, %659 : vector<8x128xi32>
    %757 = arith.xori %4, %756 : vector<8x128xi32>
    %758 = arith.andi %9, %659 : vector<8x128xi32>
    %759 = arith.xori %5, %758 : vector<8x128xi32>
    %760 = arith.xori %757, %759 : vector<8x128xi32>
    %761 = arith.andi %760, %755 : vector<8x128xi32>
    %762 = arith.xori %757, %761 : vector<8x128xi32>
    %c4_i32_254 = arith.constant 4 : i32
    %c67108864_i32_255 = arith.constant 67108864 : i32
    %763 = vector.broadcast %c67108864_i32_255 : i32 to vector<8x128xi32>
    %764 = arith.andi %762, %763 : vector<8x128xi32>
    %c26_i32_256 = arith.constant 26 : i32
    %765 = vector.broadcast %c26_i32_256 : i32 to vector<8x128xi32>
    %766 = arith.shrsi %764, %765 : vector<8x128xi32>
    %c1_i32_257 = arith.constant 1 : i32
    %767 = vector.broadcast %c1_i32_257 : i32 to vector<8x128xi32>
    %768 = arith.andi %766, %767 : vector<8x128xi32>
    %c1073741824_i32_258 = arith.constant 1073741824 : i32
    %769 = vector.broadcast %c1073741824_i32_258 : i32 to vector<8x128xi32>
    %770 = arith.andi %762, %769 : vector<8x128xi32>
    %c13_i32_259 = arith.constant 13 : i32
    %771 = vector.broadcast %c13_i32_259 : i32 to vector<8x128xi32>
    %772 = arith.shrsi %770, %771 : vector<8x128xi32>
    %c131072_i32_260 = arith.constant 131072 : i32
    %773 = vector.broadcast %c131072_i32_260 : i32 to vector<8x128xi32>
    %774 = arith.andi %772, %773 : vector<8x128xi32>
    %775 = arith.ori %768, %774 : vector<8x128xi32>
    %c128_i32_261 = arith.constant 128 : i32
    %776 = vector.broadcast %c128_i32_261 : i32 to vector<8x128xi32>
    %777 = arith.andi %762, %776 : vector<8x128xi32>
    %c4_i32_262 = arith.constant 4 : i32
    %778 = vector.broadcast %c4_i32_262 : i32 to vector<8x128xi32>
    %779 = arith.shrsi %777, %778 : vector<8x128xi32>
    %c8_i32_263 = arith.constant 8 : i32
    %780 = vector.broadcast %c8_i32_263 : i32 to vector<8x128xi32>
    %781 = arith.andi %779, %780 : vector<8x128xi32>
    %782 = arith.ori %775, %781 : vector<8x128xi32>
    %c32768_i32_264 = arith.constant 32768 : i32
    %783 = vector.broadcast %c32768_i32_264 : i32 to vector<8x128xi32>
    %784 = arith.andi %762, %783 : vector<8x128xi32>
    %c3_i32_265 = arith.constant 3 : i32
    %785 = vector.broadcast %c3_i32_265 : i32 to vector<8x128xi32>
    %786 = arith.shrsi %784, %785 : vector<8x128xi32>
    %c4096_i32_266 = arith.constant 4096 : i32
    %787 = vector.broadcast %c4096_i32_266 : i32 to vector<8x128xi32>
    %788 = arith.andi %786, %787 : vector<8x128xi32>
    %789 = arith.ori %782, %788 : vector<8x128xi32>
    %c268570632_i32_267 = arith.constant 268570632 : i32
    %790 = vector.broadcast %c268570632_i32_267 : i32 to vector<8x128xi32>
    %791 = arith.andi %762, %790 : vector<8x128xi32>
    %c2_i32_268 = arith.constant 2 : i32
    %792 = vector.broadcast %c2_i32_268 : i32 to vector<8x128xi32>
    %793 = arith.shrsi %791, %792 : vector<8x128xi32>
    %c67142658_i32_269 = arith.constant 67142658 : i32
    %794 = vector.broadcast %c67142658_i32_269 : i32 to vector<8x128xi32>
    %795 = arith.andi %793, %794 : vector<8x128xi32>
    %796 = arith.ori %789, %795 : vector<8x128xi32>
    %c276959240_i32_270 = arith.constant 276959240 : i32
    %797 = vector.broadcast %c276959240_i32_270 : i32 to vector<8x128xi32>
    %798 = arith.andi %762, %797 : vector<8x128xi32>
    %c1_i32_271 = arith.constant 1 : i32
    %799 = vector.broadcast %c1_i32_271 : i32 to vector<8x128xi32>
    %800 = arith.shrsi %798, %799 : vector<8x128xi32>
    %c138479620_i32_272 = arith.constant 138479620 : i32
    %801 = vector.broadcast %c138479620_i32_272 : i32 to vector<8x128xi32>
    %802 = arith.andi %800, %801 : vector<8x128xi32>
    %803 = arith.ori %796, %802 : vector<8x128xi32>
    %c8192_i32_273 = arith.constant 8192 : i32
    %804 = vector.broadcast %c8192_i32_273 : i32 to vector<8x128xi32>
    %805 = arith.andi %762, %804 : vector<8x128xi32>
    %c1_i32_274 = arith.constant 1 : i32
    %806 = vector.broadcast %c1_i32_274 : i32 to vector<8x128xi32>
    %807 = arith.shli %805, %806 : vector<8x128xi32>
    %808 = arith.ori %803, %807 : vector<8x128xi32>
    %c524304_i32_275 = arith.constant 524304 : i32
    %809 = vector.broadcast %c524304_i32_275 : i32 to vector<8x128xi32>
    %810 = arith.andi %762, %809 : vector<8x128xi32>
    %c2_i32_276 = arith.constant 2 : i32
    %811 = vector.broadcast %c2_i32_276 : i32 to vector<8x128xi32>
    %812 = arith.shli %810, %811 : vector<8x128xi32>
    %813 = arith.ori %808, %812 : vector<8x128xi32>
    %c2097152_i32_277 = arith.constant 2097152 : i32
    %814 = vector.broadcast %c2097152_i32_277 : i32 to vector<8x128xi32>
    %815 = arith.andi %762, %814 : vector<8x128xi32>
    %c3_i32_278 = arith.constant 3 : i32
    %816 = vector.broadcast %c3_i32_278 : i32 to vector<8x128xi32>
    %817 = arith.shli %815, %816 : vector<8x128xi32>
    %818 = arith.ori %813, %817 : vector<8x128xi32>
    %c33571329_i32_279 = arith.constant 33571329 : i32
    %819 = vector.broadcast %c33571329_i32_279 : i32 to vector<8x128xi32>
    %820 = arith.andi %762, %819 : vector<8x128xi32>
    %c4_i32_280 = arith.constant 4 : i32
    %821 = vector.broadcast %c4_i32_280 : i32 to vector<8x128xi32>
    %822 = arith.shli %820, %821 : vector<8x128xi32>
    %823 = arith.ori %818, %822 : vector<8x128xi32>
    %c1_i32_281 = arith.constant 1 : i32
    %824 = vector.broadcast %c1_i32_281 : i32 to vector<8x128xi32>
    %825 = arith.andi %762, %824 : vector<8x128xi32>
    %c5_i32_282 = arith.constant 5 : i32
    %826 = vector.broadcast %c5_i32_282 : i32 to vector<8x128xi32>
    %827 = arith.shli %825, %826 : vector<8x128xi32>
    %828 = arith.ori %823, %827 : vector<8x128xi32>
    %c2_i32_283 = arith.constant 2 : i32
    %829 = vector.broadcast %c2_i32_283 : i32 to vector<8x128xi32>
    %830 = arith.andi %762, %829 : vector<8x128xi32>
    %c24_i32_284 = arith.constant 24 : i32
    %831 = vector.broadcast %c24_i32_284 : i32 to vector<8x128xi32>
    %832 = arith.shli %830, %831 : vector<8x128xi32>
    %833 = arith.ori %828, %832 : vector<8x128xi32>
    %834 = arith.ori %46, %833 : vector<8x128xi32>
    %c67108864_i32_285 = arith.constant 67108864 : i32
    %835 = vector.broadcast %c67108864_i32_285 : i32 to vector<8x128xi32>
    %836 = arith.andi %762, %835 : vector<8x128xi32>
    %c24_i32_286 = arith.constant 24 : i32
    %837 = vector.broadcast %c24_i32_286 : i32 to vector<8x128xi32>
    %838 = arith.shrsi %836, %837 : vector<8x128xi32>
    %c4_i32_287 = arith.constant 4 : i32
    %839 = vector.broadcast %c4_i32_287 : i32 to vector<8x128xi32>
    %840 = arith.andi %838, %839 : vector<8x128xi32>
    %c1048576_i32_288 = arith.constant 1048576 : i32
    %841 = vector.broadcast %c1048576_i32_288 : i32 to vector<8x128xi32>
    %842 = arith.andi %762, %841 : vector<8x128xi32>
    %c17_i32_289 = arith.constant 17 : i32
    %843 = vector.broadcast %c17_i32_289 : i32 to vector<8x128xi32>
    %844 = arith.shrsi %842, %843 : vector<8x128xi32>
    %c8_i32_290 = arith.constant 8 : i32
    %845 = vector.broadcast %c8_i32_290 : i32 to vector<8x128xi32>
    %846 = arith.andi %844, %845 : vector<8x128xi32>
    %847 = arith.ori %840, %846 : vector<8x128xi32>
    %c1114112_i32_291 = arith.constant 1114112 : i32
    %848 = vector.broadcast %c1114112_i32_291 : i32 to vector<8x128xi32>
    %849 = arith.andi %762, %848 : vector<8x128xi32>
    %c16_i32_292 = arith.constant 16 : i32
    %850 = vector.broadcast %c16_i32_292 : i32 to vector<8x128xi32>
    %851 = arith.shrsi %849, %850 : vector<8x128xi32>
    %c17_i32_293 = arith.constant 17 : i32
    %852 = vector.broadcast %c17_i32_293 : i32 to vector<8x128xi32>
    %853 = arith.andi %851, %852 : vector<8x128xi32>
    %854 = arith.ori %847, %853 : vector<8x128xi32>
    %c65536_i32_294 = arith.constant 65536 : i32
    %855 = vector.broadcast %c65536_i32_294 : i32 to vector<8x128xi32>
    %856 = arith.andi %762, %855 : vector<8x128xi32>
    %c15_i32_295 = arith.constant 15 : i32
    %857 = vector.broadcast %c15_i32_295 : i32 to vector<8x128xi32>
    %858 = arith.shrsi %856, %857 : vector<8x128xi32>
    %c2_i32_296 = arith.constant 2 : i32
    %859 = vector.broadcast %c2_i32_296 : i32 to vector<8x128xi32>
    %860 = arith.andi %858, %859 : vector<8x128xi32>
    %861 = arith.ori %854, %860 : vector<8x128xi32>
    %c2048_i32_297 = arith.constant 2048 : i32
    %862 = vector.broadcast %c2048_i32_297 : i32 to vector<8x128xi32>
    %863 = arith.andi %762, %862 : vector<8x128xi32>
    %c5_i32_298 = arith.constant 5 : i32
    %864 = vector.broadcast %c5_i32_298 : i32 to vector<8x128xi32>
    %865 = arith.shrsi %863, %864 : vector<8x128xi32>
    %c64_i32_299 = arith.constant 64 : i32
    %866 = vector.broadcast %c64_i32_299 : i32 to vector<8x128xi32>
    %867 = arith.andi %865, %866 : vector<8x128xi32>
    %868 = arith.ori %861, %867 : vector<8x128xi32>
    %c134219776_i32_300 = arith.constant 134219776 : i32
    %869 = vector.broadcast %c134219776_i32_300 : i32 to vector<8x128xi32>
    %870 = arith.andi %762, %869 : vector<8x128xi32>
    %c4_i32_301 = arith.constant 4 : i32
    %871 = vector.broadcast %c4_i32_301 : i32 to vector<8x128xi32>
    %872 = arith.shrsi %870, %871 : vector<8x128xi32>
    %c8388736_i32_302 = arith.constant 8388736 : i32
    %873 = vector.broadcast %c8388736_i32_302 : i32 to vector<8x128xi32>
    %874 = arith.andi %872, %873 : vector<8x128xi32>
    %875 = arith.ori %868, %874 : vector<8x128xi32>
    %c-2147483648_i32_303 = arith.constant -2147483648 : i32
    %876 = vector.broadcast %c-2147483648_i32_303 : i32 to vector<8x128xi32>
    %877 = arith.andi %762, %876 : vector<8x128xi32>
    %c3_i32_304 = arith.constant 3 : i32
    %878 = vector.broadcast %c3_i32_304 : i32 to vector<8x128xi32>
    %879 = arith.shrsi %877, %878 : vector<8x128xi32>
    %c268435456_i32_305 = arith.constant 268435456 : i32
    %880 = vector.broadcast %c268435456_i32_305 : i32 to vector<8x128xi32>
    %881 = arith.andi %879, %880 : vector<8x128xi32>
    %882 = arith.ori %875, %881 : vector<8x128xi32>
    %c4194432_i32_306 = arith.constant 4194432 : i32
    %883 = vector.broadcast %c4194432_i32_306 : i32 to vector<8x128xi32>
    %884 = arith.andi %762, %883 : vector<8x128xi32>
    %c2_i32_307 = arith.constant 2 : i32
    %885 = vector.broadcast %c2_i32_307 : i32 to vector<8x128xi32>
    %886 = arith.shrsi %884, %885 : vector<8x128xi32>
    %c1048608_i32_308 = arith.constant 1048608 : i32
    %887 = vector.broadcast %c1048608_i32_308 : i32 to vector<8x128xi32>
    %888 = arith.andi %886, %887 : vector<8x128xi32>
    %889 = arith.ori %882, %888 : vector<8x128xi32>
    %c553648384_i32_309 = arith.constant 553648384 : i32
    %890 = vector.broadcast %c553648384_i32_309 : i32 to vector<8x128xi32>
    %891 = arith.andi %762, %890 : vector<8x128xi32>
    %c1_i32_310 = arith.constant 1 : i32
    %892 = vector.broadcast %c1_i32_310 : i32 to vector<8x128xi32>
    %893 = arith.shli %891, %892 : vector<8x128xi32>
    %894 = arith.ori %889, %893 : vector<8x128xi32>
    %c16777472_i32_311 = arith.constant 16777472 : i32
    %895 = vector.broadcast %c16777472_i32_311 : i32 to vector<8x128xi32>
    %896 = arith.andi %762, %895 : vector<8x128xi32>
    %c2_i32_312 = arith.constant 2 : i32
    %897 = vector.broadcast %c2_i32_312 : i32 to vector<8x128xi32>
    %898 = arith.shli %896, %897 : vector<8x128xi32>
    %899 = arith.ori %894, %898 : vector<8x128xi32>
    %c8192_i32_313 = arith.constant 8192 : i32
    %900 = vector.broadcast %c8192_i32_313 : i32 to vector<8x128xi32>
    %901 = arith.andi %762, %900 : vector<8x128xi32>
    %c3_i32_314 = arith.constant 3 : i32
    %902 = vector.broadcast %c3_i32_314 : i32 to vector<8x128xi32>
    %903 = arith.shli %901, %902 : vector<8x128xi32>
    %904 = arith.ori %899, %903 : vector<8x128xi32>
    %c16_i32_315 = arith.constant 16 : i32
    %905 = vector.broadcast %c16_i32_315 : i32 to vector<8x128xi32>
    %906 = arith.andi %762, %905 : vector<8x128xi32>
    %c4_i32_316 = arith.constant 4 : i32
    %907 = vector.broadcast %c4_i32_316 : i32 to vector<8x128xi32>
    %908 = arith.shli %906, %907 : vector<8x128xi32>
    %909 = arith.ori %904, %908 : vector<8x128xi32>
    %c4_i32_317 = arith.constant 4 : i32
    %910 = vector.broadcast %c4_i32_317 : i32 to vector<8x128xi32>
    %911 = arith.andi %762, %910 : vector<8x128xi32>
    %c12_i32_318 = arith.constant 12 : i32
    %912 = vector.broadcast %c12_i32_318 : i32 to vector<8x128xi32>
    %913 = arith.shli %911, %912 : vector<8x128xi32>
    %914 = arith.ori %909, %913 : vector<8x128xi32>
    %c262148_i32_319 = arith.constant 262148 : i32
    %915 = vector.broadcast %c262148_i32_319 : i32 to vector<8x128xi32>
    %916 = arith.andi %762, %915 : vector<8x128xi32>
    %c13_i32_320 = arith.constant 13 : i32
    %917 = vector.broadcast %c13_i32_320 : i32 to vector<8x128xi32>
    %918 = arith.shli %916, %917 : vector<8x128xi32>
    %919 = arith.ori %914, %918 : vector<8x128xi32>
    %c32_i32_321 = arith.constant 32 : i32
    %920 = vector.broadcast %c32_i32_321 : i32 to vector<8x128xi32>
    %921 = arith.andi %762, %920 : vector<8x128xi32>
    %c14_i32_322 = arith.constant 14 : i32
    %922 = vector.broadcast %c14_i32_322 : i32 to vector<8x128xi32>
    %923 = arith.shli %921, %922 : vector<8x128xi32>
    %924 = arith.ori %919, %923 : vector<8x128xi32>
    %c2_i32_323 = arith.constant 2 : i32
    %925 = vector.broadcast %c2_i32_323 : i32 to vector<8x128xi32>
    %926 = arith.andi %762, %925 : vector<8x128xi32>
    %c26_i32_324 = arith.constant 26 : i32
    %927 = vector.broadcast %c26_i32_324 : i32 to vector<8x128xi32>
    %928 = arith.shli %926, %927 : vector<8x128xi32>
    %929 = arith.ori %924, %928 : vector<8x128xi32>
    %930 = arith.ori %51, %929 : vector<8x128xi32>
    %931 = arith.andi %7, %834 : vector<8x128xi32>
    %932 = arith.xori %4, %931 : vector<8x128xi32>
    %933 = arith.andi %9, %834 : vector<8x128xi32>
    %934 = arith.xori %5, %933 : vector<8x128xi32>
    %935 = arith.xori %932, %934 : vector<8x128xi32>
    %936 = arith.andi %935, %930 : vector<8x128xi32>
    %937 = arith.xori %932, %936 : vector<8x128xi32>
    %c5_i32_325 = arith.constant 5 : i32
    %c67108864_i32_326 = arith.constant 67108864 : i32
    %938 = vector.broadcast %c67108864_i32_326 : i32 to vector<8x128xi32>
    %939 = arith.andi %937, %938 : vector<8x128xi32>
    %c26_i32_327 = arith.constant 26 : i32
    %940 = vector.broadcast %c26_i32_327 : i32 to vector<8x128xi32>
    %941 = arith.shrsi %939, %940 : vector<8x128xi32>
    %c1_i32_328 = arith.constant 1 : i32
    %942 = vector.broadcast %c1_i32_328 : i32 to vector<8x128xi32>
    %943 = arith.andi %941, %942 : vector<8x128xi32>
    %c1073741824_i32_329 = arith.constant 1073741824 : i32
    %944 = vector.broadcast %c1073741824_i32_329 : i32 to vector<8x128xi32>
    %945 = arith.andi %937, %944 : vector<8x128xi32>
    %c13_i32_330 = arith.constant 13 : i32
    %946 = vector.broadcast %c13_i32_330 : i32 to vector<8x128xi32>
    %947 = arith.shrsi %945, %946 : vector<8x128xi32>
    %c131072_i32_331 = arith.constant 131072 : i32
    %948 = vector.broadcast %c131072_i32_331 : i32 to vector<8x128xi32>
    %949 = arith.andi %947, %948 : vector<8x128xi32>
    %950 = arith.ori %943, %949 : vector<8x128xi32>
    %c128_i32_332 = arith.constant 128 : i32
    %951 = vector.broadcast %c128_i32_332 : i32 to vector<8x128xi32>
    %952 = arith.andi %937, %951 : vector<8x128xi32>
    %c4_i32_333 = arith.constant 4 : i32
    %953 = vector.broadcast %c4_i32_333 : i32 to vector<8x128xi32>
    %954 = arith.shrsi %952, %953 : vector<8x128xi32>
    %c8_i32_334 = arith.constant 8 : i32
    %955 = vector.broadcast %c8_i32_334 : i32 to vector<8x128xi32>
    %956 = arith.andi %954, %955 : vector<8x128xi32>
    %957 = arith.ori %950, %956 : vector<8x128xi32>
    %c32768_i32_335 = arith.constant 32768 : i32
    %958 = vector.broadcast %c32768_i32_335 : i32 to vector<8x128xi32>
    %959 = arith.andi %937, %958 : vector<8x128xi32>
    %c3_i32_336 = arith.constant 3 : i32
    %960 = vector.broadcast %c3_i32_336 : i32 to vector<8x128xi32>
    %961 = arith.shrsi %959, %960 : vector<8x128xi32>
    %c4096_i32_337 = arith.constant 4096 : i32
    %962 = vector.broadcast %c4096_i32_337 : i32 to vector<8x128xi32>
    %963 = arith.andi %961, %962 : vector<8x128xi32>
    %964 = arith.ori %957, %963 : vector<8x128xi32>
    %c268570632_i32_338 = arith.constant 268570632 : i32
    %965 = vector.broadcast %c268570632_i32_338 : i32 to vector<8x128xi32>
    %966 = arith.andi %937, %965 : vector<8x128xi32>
    %c2_i32_339 = arith.constant 2 : i32
    %967 = vector.broadcast %c2_i32_339 : i32 to vector<8x128xi32>
    %968 = arith.shrsi %966, %967 : vector<8x128xi32>
    %c67142658_i32_340 = arith.constant 67142658 : i32
    %969 = vector.broadcast %c67142658_i32_340 : i32 to vector<8x128xi32>
    %970 = arith.andi %968, %969 : vector<8x128xi32>
    %971 = arith.ori %964, %970 : vector<8x128xi32>
    %c276959240_i32_341 = arith.constant 276959240 : i32
    %972 = vector.broadcast %c276959240_i32_341 : i32 to vector<8x128xi32>
    %973 = arith.andi %937, %972 : vector<8x128xi32>
    %c1_i32_342 = arith.constant 1 : i32
    %974 = vector.broadcast %c1_i32_342 : i32 to vector<8x128xi32>
    %975 = arith.shrsi %973, %974 : vector<8x128xi32>
    %c138479620_i32_343 = arith.constant 138479620 : i32
    %976 = vector.broadcast %c138479620_i32_343 : i32 to vector<8x128xi32>
    %977 = arith.andi %975, %976 : vector<8x128xi32>
    %978 = arith.ori %971, %977 : vector<8x128xi32>
    %c8192_i32_344 = arith.constant 8192 : i32
    %979 = vector.broadcast %c8192_i32_344 : i32 to vector<8x128xi32>
    %980 = arith.andi %937, %979 : vector<8x128xi32>
    %c1_i32_345 = arith.constant 1 : i32
    %981 = vector.broadcast %c1_i32_345 : i32 to vector<8x128xi32>
    %982 = arith.shli %980, %981 : vector<8x128xi32>
    %983 = arith.ori %978, %982 : vector<8x128xi32>
    %c524304_i32_346 = arith.constant 524304 : i32
    %984 = vector.broadcast %c524304_i32_346 : i32 to vector<8x128xi32>
    %985 = arith.andi %937, %984 : vector<8x128xi32>
    %c2_i32_347 = arith.constant 2 : i32
    %986 = vector.broadcast %c2_i32_347 : i32 to vector<8x128xi32>
    %987 = arith.shli %985, %986 : vector<8x128xi32>
    %988 = arith.ori %983, %987 : vector<8x128xi32>
    %c2097152_i32_348 = arith.constant 2097152 : i32
    %989 = vector.broadcast %c2097152_i32_348 : i32 to vector<8x128xi32>
    %990 = arith.andi %937, %989 : vector<8x128xi32>
    %c3_i32_349 = arith.constant 3 : i32
    %991 = vector.broadcast %c3_i32_349 : i32 to vector<8x128xi32>
    %992 = arith.shli %990, %991 : vector<8x128xi32>
    %993 = arith.ori %988, %992 : vector<8x128xi32>
    %c33571329_i32_350 = arith.constant 33571329 : i32
    %994 = vector.broadcast %c33571329_i32_350 : i32 to vector<8x128xi32>
    %995 = arith.andi %937, %994 : vector<8x128xi32>
    %c4_i32_351 = arith.constant 4 : i32
    %996 = vector.broadcast %c4_i32_351 : i32 to vector<8x128xi32>
    %997 = arith.shli %995, %996 : vector<8x128xi32>
    %998 = arith.ori %993, %997 : vector<8x128xi32>
    %c1_i32_352 = arith.constant 1 : i32
    %999 = vector.broadcast %c1_i32_352 : i32 to vector<8x128xi32>
    %1000 = arith.andi %937, %999 : vector<8x128xi32>
    %c5_i32_353 = arith.constant 5 : i32
    %1001 = vector.broadcast %c5_i32_353 : i32 to vector<8x128xi32>
    %1002 = arith.shli %1000, %1001 : vector<8x128xi32>
    %1003 = arith.ori %998, %1002 : vector<8x128xi32>
    %c2_i32_354 = arith.constant 2 : i32
    %1004 = vector.broadcast %c2_i32_354 : i32 to vector<8x128xi32>
    %1005 = arith.andi %937, %1004 : vector<8x128xi32>
    %c24_i32_355 = arith.constant 24 : i32
    %1006 = vector.broadcast %c24_i32_355 : i32 to vector<8x128xi32>
    %1007 = arith.shli %1005, %1006 : vector<8x128xi32>
    %1008 = arith.ori %1003, %1007 : vector<8x128xi32>
    %1009 = arith.ori %46, %1008 : vector<8x128xi32>
    %c67108864_i32_356 = arith.constant 67108864 : i32
    %1010 = vector.broadcast %c67108864_i32_356 : i32 to vector<8x128xi32>
    %1011 = arith.andi %937, %1010 : vector<8x128xi32>
    %c24_i32_357 = arith.constant 24 : i32
    %1012 = vector.broadcast %c24_i32_357 : i32 to vector<8x128xi32>
    %1013 = arith.shrsi %1011, %1012 : vector<8x128xi32>
    %c4_i32_358 = arith.constant 4 : i32
    %1014 = vector.broadcast %c4_i32_358 : i32 to vector<8x128xi32>
    %1015 = arith.andi %1013, %1014 : vector<8x128xi32>
    %c1048576_i32_359 = arith.constant 1048576 : i32
    %1016 = vector.broadcast %c1048576_i32_359 : i32 to vector<8x128xi32>
    %1017 = arith.andi %937, %1016 : vector<8x128xi32>
    %c17_i32_360 = arith.constant 17 : i32
    %1018 = vector.broadcast %c17_i32_360 : i32 to vector<8x128xi32>
    %1019 = arith.shrsi %1017, %1018 : vector<8x128xi32>
    %c8_i32_361 = arith.constant 8 : i32
    %1020 = vector.broadcast %c8_i32_361 : i32 to vector<8x128xi32>
    %1021 = arith.andi %1019, %1020 : vector<8x128xi32>
    %1022 = arith.ori %1015, %1021 : vector<8x128xi32>
    %c1114112_i32_362 = arith.constant 1114112 : i32
    %1023 = vector.broadcast %c1114112_i32_362 : i32 to vector<8x128xi32>
    %1024 = arith.andi %937, %1023 : vector<8x128xi32>
    %c16_i32_363 = arith.constant 16 : i32
    %1025 = vector.broadcast %c16_i32_363 : i32 to vector<8x128xi32>
    %1026 = arith.shrsi %1024, %1025 : vector<8x128xi32>
    %c17_i32_364 = arith.constant 17 : i32
    %1027 = vector.broadcast %c17_i32_364 : i32 to vector<8x128xi32>
    %1028 = arith.andi %1026, %1027 : vector<8x128xi32>
    %1029 = arith.ori %1022, %1028 : vector<8x128xi32>
    %c65536_i32_365 = arith.constant 65536 : i32
    %1030 = vector.broadcast %c65536_i32_365 : i32 to vector<8x128xi32>
    %1031 = arith.andi %937, %1030 : vector<8x128xi32>
    %c15_i32_366 = arith.constant 15 : i32
    %1032 = vector.broadcast %c15_i32_366 : i32 to vector<8x128xi32>
    %1033 = arith.shrsi %1031, %1032 : vector<8x128xi32>
    %c2_i32_367 = arith.constant 2 : i32
    %1034 = vector.broadcast %c2_i32_367 : i32 to vector<8x128xi32>
    %1035 = arith.andi %1033, %1034 : vector<8x128xi32>
    %1036 = arith.ori %1029, %1035 : vector<8x128xi32>
    %c2048_i32_368 = arith.constant 2048 : i32
    %1037 = vector.broadcast %c2048_i32_368 : i32 to vector<8x128xi32>
    %1038 = arith.andi %937, %1037 : vector<8x128xi32>
    %c5_i32_369 = arith.constant 5 : i32
    %1039 = vector.broadcast %c5_i32_369 : i32 to vector<8x128xi32>
    %1040 = arith.shrsi %1038, %1039 : vector<8x128xi32>
    %c64_i32_370 = arith.constant 64 : i32
    %1041 = vector.broadcast %c64_i32_370 : i32 to vector<8x128xi32>
    %1042 = arith.andi %1040, %1041 : vector<8x128xi32>
    %1043 = arith.ori %1036, %1042 : vector<8x128xi32>
    %c134219776_i32_371 = arith.constant 134219776 : i32
    %1044 = vector.broadcast %c134219776_i32_371 : i32 to vector<8x128xi32>
    %1045 = arith.andi %937, %1044 : vector<8x128xi32>
    %c4_i32_372 = arith.constant 4 : i32
    %1046 = vector.broadcast %c4_i32_372 : i32 to vector<8x128xi32>
    %1047 = arith.shrsi %1045, %1046 : vector<8x128xi32>
    %c8388736_i32_373 = arith.constant 8388736 : i32
    %1048 = vector.broadcast %c8388736_i32_373 : i32 to vector<8x128xi32>
    %1049 = arith.andi %1047, %1048 : vector<8x128xi32>
    %1050 = arith.ori %1043, %1049 : vector<8x128xi32>
    %c-2147483648_i32_374 = arith.constant -2147483648 : i32
    %1051 = vector.broadcast %c-2147483648_i32_374 : i32 to vector<8x128xi32>
    %1052 = arith.andi %937, %1051 : vector<8x128xi32>
    %c3_i32_375 = arith.constant 3 : i32
    %1053 = vector.broadcast %c3_i32_375 : i32 to vector<8x128xi32>
    %1054 = arith.shrsi %1052, %1053 : vector<8x128xi32>
    %c268435456_i32_376 = arith.constant 268435456 : i32
    %1055 = vector.broadcast %c268435456_i32_376 : i32 to vector<8x128xi32>
    %1056 = arith.andi %1054, %1055 : vector<8x128xi32>
    %1057 = arith.ori %1050, %1056 : vector<8x128xi32>
    %c4194432_i32_377 = arith.constant 4194432 : i32
    %1058 = vector.broadcast %c4194432_i32_377 : i32 to vector<8x128xi32>
    %1059 = arith.andi %937, %1058 : vector<8x128xi32>
    %c2_i32_378 = arith.constant 2 : i32
    %1060 = vector.broadcast %c2_i32_378 : i32 to vector<8x128xi32>
    %1061 = arith.shrsi %1059, %1060 : vector<8x128xi32>
    %c1048608_i32_379 = arith.constant 1048608 : i32
    %1062 = vector.broadcast %c1048608_i32_379 : i32 to vector<8x128xi32>
    %1063 = arith.andi %1061, %1062 : vector<8x128xi32>
    %1064 = arith.ori %1057, %1063 : vector<8x128xi32>
    %c553648384_i32_380 = arith.constant 553648384 : i32
    %1065 = vector.broadcast %c553648384_i32_380 : i32 to vector<8x128xi32>
    %1066 = arith.andi %937, %1065 : vector<8x128xi32>
    %c1_i32_381 = arith.constant 1 : i32
    %1067 = vector.broadcast %c1_i32_381 : i32 to vector<8x128xi32>
    %1068 = arith.shli %1066, %1067 : vector<8x128xi32>
    %1069 = arith.ori %1064, %1068 : vector<8x128xi32>
    %c16777472_i32_382 = arith.constant 16777472 : i32
    %1070 = vector.broadcast %c16777472_i32_382 : i32 to vector<8x128xi32>
    %1071 = arith.andi %937, %1070 : vector<8x128xi32>
    %c2_i32_383 = arith.constant 2 : i32
    %1072 = vector.broadcast %c2_i32_383 : i32 to vector<8x128xi32>
    %1073 = arith.shli %1071, %1072 : vector<8x128xi32>
    %1074 = arith.ori %1069, %1073 : vector<8x128xi32>
    %c8192_i32_384 = arith.constant 8192 : i32
    %1075 = vector.broadcast %c8192_i32_384 : i32 to vector<8x128xi32>
    %1076 = arith.andi %937, %1075 : vector<8x128xi32>
    %c3_i32_385 = arith.constant 3 : i32
    %1077 = vector.broadcast %c3_i32_385 : i32 to vector<8x128xi32>
    %1078 = arith.shli %1076, %1077 : vector<8x128xi32>
    %1079 = arith.ori %1074, %1078 : vector<8x128xi32>
    %c16_i32_386 = arith.constant 16 : i32
    %1080 = vector.broadcast %c16_i32_386 : i32 to vector<8x128xi32>
    %1081 = arith.andi %937, %1080 : vector<8x128xi32>
    %c4_i32_387 = arith.constant 4 : i32
    %1082 = vector.broadcast %c4_i32_387 : i32 to vector<8x128xi32>
    %1083 = arith.shli %1081, %1082 : vector<8x128xi32>
    %1084 = arith.ori %1079, %1083 : vector<8x128xi32>
    %c4_i32_388 = arith.constant 4 : i32
    %1085 = vector.broadcast %c4_i32_388 : i32 to vector<8x128xi32>
    %1086 = arith.andi %937, %1085 : vector<8x128xi32>
    %c12_i32_389 = arith.constant 12 : i32
    %1087 = vector.broadcast %c12_i32_389 : i32 to vector<8x128xi32>
    %1088 = arith.shli %1086, %1087 : vector<8x128xi32>
    %1089 = arith.ori %1084, %1088 : vector<8x128xi32>
    %c262148_i32_390 = arith.constant 262148 : i32
    %1090 = vector.broadcast %c262148_i32_390 : i32 to vector<8x128xi32>
    %1091 = arith.andi %937, %1090 : vector<8x128xi32>
    %c13_i32_391 = arith.constant 13 : i32
    %1092 = vector.broadcast %c13_i32_391 : i32 to vector<8x128xi32>
    %1093 = arith.shli %1091, %1092 : vector<8x128xi32>
    %1094 = arith.ori %1089, %1093 : vector<8x128xi32>
    %c32_i32_392 = arith.constant 32 : i32
    %1095 = vector.broadcast %c32_i32_392 : i32 to vector<8x128xi32>
    %1096 = arith.andi %937, %1095 : vector<8x128xi32>
    %c14_i32_393 = arith.constant 14 : i32
    %1097 = vector.broadcast %c14_i32_393 : i32 to vector<8x128xi32>
    %1098 = arith.shli %1096, %1097 : vector<8x128xi32>
    %1099 = arith.ori %1094, %1098 : vector<8x128xi32>
    %c2_i32_394 = arith.constant 2 : i32
    %1100 = vector.broadcast %c2_i32_394 : i32 to vector<8x128xi32>
    %1101 = arith.andi %937, %1100 : vector<8x128xi32>
    %c26_i32_395 = arith.constant 26 : i32
    %1102 = vector.broadcast %c26_i32_395 : i32 to vector<8x128xi32>
    %1103 = arith.shli %1101, %1102 : vector<8x128xi32>
    %1104 = arith.ori %1099, %1103 : vector<8x128xi32>
    %1105 = arith.ori %51, %1104 : vector<8x128xi32>
    %1106 = arith.andi %7, %1009 : vector<8x128xi32>
    %1107 = arith.xori %4, %1106 : vector<8x128xi32>
    %1108 = arith.andi %9, %1009 : vector<8x128xi32>
    %1109 = arith.xori %5, %1108 : vector<8x128xi32>
    %1110 = arith.xori %1107, %1109 : vector<8x128xi32>
    %1111 = arith.andi %1110, %1105 : vector<8x128xi32>
    %1112 = arith.xori %1107, %1111 : vector<8x128xi32>
    %c6_i32 = arith.constant 6 : i32
    %c67108864_i32_396 = arith.constant 67108864 : i32
    %1113 = vector.broadcast %c67108864_i32_396 : i32 to vector<8x128xi32>
    %1114 = arith.andi %1112, %1113 : vector<8x128xi32>
    %c26_i32_397 = arith.constant 26 : i32
    %1115 = vector.broadcast %c26_i32_397 : i32 to vector<8x128xi32>
    %1116 = arith.shrsi %1114, %1115 : vector<8x128xi32>
    %c1_i32_398 = arith.constant 1 : i32
    %1117 = vector.broadcast %c1_i32_398 : i32 to vector<8x128xi32>
    %1118 = arith.andi %1116, %1117 : vector<8x128xi32>
    %c1073741824_i32_399 = arith.constant 1073741824 : i32
    %1119 = vector.broadcast %c1073741824_i32_399 : i32 to vector<8x128xi32>
    %1120 = arith.andi %1112, %1119 : vector<8x128xi32>
    %c13_i32_400 = arith.constant 13 : i32
    %1121 = vector.broadcast %c13_i32_400 : i32 to vector<8x128xi32>
    %1122 = arith.shrsi %1120, %1121 : vector<8x128xi32>
    %c131072_i32_401 = arith.constant 131072 : i32
    %1123 = vector.broadcast %c131072_i32_401 : i32 to vector<8x128xi32>
    %1124 = arith.andi %1122, %1123 : vector<8x128xi32>
    %1125 = arith.ori %1118, %1124 : vector<8x128xi32>
    %c128_i32_402 = arith.constant 128 : i32
    %1126 = vector.broadcast %c128_i32_402 : i32 to vector<8x128xi32>
    %1127 = arith.andi %1112, %1126 : vector<8x128xi32>
    %c4_i32_403 = arith.constant 4 : i32
    %1128 = vector.broadcast %c4_i32_403 : i32 to vector<8x128xi32>
    %1129 = arith.shrsi %1127, %1128 : vector<8x128xi32>
    %c8_i32_404 = arith.constant 8 : i32
    %1130 = vector.broadcast %c8_i32_404 : i32 to vector<8x128xi32>
    %1131 = arith.andi %1129, %1130 : vector<8x128xi32>
    %1132 = arith.ori %1125, %1131 : vector<8x128xi32>
    %c32768_i32_405 = arith.constant 32768 : i32
    %1133 = vector.broadcast %c32768_i32_405 : i32 to vector<8x128xi32>
    %1134 = arith.andi %1112, %1133 : vector<8x128xi32>
    %c3_i32_406 = arith.constant 3 : i32
    %1135 = vector.broadcast %c3_i32_406 : i32 to vector<8x128xi32>
    %1136 = arith.shrsi %1134, %1135 : vector<8x128xi32>
    %c4096_i32_407 = arith.constant 4096 : i32
    %1137 = vector.broadcast %c4096_i32_407 : i32 to vector<8x128xi32>
    %1138 = arith.andi %1136, %1137 : vector<8x128xi32>
    %1139 = arith.ori %1132, %1138 : vector<8x128xi32>
    %c268570632_i32_408 = arith.constant 268570632 : i32
    %1140 = vector.broadcast %c268570632_i32_408 : i32 to vector<8x128xi32>
    %1141 = arith.andi %1112, %1140 : vector<8x128xi32>
    %c2_i32_409 = arith.constant 2 : i32
    %1142 = vector.broadcast %c2_i32_409 : i32 to vector<8x128xi32>
    %1143 = arith.shrsi %1141, %1142 : vector<8x128xi32>
    %c67142658_i32_410 = arith.constant 67142658 : i32
    %1144 = vector.broadcast %c67142658_i32_410 : i32 to vector<8x128xi32>
    %1145 = arith.andi %1143, %1144 : vector<8x128xi32>
    %1146 = arith.ori %1139, %1145 : vector<8x128xi32>
    %c276959240_i32_411 = arith.constant 276959240 : i32
    %1147 = vector.broadcast %c276959240_i32_411 : i32 to vector<8x128xi32>
    %1148 = arith.andi %1112, %1147 : vector<8x128xi32>
    %c1_i32_412 = arith.constant 1 : i32
    %1149 = vector.broadcast %c1_i32_412 : i32 to vector<8x128xi32>
    %1150 = arith.shrsi %1148, %1149 : vector<8x128xi32>
    %c138479620_i32_413 = arith.constant 138479620 : i32
    %1151 = vector.broadcast %c138479620_i32_413 : i32 to vector<8x128xi32>
    %1152 = arith.andi %1150, %1151 : vector<8x128xi32>
    %1153 = arith.ori %1146, %1152 : vector<8x128xi32>
    %c8192_i32_414 = arith.constant 8192 : i32
    %1154 = vector.broadcast %c8192_i32_414 : i32 to vector<8x128xi32>
    %1155 = arith.andi %1112, %1154 : vector<8x128xi32>
    %c1_i32_415 = arith.constant 1 : i32
    %1156 = vector.broadcast %c1_i32_415 : i32 to vector<8x128xi32>
    %1157 = arith.shli %1155, %1156 : vector<8x128xi32>
    %1158 = arith.ori %1153, %1157 : vector<8x128xi32>
    %c524304_i32_416 = arith.constant 524304 : i32
    %1159 = vector.broadcast %c524304_i32_416 : i32 to vector<8x128xi32>
    %1160 = arith.andi %1112, %1159 : vector<8x128xi32>
    %c2_i32_417 = arith.constant 2 : i32
    %1161 = vector.broadcast %c2_i32_417 : i32 to vector<8x128xi32>
    %1162 = arith.shli %1160, %1161 : vector<8x128xi32>
    %1163 = arith.ori %1158, %1162 : vector<8x128xi32>
    %c2097152_i32_418 = arith.constant 2097152 : i32
    %1164 = vector.broadcast %c2097152_i32_418 : i32 to vector<8x128xi32>
    %1165 = arith.andi %1112, %1164 : vector<8x128xi32>
    %c3_i32_419 = arith.constant 3 : i32
    %1166 = vector.broadcast %c3_i32_419 : i32 to vector<8x128xi32>
    %1167 = arith.shli %1165, %1166 : vector<8x128xi32>
    %1168 = arith.ori %1163, %1167 : vector<8x128xi32>
    %c33571329_i32_420 = arith.constant 33571329 : i32
    %1169 = vector.broadcast %c33571329_i32_420 : i32 to vector<8x128xi32>
    %1170 = arith.andi %1112, %1169 : vector<8x128xi32>
    %c4_i32_421 = arith.constant 4 : i32
    %1171 = vector.broadcast %c4_i32_421 : i32 to vector<8x128xi32>
    %1172 = arith.shli %1170, %1171 : vector<8x128xi32>
    %1173 = arith.ori %1168, %1172 : vector<8x128xi32>
    %c1_i32_422 = arith.constant 1 : i32
    %1174 = vector.broadcast %c1_i32_422 : i32 to vector<8x128xi32>
    %1175 = arith.andi %1112, %1174 : vector<8x128xi32>
    %c5_i32_423 = arith.constant 5 : i32
    %1176 = vector.broadcast %c5_i32_423 : i32 to vector<8x128xi32>
    %1177 = arith.shli %1175, %1176 : vector<8x128xi32>
    %1178 = arith.ori %1173, %1177 : vector<8x128xi32>
    %c2_i32_424 = arith.constant 2 : i32
    %1179 = vector.broadcast %c2_i32_424 : i32 to vector<8x128xi32>
    %1180 = arith.andi %1112, %1179 : vector<8x128xi32>
    %c24_i32_425 = arith.constant 24 : i32
    %1181 = vector.broadcast %c24_i32_425 : i32 to vector<8x128xi32>
    %1182 = arith.shli %1180, %1181 : vector<8x128xi32>
    %1183 = arith.ori %1178, %1182 : vector<8x128xi32>
    %1184 = arith.ori %46, %1183 : vector<8x128xi32>
    %c67108864_i32_426 = arith.constant 67108864 : i32
    %1185 = vector.broadcast %c67108864_i32_426 : i32 to vector<8x128xi32>
    %1186 = arith.andi %1112, %1185 : vector<8x128xi32>
    %c24_i32_427 = arith.constant 24 : i32
    %1187 = vector.broadcast %c24_i32_427 : i32 to vector<8x128xi32>
    %1188 = arith.shrsi %1186, %1187 : vector<8x128xi32>
    %c4_i32_428 = arith.constant 4 : i32
    %1189 = vector.broadcast %c4_i32_428 : i32 to vector<8x128xi32>
    %1190 = arith.andi %1188, %1189 : vector<8x128xi32>
    %c1048576_i32_429 = arith.constant 1048576 : i32
    %1191 = vector.broadcast %c1048576_i32_429 : i32 to vector<8x128xi32>
    %1192 = arith.andi %1112, %1191 : vector<8x128xi32>
    %c17_i32_430 = arith.constant 17 : i32
    %1193 = vector.broadcast %c17_i32_430 : i32 to vector<8x128xi32>
    %1194 = arith.shrsi %1192, %1193 : vector<8x128xi32>
    %c8_i32_431 = arith.constant 8 : i32
    %1195 = vector.broadcast %c8_i32_431 : i32 to vector<8x128xi32>
    %1196 = arith.andi %1194, %1195 : vector<8x128xi32>
    %1197 = arith.ori %1190, %1196 : vector<8x128xi32>
    %c1114112_i32_432 = arith.constant 1114112 : i32
    %1198 = vector.broadcast %c1114112_i32_432 : i32 to vector<8x128xi32>
    %1199 = arith.andi %1112, %1198 : vector<8x128xi32>
    %c16_i32_433 = arith.constant 16 : i32
    %1200 = vector.broadcast %c16_i32_433 : i32 to vector<8x128xi32>
    %1201 = arith.shrsi %1199, %1200 : vector<8x128xi32>
    %c17_i32_434 = arith.constant 17 : i32
    %1202 = vector.broadcast %c17_i32_434 : i32 to vector<8x128xi32>
    %1203 = arith.andi %1201, %1202 : vector<8x128xi32>
    %1204 = arith.ori %1197, %1203 : vector<8x128xi32>
    %c65536_i32_435 = arith.constant 65536 : i32
    %1205 = vector.broadcast %c65536_i32_435 : i32 to vector<8x128xi32>
    %1206 = arith.andi %1112, %1205 : vector<8x128xi32>
    %c15_i32_436 = arith.constant 15 : i32
    %1207 = vector.broadcast %c15_i32_436 : i32 to vector<8x128xi32>
    %1208 = arith.shrsi %1206, %1207 : vector<8x128xi32>
    %c2_i32_437 = arith.constant 2 : i32
    %1209 = vector.broadcast %c2_i32_437 : i32 to vector<8x128xi32>
    %1210 = arith.andi %1208, %1209 : vector<8x128xi32>
    %1211 = arith.ori %1204, %1210 : vector<8x128xi32>
    %c2048_i32_438 = arith.constant 2048 : i32
    %1212 = vector.broadcast %c2048_i32_438 : i32 to vector<8x128xi32>
    %1213 = arith.andi %1112, %1212 : vector<8x128xi32>
    %c5_i32_439 = arith.constant 5 : i32
    %1214 = vector.broadcast %c5_i32_439 : i32 to vector<8x128xi32>
    %1215 = arith.shrsi %1213, %1214 : vector<8x128xi32>
    %c64_i32_440 = arith.constant 64 : i32
    %1216 = vector.broadcast %c64_i32_440 : i32 to vector<8x128xi32>
    %1217 = arith.andi %1215, %1216 : vector<8x128xi32>
    %1218 = arith.ori %1211, %1217 : vector<8x128xi32>
    %c134219776_i32_441 = arith.constant 134219776 : i32
    %1219 = vector.broadcast %c134219776_i32_441 : i32 to vector<8x128xi32>
    %1220 = arith.andi %1112, %1219 : vector<8x128xi32>
    %c4_i32_442 = arith.constant 4 : i32
    %1221 = vector.broadcast %c4_i32_442 : i32 to vector<8x128xi32>
    %1222 = arith.shrsi %1220, %1221 : vector<8x128xi32>
    %c8388736_i32_443 = arith.constant 8388736 : i32
    %1223 = vector.broadcast %c8388736_i32_443 : i32 to vector<8x128xi32>
    %1224 = arith.andi %1222, %1223 : vector<8x128xi32>
    %1225 = arith.ori %1218, %1224 : vector<8x128xi32>
    %c-2147483648_i32_444 = arith.constant -2147483648 : i32
    %1226 = vector.broadcast %c-2147483648_i32_444 : i32 to vector<8x128xi32>
    %1227 = arith.andi %1112, %1226 : vector<8x128xi32>
    %c3_i32_445 = arith.constant 3 : i32
    %1228 = vector.broadcast %c3_i32_445 : i32 to vector<8x128xi32>
    %1229 = arith.shrsi %1227, %1228 : vector<8x128xi32>
    %c268435456_i32_446 = arith.constant 268435456 : i32
    %1230 = vector.broadcast %c268435456_i32_446 : i32 to vector<8x128xi32>
    %1231 = arith.andi %1229, %1230 : vector<8x128xi32>
    %1232 = arith.ori %1225, %1231 : vector<8x128xi32>
    %c4194432_i32_447 = arith.constant 4194432 : i32
    %1233 = vector.broadcast %c4194432_i32_447 : i32 to vector<8x128xi32>
    %1234 = arith.andi %1112, %1233 : vector<8x128xi32>
    %c2_i32_448 = arith.constant 2 : i32
    %1235 = vector.broadcast %c2_i32_448 : i32 to vector<8x128xi32>
    %1236 = arith.shrsi %1234, %1235 : vector<8x128xi32>
    %c1048608_i32_449 = arith.constant 1048608 : i32
    %1237 = vector.broadcast %c1048608_i32_449 : i32 to vector<8x128xi32>
    %1238 = arith.andi %1236, %1237 : vector<8x128xi32>
    %1239 = arith.ori %1232, %1238 : vector<8x128xi32>
    %c553648384_i32_450 = arith.constant 553648384 : i32
    %1240 = vector.broadcast %c553648384_i32_450 : i32 to vector<8x128xi32>
    %1241 = arith.andi %1112, %1240 : vector<8x128xi32>
    %c1_i32_451 = arith.constant 1 : i32
    %1242 = vector.broadcast %c1_i32_451 : i32 to vector<8x128xi32>
    %1243 = arith.shli %1241, %1242 : vector<8x128xi32>
    %1244 = arith.ori %1239, %1243 : vector<8x128xi32>
    %c16777472_i32_452 = arith.constant 16777472 : i32
    %1245 = vector.broadcast %c16777472_i32_452 : i32 to vector<8x128xi32>
    %1246 = arith.andi %1112, %1245 : vector<8x128xi32>
    %c2_i32_453 = arith.constant 2 : i32
    %1247 = vector.broadcast %c2_i32_453 : i32 to vector<8x128xi32>
    %1248 = arith.shli %1246, %1247 : vector<8x128xi32>
    %1249 = arith.ori %1244, %1248 : vector<8x128xi32>
    %c8192_i32_454 = arith.constant 8192 : i32
    %1250 = vector.broadcast %c8192_i32_454 : i32 to vector<8x128xi32>
    %1251 = arith.andi %1112, %1250 : vector<8x128xi32>
    %c3_i32_455 = arith.constant 3 : i32
    %1252 = vector.broadcast %c3_i32_455 : i32 to vector<8x128xi32>
    %1253 = arith.shli %1251, %1252 : vector<8x128xi32>
    %1254 = arith.ori %1249, %1253 : vector<8x128xi32>
    %c16_i32_456 = arith.constant 16 : i32
    %1255 = vector.broadcast %c16_i32_456 : i32 to vector<8x128xi32>
    %1256 = arith.andi %1112, %1255 : vector<8x128xi32>
    %c4_i32_457 = arith.constant 4 : i32
    %1257 = vector.broadcast %c4_i32_457 : i32 to vector<8x128xi32>
    %1258 = arith.shli %1256, %1257 : vector<8x128xi32>
    %1259 = arith.ori %1254, %1258 : vector<8x128xi32>
    %c4_i32_458 = arith.constant 4 : i32
    %1260 = vector.broadcast %c4_i32_458 : i32 to vector<8x128xi32>
    %1261 = arith.andi %1112, %1260 : vector<8x128xi32>
    %c12_i32_459 = arith.constant 12 : i32
    %1262 = vector.broadcast %c12_i32_459 : i32 to vector<8x128xi32>
    %1263 = arith.shli %1261, %1262 : vector<8x128xi32>
    %1264 = arith.ori %1259, %1263 : vector<8x128xi32>
    %c262148_i32_460 = arith.constant 262148 : i32
    %1265 = vector.broadcast %c262148_i32_460 : i32 to vector<8x128xi32>
    %1266 = arith.andi %1112, %1265 : vector<8x128xi32>
    %c13_i32_461 = arith.constant 13 : i32
    %1267 = vector.broadcast %c13_i32_461 : i32 to vector<8x128xi32>
    %1268 = arith.shli %1266, %1267 : vector<8x128xi32>
    %1269 = arith.ori %1264, %1268 : vector<8x128xi32>
    %c32_i32_462 = arith.constant 32 : i32
    %1270 = vector.broadcast %c32_i32_462 : i32 to vector<8x128xi32>
    %1271 = arith.andi %1112, %1270 : vector<8x128xi32>
    %c14_i32_463 = arith.constant 14 : i32
    %1272 = vector.broadcast %c14_i32_463 : i32 to vector<8x128xi32>
    %1273 = arith.shli %1271, %1272 : vector<8x128xi32>
    %1274 = arith.ori %1269, %1273 : vector<8x128xi32>
    %c2_i32_464 = arith.constant 2 : i32
    %1275 = vector.broadcast %c2_i32_464 : i32 to vector<8x128xi32>
    %1276 = arith.andi %1112, %1275 : vector<8x128xi32>
    %c26_i32_465 = arith.constant 26 : i32
    %1277 = vector.broadcast %c26_i32_465 : i32 to vector<8x128xi32>
    %1278 = arith.shli %1276, %1277 : vector<8x128xi32>
    %1279 = arith.ori %1274, %1278 : vector<8x128xi32>
    %1280 = arith.ori %51, %1279 : vector<8x128xi32>
    %1281 = arith.andi %7, %1184 : vector<8x128xi32>
    %1282 = arith.xori %4, %1281 : vector<8x128xi32>
    %1283 = arith.andi %9, %1184 : vector<8x128xi32>
    %1284 = arith.xori %5, %1283 : vector<8x128xi32>
    %1285 = arith.xori %1282, %1284 : vector<8x128xi32>
    %1286 = arith.andi %1285, %1280 : vector<8x128xi32>
    %1287 = arith.xori %1282, %1286 : vector<8x128xi32>
    %c7_i32 = arith.constant 7 : i32
    %c67108864_i32_466 = arith.constant 67108864 : i32
    %1288 = vector.broadcast %c67108864_i32_466 : i32 to vector<8x128xi32>
    %1289 = arith.andi %1287, %1288 : vector<8x128xi32>
    %c26_i32_467 = arith.constant 26 : i32
    %1290 = vector.broadcast %c26_i32_467 : i32 to vector<8x128xi32>
    %1291 = arith.shrsi %1289, %1290 : vector<8x128xi32>
    %c1_i32_468 = arith.constant 1 : i32
    %1292 = vector.broadcast %c1_i32_468 : i32 to vector<8x128xi32>
    %1293 = arith.andi %1291, %1292 : vector<8x128xi32>
    %c1073741824_i32_469 = arith.constant 1073741824 : i32
    %1294 = vector.broadcast %c1073741824_i32_469 : i32 to vector<8x128xi32>
    %1295 = arith.andi %1287, %1294 : vector<8x128xi32>
    %c13_i32_470 = arith.constant 13 : i32
    %1296 = vector.broadcast %c13_i32_470 : i32 to vector<8x128xi32>
    %1297 = arith.shrsi %1295, %1296 : vector<8x128xi32>
    %c131072_i32_471 = arith.constant 131072 : i32
    %1298 = vector.broadcast %c131072_i32_471 : i32 to vector<8x128xi32>
    %1299 = arith.andi %1297, %1298 : vector<8x128xi32>
    %1300 = arith.ori %1293, %1299 : vector<8x128xi32>
    %c128_i32_472 = arith.constant 128 : i32
    %1301 = vector.broadcast %c128_i32_472 : i32 to vector<8x128xi32>
    %1302 = arith.andi %1287, %1301 : vector<8x128xi32>
    %c4_i32_473 = arith.constant 4 : i32
    %1303 = vector.broadcast %c4_i32_473 : i32 to vector<8x128xi32>
    %1304 = arith.shrsi %1302, %1303 : vector<8x128xi32>
    %c8_i32_474 = arith.constant 8 : i32
    %1305 = vector.broadcast %c8_i32_474 : i32 to vector<8x128xi32>
    %1306 = arith.andi %1304, %1305 : vector<8x128xi32>
    %1307 = arith.ori %1300, %1306 : vector<8x128xi32>
    %c32768_i32_475 = arith.constant 32768 : i32
    %1308 = vector.broadcast %c32768_i32_475 : i32 to vector<8x128xi32>
    %1309 = arith.andi %1287, %1308 : vector<8x128xi32>
    %c3_i32_476 = arith.constant 3 : i32
    %1310 = vector.broadcast %c3_i32_476 : i32 to vector<8x128xi32>
    %1311 = arith.shrsi %1309, %1310 : vector<8x128xi32>
    %c4096_i32_477 = arith.constant 4096 : i32
    %1312 = vector.broadcast %c4096_i32_477 : i32 to vector<8x128xi32>
    %1313 = arith.andi %1311, %1312 : vector<8x128xi32>
    %1314 = arith.ori %1307, %1313 : vector<8x128xi32>
    %c268570632_i32_478 = arith.constant 268570632 : i32
    %1315 = vector.broadcast %c268570632_i32_478 : i32 to vector<8x128xi32>
    %1316 = arith.andi %1287, %1315 : vector<8x128xi32>
    %c2_i32_479 = arith.constant 2 : i32
    %1317 = vector.broadcast %c2_i32_479 : i32 to vector<8x128xi32>
    %1318 = arith.shrsi %1316, %1317 : vector<8x128xi32>
    %c67142658_i32_480 = arith.constant 67142658 : i32
    %1319 = vector.broadcast %c67142658_i32_480 : i32 to vector<8x128xi32>
    %1320 = arith.andi %1318, %1319 : vector<8x128xi32>
    %1321 = arith.ori %1314, %1320 : vector<8x128xi32>
    %c276959240_i32_481 = arith.constant 276959240 : i32
    %1322 = vector.broadcast %c276959240_i32_481 : i32 to vector<8x128xi32>
    %1323 = arith.andi %1287, %1322 : vector<8x128xi32>
    %c1_i32_482 = arith.constant 1 : i32
    %1324 = vector.broadcast %c1_i32_482 : i32 to vector<8x128xi32>
    %1325 = arith.shrsi %1323, %1324 : vector<8x128xi32>
    %c138479620_i32_483 = arith.constant 138479620 : i32
    %1326 = vector.broadcast %c138479620_i32_483 : i32 to vector<8x128xi32>
    %1327 = arith.andi %1325, %1326 : vector<8x128xi32>
    %1328 = arith.ori %1321, %1327 : vector<8x128xi32>
    %c8192_i32_484 = arith.constant 8192 : i32
    %1329 = vector.broadcast %c8192_i32_484 : i32 to vector<8x128xi32>
    %1330 = arith.andi %1287, %1329 : vector<8x128xi32>
    %c1_i32_485 = arith.constant 1 : i32
    %1331 = vector.broadcast %c1_i32_485 : i32 to vector<8x128xi32>
    %1332 = arith.shli %1330, %1331 : vector<8x128xi32>
    %1333 = arith.ori %1328, %1332 : vector<8x128xi32>
    %c524304_i32_486 = arith.constant 524304 : i32
    %1334 = vector.broadcast %c524304_i32_486 : i32 to vector<8x128xi32>
    %1335 = arith.andi %1287, %1334 : vector<8x128xi32>
    %c2_i32_487 = arith.constant 2 : i32
    %1336 = vector.broadcast %c2_i32_487 : i32 to vector<8x128xi32>
    %1337 = arith.shli %1335, %1336 : vector<8x128xi32>
    %1338 = arith.ori %1333, %1337 : vector<8x128xi32>
    %c2097152_i32_488 = arith.constant 2097152 : i32
    %1339 = vector.broadcast %c2097152_i32_488 : i32 to vector<8x128xi32>
    %1340 = arith.andi %1287, %1339 : vector<8x128xi32>
    %c3_i32_489 = arith.constant 3 : i32
    %1341 = vector.broadcast %c3_i32_489 : i32 to vector<8x128xi32>
    %1342 = arith.shli %1340, %1341 : vector<8x128xi32>
    %1343 = arith.ori %1338, %1342 : vector<8x128xi32>
    %c33571329_i32_490 = arith.constant 33571329 : i32
    %1344 = vector.broadcast %c33571329_i32_490 : i32 to vector<8x128xi32>
    %1345 = arith.andi %1287, %1344 : vector<8x128xi32>
    %c4_i32_491 = arith.constant 4 : i32
    %1346 = vector.broadcast %c4_i32_491 : i32 to vector<8x128xi32>
    %1347 = arith.shli %1345, %1346 : vector<8x128xi32>
    %1348 = arith.ori %1343, %1347 : vector<8x128xi32>
    %c1_i32_492 = arith.constant 1 : i32
    %1349 = vector.broadcast %c1_i32_492 : i32 to vector<8x128xi32>
    %1350 = arith.andi %1287, %1349 : vector<8x128xi32>
    %c5_i32_493 = arith.constant 5 : i32
    %1351 = vector.broadcast %c5_i32_493 : i32 to vector<8x128xi32>
    %1352 = arith.shli %1350, %1351 : vector<8x128xi32>
    %1353 = arith.ori %1348, %1352 : vector<8x128xi32>
    %c2_i32_494 = arith.constant 2 : i32
    %1354 = vector.broadcast %c2_i32_494 : i32 to vector<8x128xi32>
    %1355 = arith.andi %1287, %1354 : vector<8x128xi32>
    %c24_i32_495 = arith.constant 24 : i32
    %1356 = vector.broadcast %c24_i32_495 : i32 to vector<8x128xi32>
    %1357 = arith.shli %1355, %1356 : vector<8x128xi32>
    %1358 = arith.ori %1353, %1357 : vector<8x128xi32>
    %1359 = arith.ori %46, %1358 : vector<8x128xi32>
    %c67108864_i32_496 = arith.constant 67108864 : i32
    %1360 = vector.broadcast %c67108864_i32_496 : i32 to vector<8x128xi32>
    %1361 = arith.andi %1287, %1360 : vector<8x128xi32>
    %c24_i32_497 = arith.constant 24 : i32
    %1362 = vector.broadcast %c24_i32_497 : i32 to vector<8x128xi32>
    %1363 = arith.shrsi %1361, %1362 : vector<8x128xi32>
    %c4_i32_498 = arith.constant 4 : i32
    %1364 = vector.broadcast %c4_i32_498 : i32 to vector<8x128xi32>
    %1365 = arith.andi %1363, %1364 : vector<8x128xi32>
    %c1048576_i32_499 = arith.constant 1048576 : i32
    %1366 = vector.broadcast %c1048576_i32_499 : i32 to vector<8x128xi32>
    %1367 = arith.andi %1287, %1366 : vector<8x128xi32>
    %c17_i32_500 = arith.constant 17 : i32
    %1368 = vector.broadcast %c17_i32_500 : i32 to vector<8x128xi32>
    %1369 = arith.shrsi %1367, %1368 : vector<8x128xi32>
    %c8_i32_501 = arith.constant 8 : i32
    %1370 = vector.broadcast %c8_i32_501 : i32 to vector<8x128xi32>
    %1371 = arith.andi %1369, %1370 : vector<8x128xi32>
    %1372 = arith.ori %1365, %1371 : vector<8x128xi32>
    %c1114112_i32_502 = arith.constant 1114112 : i32
    %1373 = vector.broadcast %c1114112_i32_502 : i32 to vector<8x128xi32>
    %1374 = arith.andi %1287, %1373 : vector<8x128xi32>
    %c16_i32_503 = arith.constant 16 : i32
    %1375 = vector.broadcast %c16_i32_503 : i32 to vector<8x128xi32>
    %1376 = arith.shrsi %1374, %1375 : vector<8x128xi32>
    %c17_i32_504 = arith.constant 17 : i32
    %1377 = vector.broadcast %c17_i32_504 : i32 to vector<8x128xi32>
    %1378 = arith.andi %1376, %1377 : vector<8x128xi32>
    %1379 = arith.ori %1372, %1378 : vector<8x128xi32>
    %c65536_i32_505 = arith.constant 65536 : i32
    %1380 = vector.broadcast %c65536_i32_505 : i32 to vector<8x128xi32>
    %1381 = arith.andi %1287, %1380 : vector<8x128xi32>
    %c15_i32_506 = arith.constant 15 : i32
    %1382 = vector.broadcast %c15_i32_506 : i32 to vector<8x128xi32>
    %1383 = arith.shrsi %1381, %1382 : vector<8x128xi32>
    %c2_i32_507 = arith.constant 2 : i32
    %1384 = vector.broadcast %c2_i32_507 : i32 to vector<8x128xi32>
    %1385 = arith.andi %1383, %1384 : vector<8x128xi32>
    %1386 = arith.ori %1379, %1385 : vector<8x128xi32>
    %c2048_i32_508 = arith.constant 2048 : i32
    %1387 = vector.broadcast %c2048_i32_508 : i32 to vector<8x128xi32>
    %1388 = arith.andi %1287, %1387 : vector<8x128xi32>
    %c5_i32_509 = arith.constant 5 : i32
    %1389 = vector.broadcast %c5_i32_509 : i32 to vector<8x128xi32>
    %1390 = arith.shrsi %1388, %1389 : vector<8x128xi32>
    %c64_i32_510 = arith.constant 64 : i32
    %1391 = vector.broadcast %c64_i32_510 : i32 to vector<8x128xi32>
    %1392 = arith.andi %1390, %1391 : vector<8x128xi32>
    %1393 = arith.ori %1386, %1392 : vector<8x128xi32>
    %c134219776_i32_511 = arith.constant 134219776 : i32
    %1394 = vector.broadcast %c134219776_i32_511 : i32 to vector<8x128xi32>
    %1395 = arith.andi %1287, %1394 : vector<8x128xi32>
    %c4_i32_512 = arith.constant 4 : i32
    %1396 = vector.broadcast %c4_i32_512 : i32 to vector<8x128xi32>
    %1397 = arith.shrsi %1395, %1396 : vector<8x128xi32>
    %c8388736_i32_513 = arith.constant 8388736 : i32
    %1398 = vector.broadcast %c8388736_i32_513 : i32 to vector<8x128xi32>
    %1399 = arith.andi %1397, %1398 : vector<8x128xi32>
    %1400 = arith.ori %1393, %1399 : vector<8x128xi32>
    %c-2147483648_i32_514 = arith.constant -2147483648 : i32
    %1401 = vector.broadcast %c-2147483648_i32_514 : i32 to vector<8x128xi32>
    %1402 = arith.andi %1287, %1401 : vector<8x128xi32>
    %c3_i32_515 = arith.constant 3 : i32
    %1403 = vector.broadcast %c3_i32_515 : i32 to vector<8x128xi32>
    %1404 = arith.shrsi %1402, %1403 : vector<8x128xi32>
    %c268435456_i32_516 = arith.constant 268435456 : i32
    %1405 = vector.broadcast %c268435456_i32_516 : i32 to vector<8x128xi32>
    %1406 = arith.andi %1404, %1405 : vector<8x128xi32>
    %1407 = arith.ori %1400, %1406 : vector<8x128xi32>
    %c4194432_i32_517 = arith.constant 4194432 : i32
    %1408 = vector.broadcast %c4194432_i32_517 : i32 to vector<8x128xi32>
    %1409 = arith.andi %1287, %1408 : vector<8x128xi32>
    %c2_i32_518 = arith.constant 2 : i32
    %1410 = vector.broadcast %c2_i32_518 : i32 to vector<8x128xi32>
    %1411 = arith.shrsi %1409, %1410 : vector<8x128xi32>
    %c1048608_i32_519 = arith.constant 1048608 : i32
    %1412 = vector.broadcast %c1048608_i32_519 : i32 to vector<8x128xi32>
    %1413 = arith.andi %1411, %1412 : vector<8x128xi32>
    %1414 = arith.ori %1407, %1413 : vector<8x128xi32>
    %c553648384_i32_520 = arith.constant 553648384 : i32
    %1415 = vector.broadcast %c553648384_i32_520 : i32 to vector<8x128xi32>
    %1416 = arith.andi %1287, %1415 : vector<8x128xi32>
    %c1_i32_521 = arith.constant 1 : i32
    %1417 = vector.broadcast %c1_i32_521 : i32 to vector<8x128xi32>
    %1418 = arith.shli %1416, %1417 : vector<8x128xi32>
    %1419 = arith.ori %1414, %1418 : vector<8x128xi32>
    %c16777472_i32_522 = arith.constant 16777472 : i32
    %1420 = vector.broadcast %c16777472_i32_522 : i32 to vector<8x128xi32>
    %1421 = arith.andi %1287, %1420 : vector<8x128xi32>
    %c2_i32_523 = arith.constant 2 : i32
    %1422 = vector.broadcast %c2_i32_523 : i32 to vector<8x128xi32>
    %1423 = arith.shli %1421, %1422 : vector<8x128xi32>
    %1424 = arith.ori %1419, %1423 : vector<8x128xi32>
    %c8192_i32_524 = arith.constant 8192 : i32
    %1425 = vector.broadcast %c8192_i32_524 : i32 to vector<8x128xi32>
    %1426 = arith.andi %1287, %1425 : vector<8x128xi32>
    %c3_i32_525 = arith.constant 3 : i32
    %1427 = vector.broadcast %c3_i32_525 : i32 to vector<8x128xi32>
    %1428 = arith.shli %1426, %1427 : vector<8x128xi32>
    %1429 = arith.ori %1424, %1428 : vector<8x128xi32>
    %c16_i32_526 = arith.constant 16 : i32
    %1430 = vector.broadcast %c16_i32_526 : i32 to vector<8x128xi32>
    %1431 = arith.andi %1287, %1430 : vector<8x128xi32>
    %c4_i32_527 = arith.constant 4 : i32
    %1432 = vector.broadcast %c4_i32_527 : i32 to vector<8x128xi32>
    %1433 = arith.shli %1431, %1432 : vector<8x128xi32>
    %1434 = arith.ori %1429, %1433 : vector<8x128xi32>
    %c4_i32_528 = arith.constant 4 : i32
    %1435 = vector.broadcast %c4_i32_528 : i32 to vector<8x128xi32>
    %1436 = arith.andi %1287, %1435 : vector<8x128xi32>
    %c12_i32_529 = arith.constant 12 : i32
    %1437 = vector.broadcast %c12_i32_529 : i32 to vector<8x128xi32>
    %1438 = arith.shli %1436, %1437 : vector<8x128xi32>
    %1439 = arith.ori %1434, %1438 : vector<8x128xi32>
    %c262148_i32_530 = arith.constant 262148 : i32
    %1440 = vector.broadcast %c262148_i32_530 : i32 to vector<8x128xi32>
    %1441 = arith.andi %1287, %1440 : vector<8x128xi32>
    %c13_i32_531 = arith.constant 13 : i32
    %1442 = vector.broadcast %c13_i32_531 : i32 to vector<8x128xi32>
    %1443 = arith.shli %1441, %1442 : vector<8x128xi32>
    %1444 = arith.ori %1439, %1443 : vector<8x128xi32>
    %c32_i32_532 = arith.constant 32 : i32
    %1445 = vector.broadcast %c32_i32_532 : i32 to vector<8x128xi32>
    %1446 = arith.andi %1287, %1445 : vector<8x128xi32>
    %c14_i32_533 = arith.constant 14 : i32
    %1447 = vector.broadcast %c14_i32_533 : i32 to vector<8x128xi32>
    %1448 = arith.shli %1446, %1447 : vector<8x128xi32>
    %1449 = arith.ori %1444, %1448 : vector<8x128xi32>
    %c2_i32_534 = arith.constant 2 : i32
    %1450 = vector.broadcast %c2_i32_534 : i32 to vector<8x128xi32>
    %1451 = arith.andi %1287, %1450 : vector<8x128xi32>
    %c26_i32_535 = arith.constant 26 : i32
    %1452 = vector.broadcast %c26_i32_535 : i32 to vector<8x128xi32>
    %1453 = arith.shli %1451, %1452 : vector<8x128xi32>
    %1454 = arith.ori %1449, %1453 : vector<8x128xi32>
    %1455 = arith.ori %51, %1454 : vector<8x128xi32>
    %1456 = arith.andi %7, %1359 : vector<8x128xi32>
    %1457 = arith.xori %4, %1456 : vector<8x128xi32>
    %1458 = arith.andi %9, %1359 : vector<8x128xi32>
    %1459 = arith.xori %5, %1458 : vector<8x128xi32>
    %1460 = arith.xori %1457, %1459 : vector<8x128xi32>
    %1461 = arith.andi %1460, %1455 : vector<8x128xi32>
    %1462 = arith.xori %1457, %1461 : vector<8x128xi32>
    %c8_i32_536 = arith.constant 8 : i32
    %c67108864_i32_537 = arith.constant 67108864 : i32
    %1463 = vector.broadcast %c67108864_i32_537 : i32 to vector<8x128xi32>
    %1464 = arith.andi %1462, %1463 : vector<8x128xi32>
    %c26_i32_538 = arith.constant 26 : i32
    %1465 = vector.broadcast %c26_i32_538 : i32 to vector<8x128xi32>
    %1466 = arith.shrsi %1464, %1465 : vector<8x128xi32>
    %c1_i32_539 = arith.constant 1 : i32
    %1467 = vector.broadcast %c1_i32_539 : i32 to vector<8x128xi32>
    %1468 = arith.andi %1466, %1467 : vector<8x128xi32>
    %c1073741824_i32_540 = arith.constant 1073741824 : i32
    %1469 = vector.broadcast %c1073741824_i32_540 : i32 to vector<8x128xi32>
    %1470 = arith.andi %1462, %1469 : vector<8x128xi32>
    %c13_i32_541 = arith.constant 13 : i32
    %1471 = vector.broadcast %c13_i32_541 : i32 to vector<8x128xi32>
    %1472 = arith.shrsi %1470, %1471 : vector<8x128xi32>
    %c131072_i32_542 = arith.constant 131072 : i32
    %1473 = vector.broadcast %c131072_i32_542 : i32 to vector<8x128xi32>
    %1474 = arith.andi %1472, %1473 : vector<8x128xi32>
    %1475 = arith.ori %1468, %1474 : vector<8x128xi32>
    %c128_i32_543 = arith.constant 128 : i32
    %1476 = vector.broadcast %c128_i32_543 : i32 to vector<8x128xi32>
    %1477 = arith.andi %1462, %1476 : vector<8x128xi32>
    %c4_i32_544 = arith.constant 4 : i32
    %1478 = vector.broadcast %c4_i32_544 : i32 to vector<8x128xi32>
    %1479 = arith.shrsi %1477, %1478 : vector<8x128xi32>
    %c8_i32_545 = arith.constant 8 : i32
    %1480 = vector.broadcast %c8_i32_545 : i32 to vector<8x128xi32>
    %1481 = arith.andi %1479, %1480 : vector<8x128xi32>
    %1482 = arith.ori %1475, %1481 : vector<8x128xi32>
    %c32768_i32_546 = arith.constant 32768 : i32
    %1483 = vector.broadcast %c32768_i32_546 : i32 to vector<8x128xi32>
    %1484 = arith.andi %1462, %1483 : vector<8x128xi32>
    %c3_i32_547 = arith.constant 3 : i32
    %1485 = vector.broadcast %c3_i32_547 : i32 to vector<8x128xi32>
    %1486 = arith.shrsi %1484, %1485 : vector<8x128xi32>
    %c4096_i32_548 = arith.constant 4096 : i32
    %1487 = vector.broadcast %c4096_i32_548 : i32 to vector<8x128xi32>
    %1488 = arith.andi %1486, %1487 : vector<8x128xi32>
    %1489 = arith.ori %1482, %1488 : vector<8x128xi32>
    %c268570632_i32_549 = arith.constant 268570632 : i32
    %1490 = vector.broadcast %c268570632_i32_549 : i32 to vector<8x128xi32>
    %1491 = arith.andi %1462, %1490 : vector<8x128xi32>
    %c2_i32_550 = arith.constant 2 : i32
    %1492 = vector.broadcast %c2_i32_550 : i32 to vector<8x128xi32>
    %1493 = arith.shrsi %1491, %1492 : vector<8x128xi32>
    %c67142658_i32_551 = arith.constant 67142658 : i32
    %1494 = vector.broadcast %c67142658_i32_551 : i32 to vector<8x128xi32>
    %1495 = arith.andi %1493, %1494 : vector<8x128xi32>
    %1496 = arith.ori %1489, %1495 : vector<8x128xi32>
    %c276959240_i32_552 = arith.constant 276959240 : i32
    %1497 = vector.broadcast %c276959240_i32_552 : i32 to vector<8x128xi32>
    %1498 = arith.andi %1462, %1497 : vector<8x128xi32>
    %c1_i32_553 = arith.constant 1 : i32
    %1499 = vector.broadcast %c1_i32_553 : i32 to vector<8x128xi32>
    %1500 = arith.shrsi %1498, %1499 : vector<8x128xi32>
    %c138479620_i32_554 = arith.constant 138479620 : i32
    %1501 = vector.broadcast %c138479620_i32_554 : i32 to vector<8x128xi32>
    %1502 = arith.andi %1500, %1501 : vector<8x128xi32>
    %1503 = arith.ori %1496, %1502 : vector<8x128xi32>
    %c8192_i32_555 = arith.constant 8192 : i32
    %1504 = vector.broadcast %c8192_i32_555 : i32 to vector<8x128xi32>
    %1505 = arith.andi %1462, %1504 : vector<8x128xi32>
    %c1_i32_556 = arith.constant 1 : i32
    %1506 = vector.broadcast %c1_i32_556 : i32 to vector<8x128xi32>
    %1507 = arith.shli %1505, %1506 : vector<8x128xi32>
    %1508 = arith.ori %1503, %1507 : vector<8x128xi32>
    %c524304_i32_557 = arith.constant 524304 : i32
    %1509 = vector.broadcast %c524304_i32_557 : i32 to vector<8x128xi32>
    %1510 = arith.andi %1462, %1509 : vector<8x128xi32>
    %c2_i32_558 = arith.constant 2 : i32
    %1511 = vector.broadcast %c2_i32_558 : i32 to vector<8x128xi32>
    %1512 = arith.shli %1510, %1511 : vector<8x128xi32>
    %1513 = arith.ori %1508, %1512 : vector<8x128xi32>
    %c2097152_i32_559 = arith.constant 2097152 : i32
    %1514 = vector.broadcast %c2097152_i32_559 : i32 to vector<8x128xi32>
    %1515 = arith.andi %1462, %1514 : vector<8x128xi32>
    %c3_i32_560 = arith.constant 3 : i32
    %1516 = vector.broadcast %c3_i32_560 : i32 to vector<8x128xi32>
    %1517 = arith.shli %1515, %1516 : vector<8x128xi32>
    %1518 = arith.ori %1513, %1517 : vector<8x128xi32>
    %c33571329_i32_561 = arith.constant 33571329 : i32
    %1519 = vector.broadcast %c33571329_i32_561 : i32 to vector<8x128xi32>
    %1520 = arith.andi %1462, %1519 : vector<8x128xi32>
    %c4_i32_562 = arith.constant 4 : i32
    %1521 = vector.broadcast %c4_i32_562 : i32 to vector<8x128xi32>
    %1522 = arith.shli %1520, %1521 : vector<8x128xi32>
    %1523 = arith.ori %1518, %1522 : vector<8x128xi32>
    %c1_i32_563 = arith.constant 1 : i32
    %1524 = vector.broadcast %c1_i32_563 : i32 to vector<8x128xi32>
    %1525 = arith.andi %1462, %1524 : vector<8x128xi32>
    %c5_i32_564 = arith.constant 5 : i32
    %1526 = vector.broadcast %c5_i32_564 : i32 to vector<8x128xi32>
    %1527 = arith.shli %1525, %1526 : vector<8x128xi32>
    %1528 = arith.ori %1523, %1527 : vector<8x128xi32>
    %c2_i32_565 = arith.constant 2 : i32
    %1529 = vector.broadcast %c2_i32_565 : i32 to vector<8x128xi32>
    %1530 = arith.andi %1462, %1529 : vector<8x128xi32>
    %c24_i32_566 = arith.constant 24 : i32
    %1531 = vector.broadcast %c24_i32_566 : i32 to vector<8x128xi32>
    %1532 = arith.shli %1530, %1531 : vector<8x128xi32>
    %1533 = arith.ori %1528, %1532 : vector<8x128xi32>
    %1534 = arith.ori %46, %1533 : vector<8x128xi32>
    %c67108864_i32_567 = arith.constant 67108864 : i32
    %1535 = vector.broadcast %c67108864_i32_567 : i32 to vector<8x128xi32>
    %1536 = arith.andi %1462, %1535 : vector<8x128xi32>
    %c24_i32_568 = arith.constant 24 : i32
    %1537 = vector.broadcast %c24_i32_568 : i32 to vector<8x128xi32>
    %1538 = arith.shrsi %1536, %1537 : vector<8x128xi32>
    %c4_i32_569 = arith.constant 4 : i32
    %1539 = vector.broadcast %c4_i32_569 : i32 to vector<8x128xi32>
    %1540 = arith.andi %1538, %1539 : vector<8x128xi32>
    %c1048576_i32_570 = arith.constant 1048576 : i32
    %1541 = vector.broadcast %c1048576_i32_570 : i32 to vector<8x128xi32>
    %1542 = arith.andi %1462, %1541 : vector<8x128xi32>
    %c17_i32_571 = arith.constant 17 : i32
    %1543 = vector.broadcast %c17_i32_571 : i32 to vector<8x128xi32>
    %1544 = arith.shrsi %1542, %1543 : vector<8x128xi32>
    %c8_i32_572 = arith.constant 8 : i32
    %1545 = vector.broadcast %c8_i32_572 : i32 to vector<8x128xi32>
    %1546 = arith.andi %1544, %1545 : vector<8x128xi32>
    %1547 = arith.ori %1540, %1546 : vector<8x128xi32>
    %c1114112_i32_573 = arith.constant 1114112 : i32
    %1548 = vector.broadcast %c1114112_i32_573 : i32 to vector<8x128xi32>
    %1549 = arith.andi %1462, %1548 : vector<8x128xi32>
    %c16_i32_574 = arith.constant 16 : i32
    %1550 = vector.broadcast %c16_i32_574 : i32 to vector<8x128xi32>
    %1551 = arith.shrsi %1549, %1550 : vector<8x128xi32>
    %c17_i32_575 = arith.constant 17 : i32
    %1552 = vector.broadcast %c17_i32_575 : i32 to vector<8x128xi32>
    %1553 = arith.andi %1551, %1552 : vector<8x128xi32>
    %1554 = arith.ori %1547, %1553 : vector<8x128xi32>
    %c65536_i32_576 = arith.constant 65536 : i32
    %1555 = vector.broadcast %c65536_i32_576 : i32 to vector<8x128xi32>
    %1556 = arith.andi %1462, %1555 : vector<8x128xi32>
    %c15_i32_577 = arith.constant 15 : i32
    %1557 = vector.broadcast %c15_i32_577 : i32 to vector<8x128xi32>
    %1558 = arith.shrsi %1556, %1557 : vector<8x128xi32>
    %c2_i32_578 = arith.constant 2 : i32
    %1559 = vector.broadcast %c2_i32_578 : i32 to vector<8x128xi32>
    %1560 = arith.andi %1558, %1559 : vector<8x128xi32>
    %1561 = arith.ori %1554, %1560 : vector<8x128xi32>
    %c2048_i32_579 = arith.constant 2048 : i32
    %1562 = vector.broadcast %c2048_i32_579 : i32 to vector<8x128xi32>
    %1563 = arith.andi %1462, %1562 : vector<8x128xi32>
    %c5_i32_580 = arith.constant 5 : i32
    %1564 = vector.broadcast %c5_i32_580 : i32 to vector<8x128xi32>
    %1565 = arith.shrsi %1563, %1564 : vector<8x128xi32>
    %c64_i32_581 = arith.constant 64 : i32
    %1566 = vector.broadcast %c64_i32_581 : i32 to vector<8x128xi32>
    %1567 = arith.andi %1565, %1566 : vector<8x128xi32>
    %1568 = arith.ori %1561, %1567 : vector<8x128xi32>
    %c134219776_i32_582 = arith.constant 134219776 : i32
    %1569 = vector.broadcast %c134219776_i32_582 : i32 to vector<8x128xi32>
    %1570 = arith.andi %1462, %1569 : vector<8x128xi32>
    %c4_i32_583 = arith.constant 4 : i32
    %1571 = vector.broadcast %c4_i32_583 : i32 to vector<8x128xi32>
    %1572 = arith.shrsi %1570, %1571 : vector<8x128xi32>
    %c8388736_i32_584 = arith.constant 8388736 : i32
    %1573 = vector.broadcast %c8388736_i32_584 : i32 to vector<8x128xi32>
    %1574 = arith.andi %1572, %1573 : vector<8x128xi32>
    %1575 = arith.ori %1568, %1574 : vector<8x128xi32>
    %c-2147483648_i32_585 = arith.constant -2147483648 : i32
    %1576 = vector.broadcast %c-2147483648_i32_585 : i32 to vector<8x128xi32>
    %1577 = arith.andi %1462, %1576 : vector<8x128xi32>
    %c3_i32_586 = arith.constant 3 : i32
    %1578 = vector.broadcast %c3_i32_586 : i32 to vector<8x128xi32>
    %1579 = arith.shrsi %1577, %1578 : vector<8x128xi32>
    %c268435456_i32_587 = arith.constant 268435456 : i32
    %1580 = vector.broadcast %c268435456_i32_587 : i32 to vector<8x128xi32>
    %1581 = arith.andi %1579, %1580 : vector<8x128xi32>
    %1582 = arith.ori %1575, %1581 : vector<8x128xi32>
    %c4194432_i32_588 = arith.constant 4194432 : i32
    %1583 = vector.broadcast %c4194432_i32_588 : i32 to vector<8x128xi32>
    %1584 = arith.andi %1462, %1583 : vector<8x128xi32>
    %c2_i32_589 = arith.constant 2 : i32
    %1585 = vector.broadcast %c2_i32_589 : i32 to vector<8x128xi32>
    %1586 = arith.shrsi %1584, %1585 : vector<8x128xi32>
    %c1048608_i32_590 = arith.constant 1048608 : i32
    %1587 = vector.broadcast %c1048608_i32_590 : i32 to vector<8x128xi32>
    %1588 = arith.andi %1586, %1587 : vector<8x128xi32>
    %1589 = arith.ori %1582, %1588 : vector<8x128xi32>
    %c553648384_i32_591 = arith.constant 553648384 : i32
    %1590 = vector.broadcast %c553648384_i32_591 : i32 to vector<8x128xi32>
    %1591 = arith.andi %1462, %1590 : vector<8x128xi32>
    %c1_i32_592 = arith.constant 1 : i32
    %1592 = vector.broadcast %c1_i32_592 : i32 to vector<8x128xi32>
    %1593 = arith.shli %1591, %1592 : vector<8x128xi32>
    %1594 = arith.ori %1589, %1593 : vector<8x128xi32>
    %c16777472_i32_593 = arith.constant 16777472 : i32
    %1595 = vector.broadcast %c16777472_i32_593 : i32 to vector<8x128xi32>
    %1596 = arith.andi %1462, %1595 : vector<8x128xi32>
    %c2_i32_594 = arith.constant 2 : i32
    %1597 = vector.broadcast %c2_i32_594 : i32 to vector<8x128xi32>
    %1598 = arith.shli %1596, %1597 : vector<8x128xi32>
    %1599 = arith.ori %1594, %1598 : vector<8x128xi32>
    %c8192_i32_595 = arith.constant 8192 : i32
    %1600 = vector.broadcast %c8192_i32_595 : i32 to vector<8x128xi32>
    %1601 = arith.andi %1462, %1600 : vector<8x128xi32>
    %c3_i32_596 = arith.constant 3 : i32
    %1602 = vector.broadcast %c3_i32_596 : i32 to vector<8x128xi32>
    %1603 = arith.shli %1601, %1602 : vector<8x128xi32>
    %1604 = arith.ori %1599, %1603 : vector<8x128xi32>
    %c16_i32_597 = arith.constant 16 : i32
    %1605 = vector.broadcast %c16_i32_597 : i32 to vector<8x128xi32>
    %1606 = arith.andi %1462, %1605 : vector<8x128xi32>
    %c4_i32_598 = arith.constant 4 : i32
    %1607 = vector.broadcast %c4_i32_598 : i32 to vector<8x128xi32>
    %1608 = arith.shli %1606, %1607 : vector<8x128xi32>
    %1609 = arith.ori %1604, %1608 : vector<8x128xi32>
    %c4_i32_599 = arith.constant 4 : i32
    %1610 = vector.broadcast %c4_i32_599 : i32 to vector<8x128xi32>
    %1611 = arith.andi %1462, %1610 : vector<8x128xi32>
    %c12_i32_600 = arith.constant 12 : i32
    %1612 = vector.broadcast %c12_i32_600 : i32 to vector<8x128xi32>
    %1613 = arith.shli %1611, %1612 : vector<8x128xi32>
    %1614 = arith.ori %1609, %1613 : vector<8x128xi32>
    %c262148_i32_601 = arith.constant 262148 : i32
    %1615 = vector.broadcast %c262148_i32_601 : i32 to vector<8x128xi32>
    %1616 = arith.andi %1462, %1615 : vector<8x128xi32>
    %c13_i32_602 = arith.constant 13 : i32
    %1617 = vector.broadcast %c13_i32_602 : i32 to vector<8x128xi32>
    %1618 = arith.shli %1616, %1617 : vector<8x128xi32>
    %1619 = arith.ori %1614, %1618 : vector<8x128xi32>
    %c32_i32_603 = arith.constant 32 : i32
    %1620 = vector.broadcast %c32_i32_603 : i32 to vector<8x128xi32>
    %1621 = arith.andi %1462, %1620 : vector<8x128xi32>
    %c14_i32_604 = arith.constant 14 : i32
    %1622 = vector.broadcast %c14_i32_604 : i32 to vector<8x128xi32>
    %1623 = arith.shli %1621, %1622 : vector<8x128xi32>
    %1624 = arith.ori %1619, %1623 : vector<8x128xi32>
    %c2_i32_605 = arith.constant 2 : i32
    %1625 = vector.broadcast %c2_i32_605 : i32 to vector<8x128xi32>
    %1626 = arith.andi %1462, %1625 : vector<8x128xi32>
    %c26_i32_606 = arith.constant 26 : i32
    %1627 = vector.broadcast %c26_i32_606 : i32 to vector<8x128xi32>
    %1628 = arith.shli %1626, %1627 : vector<8x128xi32>
    %1629 = arith.ori %1624, %1628 : vector<8x128xi32>
    %1630 = arith.ori %51, %1629 : vector<8x128xi32>
    %1631 = arith.andi %7, %1534 : vector<8x128xi32>
    %1632 = arith.xori %4, %1631 : vector<8x128xi32>
    %1633 = arith.andi %9, %1534 : vector<8x128xi32>
    %1634 = arith.xori %5, %1633 : vector<8x128xi32>
    %1635 = arith.xori %1632, %1634 : vector<8x128xi32>
    %1636 = arith.andi %1635, %1630 : vector<8x128xi32>
    %1637 = arith.xori %1632, %1636 : vector<8x128xi32>
    %c9_i32 = arith.constant 9 : i32
    %c67108864_i32_607 = arith.constant 67108864 : i32
    %1638 = vector.broadcast %c67108864_i32_607 : i32 to vector<8x128xi32>
    %1639 = arith.andi %1637, %1638 : vector<8x128xi32>
    %c26_i32_608 = arith.constant 26 : i32
    %1640 = vector.broadcast %c26_i32_608 : i32 to vector<8x128xi32>
    %1641 = arith.shrsi %1639, %1640 : vector<8x128xi32>
    %c1_i32_609 = arith.constant 1 : i32
    %1642 = vector.broadcast %c1_i32_609 : i32 to vector<8x128xi32>
    %1643 = arith.andi %1641, %1642 : vector<8x128xi32>
    %c1073741824_i32_610 = arith.constant 1073741824 : i32
    %1644 = vector.broadcast %c1073741824_i32_610 : i32 to vector<8x128xi32>
    %1645 = arith.andi %1637, %1644 : vector<8x128xi32>
    %c13_i32_611 = arith.constant 13 : i32
    %1646 = vector.broadcast %c13_i32_611 : i32 to vector<8x128xi32>
    %1647 = arith.shrsi %1645, %1646 : vector<8x128xi32>
    %c131072_i32_612 = arith.constant 131072 : i32
    %1648 = vector.broadcast %c131072_i32_612 : i32 to vector<8x128xi32>
    %1649 = arith.andi %1647, %1648 : vector<8x128xi32>
    %1650 = arith.ori %1643, %1649 : vector<8x128xi32>
    %c128_i32_613 = arith.constant 128 : i32
    %1651 = vector.broadcast %c128_i32_613 : i32 to vector<8x128xi32>
    %1652 = arith.andi %1637, %1651 : vector<8x128xi32>
    %c4_i32_614 = arith.constant 4 : i32
    %1653 = vector.broadcast %c4_i32_614 : i32 to vector<8x128xi32>
    %1654 = arith.shrsi %1652, %1653 : vector<8x128xi32>
    %c8_i32_615 = arith.constant 8 : i32
    %1655 = vector.broadcast %c8_i32_615 : i32 to vector<8x128xi32>
    %1656 = arith.andi %1654, %1655 : vector<8x128xi32>
    %1657 = arith.ori %1650, %1656 : vector<8x128xi32>
    %c32768_i32_616 = arith.constant 32768 : i32
    %1658 = vector.broadcast %c32768_i32_616 : i32 to vector<8x128xi32>
    %1659 = arith.andi %1637, %1658 : vector<8x128xi32>
    %c3_i32_617 = arith.constant 3 : i32
    %1660 = vector.broadcast %c3_i32_617 : i32 to vector<8x128xi32>
    %1661 = arith.shrsi %1659, %1660 : vector<8x128xi32>
    %c4096_i32_618 = arith.constant 4096 : i32
    %1662 = vector.broadcast %c4096_i32_618 : i32 to vector<8x128xi32>
    %1663 = arith.andi %1661, %1662 : vector<8x128xi32>
    %1664 = arith.ori %1657, %1663 : vector<8x128xi32>
    %c268570632_i32_619 = arith.constant 268570632 : i32
    %1665 = vector.broadcast %c268570632_i32_619 : i32 to vector<8x128xi32>
    %1666 = arith.andi %1637, %1665 : vector<8x128xi32>
    %c2_i32_620 = arith.constant 2 : i32
    %1667 = vector.broadcast %c2_i32_620 : i32 to vector<8x128xi32>
    %1668 = arith.shrsi %1666, %1667 : vector<8x128xi32>
    %c67142658_i32_621 = arith.constant 67142658 : i32
    %1669 = vector.broadcast %c67142658_i32_621 : i32 to vector<8x128xi32>
    %1670 = arith.andi %1668, %1669 : vector<8x128xi32>
    %1671 = arith.ori %1664, %1670 : vector<8x128xi32>
    %c276959240_i32_622 = arith.constant 276959240 : i32
    %1672 = vector.broadcast %c276959240_i32_622 : i32 to vector<8x128xi32>
    %1673 = arith.andi %1637, %1672 : vector<8x128xi32>
    %c1_i32_623 = arith.constant 1 : i32
    %1674 = vector.broadcast %c1_i32_623 : i32 to vector<8x128xi32>
    %1675 = arith.shrsi %1673, %1674 : vector<8x128xi32>
    %c138479620_i32_624 = arith.constant 138479620 : i32
    %1676 = vector.broadcast %c138479620_i32_624 : i32 to vector<8x128xi32>
    %1677 = arith.andi %1675, %1676 : vector<8x128xi32>
    %1678 = arith.ori %1671, %1677 : vector<8x128xi32>
    %c8192_i32_625 = arith.constant 8192 : i32
    %1679 = vector.broadcast %c8192_i32_625 : i32 to vector<8x128xi32>
    %1680 = arith.andi %1637, %1679 : vector<8x128xi32>
    %c1_i32_626 = arith.constant 1 : i32
    %1681 = vector.broadcast %c1_i32_626 : i32 to vector<8x128xi32>
    %1682 = arith.shli %1680, %1681 : vector<8x128xi32>
    %1683 = arith.ori %1678, %1682 : vector<8x128xi32>
    %c524304_i32_627 = arith.constant 524304 : i32
    %1684 = vector.broadcast %c524304_i32_627 : i32 to vector<8x128xi32>
    %1685 = arith.andi %1637, %1684 : vector<8x128xi32>
    %c2_i32_628 = arith.constant 2 : i32
    %1686 = vector.broadcast %c2_i32_628 : i32 to vector<8x128xi32>
    %1687 = arith.shli %1685, %1686 : vector<8x128xi32>
    %1688 = arith.ori %1683, %1687 : vector<8x128xi32>
    %c2097152_i32_629 = arith.constant 2097152 : i32
    %1689 = vector.broadcast %c2097152_i32_629 : i32 to vector<8x128xi32>
    %1690 = arith.andi %1637, %1689 : vector<8x128xi32>
    %c3_i32_630 = arith.constant 3 : i32
    %1691 = vector.broadcast %c3_i32_630 : i32 to vector<8x128xi32>
    %1692 = arith.shli %1690, %1691 : vector<8x128xi32>
    %1693 = arith.ori %1688, %1692 : vector<8x128xi32>
    %c33571329_i32_631 = arith.constant 33571329 : i32
    %1694 = vector.broadcast %c33571329_i32_631 : i32 to vector<8x128xi32>
    %1695 = arith.andi %1637, %1694 : vector<8x128xi32>
    %c4_i32_632 = arith.constant 4 : i32
    %1696 = vector.broadcast %c4_i32_632 : i32 to vector<8x128xi32>
    %1697 = arith.shli %1695, %1696 : vector<8x128xi32>
    %1698 = arith.ori %1693, %1697 : vector<8x128xi32>
    %c1_i32_633 = arith.constant 1 : i32
    %1699 = vector.broadcast %c1_i32_633 : i32 to vector<8x128xi32>
    %1700 = arith.andi %1637, %1699 : vector<8x128xi32>
    %c5_i32_634 = arith.constant 5 : i32
    %1701 = vector.broadcast %c5_i32_634 : i32 to vector<8x128xi32>
    %1702 = arith.shli %1700, %1701 : vector<8x128xi32>
    %1703 = arith.ori %1698, %1702 : vector<8x128xi32>
    %c2_i32_635 = arith.constant 2 : i32
    %1704 = vector.broadcast %c2_i32_635 : i32 to vector<8x128xi32>
    %1705 = arith.andi %1637, %1704 : vector<8x128xi32>
    %c24_i32_636 = arith.constant 24 : i32
    %1706 = vector.broadcast %c24_i32_636 : i32 to vector<8x128xi32>
    %1707 = arith.shli %1705, %1706 : vector<8x128xi32>
    %1708 = arith.ori %1703, %1707 : vector<8x128xi32>
    %1709 = arith.ori %46, %1708 : vector<8x128xi32>
    %c67108864_i32_637 = arith.constant 67108864 : i32
    %1710 = vector.broadcast %c67108864_i32_637 : i32 to vector<8x128xi32>
    %1711 = arith.andi %1637, %1710 : vector<8x128xi32>
    %c24_i32_638 = arith.constant 24 : i32
    %1712 = vector.broadcast %c24_i32_638 : i32 to vector<8x128xi32>
    %1713 = arith.shrsi %1711, %1712 : vector<8x128xi32>
    %c4_i32_639 = arith.constant 4 : i32
    %1714 = vector.broadcast %c4_i32_639 : i32 to vector<8x128xi32>
    %1715 = arith.andi %1713, %1714 : vector<8x128xi32>
    %c1048576_i32_640 = arith.constant 1048576 : i32
    %1716 = vector.broadcast %c1048576_i32_640 : i32 to vector<8x128xi32>
    %1717 = arith.andi %1637, %1716 : vector<8x128xi32>
    %c17_i32_641 = arith.constant 17 : i32
    %1718 = vector.broadcast %c17_i32_641 : i32 to vector<8x128xi32>
    %1719 = arith.shrsi %1717, %1718 : vector<8x128xi32>
    %c8_i32_642 = arith.constant 8 : i32
    %1720 = vector.broadcast %c8_i32_642 : i32 to vector<8x128xi32>
    %1721 = arith.andi %1719, %1720 : vector<8x128xi32>
    %1722 = arith.ori %1715, %1721 : vector<8x128xi32>
    %c1114112_i32_643 = arith.constant 1114112 : i32
    %1723 = vector.broadcast %c1114112_i32_643 : i32 to vector<8x128xi32>
    %1724 = arith.andi %1637, %1723 : vector<8x128xi32>
    %c16_i32_644 = arith.constant 16 : i32
    %1725 = vector.broadcast %c16_i32_644 : i32 to vector<8x128xi32>
    %1726 = arith.shrsi %1724, %1725 : vector<8x128xi32>
    %c17_i32_645 = arith.constant 17 : i32
    %1727 = vector.broadcast %c17_i32_645 : i32 to vector<8x128xi32>
    %1728 = arith.andi %1726, %1727 : vector<8x128xi32>
    %1729 = arith.ori %1722, %1728 : vector<8x128xi32>
    %c65536_i32_646 = arith.constant 65536 : i32
    %1730 = vector.broadcast %c65536_i32_646 : i32 to vector<8x128xi32>
    %1731 = arith.andi %1637, %1730 : vector<8x128xi32>
    %c15_i32_647 = arith.constant 15 : i32
    %1732 = vector.broadcast %c15_i32_647 : i32 to vector<8x128xi32>
    %1733 = arith.shrsi %1731, %1732 : vector<8x128xi32>
    %c2_i32_648 = arith.constant 2 : i32
    %1734 = vector.broadcast %c2_i32_648 : i32 to vector<8x128xi32>
    %1735 = arith.andi %1733, %1734 : vector<8x128xi32>
    %1736 = arith.ori %1729, %1735 : vector<8x128xi32>
    %c2048_i32_649 = arith.constant 2048 : i32
    %1737 = vector.broadcast %c2048_i32_649 : i32 to vector<8x128xi32>
    %1738 = arith.andi %1637, %1737 : vector<8x128xi32>
    %c5_i32_650 = arith.constant 5 : i32
    %1739 = vector.broadcast %c5_i32_650 : i32 to vector<8x128xi32>
    %1740 = arith.shrsi %1738, %1739 : vector<8x128xi32>
    %c64_i32_651 = arith.constant 64 : i32
    %1741 = vector.broadcast %c64_i32_651 : i32 to vector<8x128xi32>
    %1742 = arith.andi %1740, %1741 : vector<8x128xi32>
    %1743 = arith.ori %1736, %1742 : vector<8x128xi32>
    %c134219776_i32_652 = arith.constant 134219776 : i32
    %1744 = vector.broadcast %c134219776_i32_652 : i32 to vector<8x128xi32>
    %1745 = arith.andi %1637, %1744 : vector<8x128xi32>
    %c4_i32_653 = arith.constant 4 : i32
    %1746 = vector.broadcast %c4_i32_653 : i32 to vector<8x128xi32>
    %1747 = arith.shrsi %1745, %1746 : vector<8x128xi32>
    %c8388736_i32_654 = arith.constant 8388736 : i32
    %1748 = vector.broadcast %c8388736_i32_654 : i32 to vector<8x128xi32>
    %1749 = arith.andi %1747, %1748 : vector<8x128xi32>
    %1750 = arith.ori %1743, %1749 : vector<8x128xi32>
    %c-2147483648_i32_655 = arith.constant -2147483648 : i32
    %1751 = vector.broadcast %c-2147483648_i32_655 : i32 to vector<8x128xi32>
    %1752 = arith.andi %1637, %1751 : vector<8x128xi32>
    %c3_i32_656 = arith.constant 3 : i32
    %1753 = vector.broadcast %c3_i32_656 : i32 to vector<8x128xi32>
    %1754 = arith.shrsi %1752, %1753 : vector<8x128xi32>
    %c268435456_i32_657 = arith.constant 268435456 : i32
    %1755 = vector.broadcast %c268435456_i32_657 : i32 to vector<8x128xi32>
    %1756 = arith.andi %1754, %1755 : vector<8x128xi32>
    %1757 = arith.ori %1750, %1756 : vector<8x128xi32>
    %c4194432_i32_658 = arith.constant 4194432 : i32
    %1758 = vector.broadcast %c4194432_i32_658 : i32 to vector<8x128xi32>
    %1759 = arith.andi %1637, %1758 : vector<8x128xi32>
    %c2_i32_659 = arith.constant 2 : i32
    %1760 = vector.broadcast %c2_i32_659 : i32 to vector<8x128xi32>
    %1761 = arith.shrsi %1759, %1760 : vector<8x128xi32>
    %c1048608_i32_660 = arith.constant 1048608 : i32
    %1762 = vector.broadcast %c1048608_i32_660 : i32 to vector<8x128xi32>
    %1763 = arith.andi %1761, %1762 : vector<8x128xi32>
    %1764 = arith.ori %1757, %1763 : vector<8x128xi32>
    %c553648384_i32_661 = arith.constant 553648384 : i32
    %1765 = vector.broadcast %c553648384_i32_661 : i32 to vector<8x128xi32>
    %1766 = arith.andi %1637, %1765 : vector<8x128xi32>
    %c1_i32_662 = arith.constant 1 : i32
    %1767 = vector.broadcast %c1_i32_662 : i32 to vector<8x128xi32>
    %1768 = arith.shli %1766, %1767 : vector<8x128xi32>
    %1769 = arith.ori %1764, %1768 : vector<8x128xi32>
    %c16777472_i32_663 = arith.constant 16777472 : i32
    %1770 = vector.broadcast %c16777472_i32_663 : i32 to vector<8x128xi32>
    %1771 = arith.andi %1637, %1770 : vector<8x128xi32>
    %c2_i32_664 = arith.constant 2 : i32
    %1772 = vector.broadcast %c2_i32_664 : i32 to vector<8x128xi32>
    %1773 = arith.shli %1771, %1772 : vector<8x128xi32>
    %1774 = arith.ori %1769, %1773 : vector<8x128xi32>
    %c8192_i32_665 = arith.constant 8192 : i32
    %1775 = vector.broadcast %c8192_i32_665 : i32 to vector<8x128xi32>
    %1776 = arith.andi %1637, %1775 : vector<8x128xi32>
    %c3_i32_666 = arith.constant 3 : i32
    %1777 = vector.broadcast %c3_i32_666 : i32 to vector<8x128xi32>
    %1778 = arith.shli %1776, %1777 : vector<8x128xi32>
    %1779 = arith.ori %1774, %1778 : vector<8x128xi32>
    %c16_i32_667 = arith.constant 16 : i32
    %1780 = vector.broadcast %c16_i32_667 : i32 to vector<8x128xi32>
    %1781 = arith.andi %1637, %1780 : vector<8x128xi32>
    %c4_i32_668 = arith.constant 4 : i32
    %1782 = vector.broadcast %c4_i32_668 : i32 to vector<8x128xi32>
    %1783 = arith.shli %1781, %1782 : vector<8x128xi32>
    %1784 = arith.ori %1779, %1783 : vector<8x128xi32>
    %c4_i32_669 = arith.constant 4 : i32
    %1785 = vector.broadcast %c4_i32_669 : i32 to vector<8x128xi32>
    %1786 = arith.andi %1637, %1785 : vector<8x128xi32>
    %c12_i32_670 = arith.constant 12 : i32
    %1787 = vector.broadcast %c12_i32_670 : i32 to vector<8x128xi32>
    %1788 = arith.shli %1786, %1787 : vector<8x128xi32>
    %1789 = arith.ori %1784, %1788 : vector<8x128xi32>
    %c262148_i32_671 = arith.constant 262148 : i32
    %1790 = vector.broadcast %c262148_i32_671 : i32 to vector<8x128xi32>
    %1791 = arith.andi %1637, %1790 : vector<8x128xi32>
    %c13_i32_672 = arith.constant 13 : i32
    %1792 = vector.broadcast %c13_i32_672 : i32 to vector<8x128xi32>
    %1793 = arith.shli %1791, %1792 : vector<8x128xi32>
    %1794 = arith.ori %1789, %1793 : vector<8x128xi32>
    %c32_i32_673 = arith.constant 32 : i32
    %1795 = vector.broadcast %c32_i32_673 : i32 to vector<8x128xi32>
    %1796 = arith.andi %1637, %1795 : vector<8x128xi32>
    %c14_i32_674 = arith.constant 14 : i32
    %1797 = vector.broadcast %c14_i32_674 : i32 to vector<8x128xi32>
    %1798 = arith.shli %1796, %1797 : vector<8x128xi32>
    %1799 = arith.ori %1794, %1798 : vector<8x128xi32>
    %c2_i32_675 = arith.constant 2 : i32
    %1800 = vector.broadcast %c2_i32_675 : i32 to vector<8x128xi32>
    %1801 = arith.andi %1637, %1800 : vector<8x128xi32>
    %c26_i32_676 = arith.constant 26 : i32
    %1802 = vector.broadcast %c26_i32_676 : i32 to vector<8x128xi32>
    %1803 = arith.shli %1801, %1802 : vector<8x128xi32>
    %1804 = arith.ori %1799, %1803 : vector<8x128xi32>
    %1805 = arith.ori %51, %1804 : vector<8x128xi32>
    %1806 = arith.andi %7, %1709 : vector<8x128xi32>
    %1807 = arith.xori %4, %1806 : vector<8x128xi32>
    %1808 = arith.andi %9, %1709 : vector<8x128xi32>
    %1809 = arith.xori %5, %1808 : vector<8x128xi32>
    %1810 = arith.xori %1807, %1809 : vector<8x128xi32>
    %1811 = arith.andi %1810, %1805 : vector<8x128xi32>
    %1812 = arith.xori %1807, %1811 : vector<8x128xi32>
    %c10_i32 = arith.constant 10 : i32
    %c67108864_i32_677 = arith.constant 67108864 : i32
    %1813 = vector.broadcast %c67108864_i32_677 : i32 to vector<8x128xi32>
    %1814 = arith.andi %1812, %1813 : vector<8x128xi32>
    %c26_i32_678 = arith.constant 26 : i32
    %1815 = vector.broadcast %c26_i32_678 : i32 to vector<8x128xi32>
    %1816 = arith.shrsi %1814, %1815 : vector<8x128xi32>
    %c1_i32_679 = arith.constant 1 : i32
    %1817 = vector.broadcast %c1_i32_679 : i32 to vector<8x128xi32>
    %1818 = arith.andi %1816, %1817 : vector<8x128xi32>
    %c1073741824_i32_680 = arith.constant 1073741824 : i32
    %1819 = vector.broadcast %c1073741824_i32_680 : i32 to vector<8x128xi32>
    %1820 = arith.andi %1812, %1819 : vector<8x128xi32>
    %c13_i32_681 = arith.constant 13 : i32
    %1821 = vector.broadcast %c13_i32_681 : i32 to vector<8x128xi32>
    %1822 = arith.shrsi %1820, %1821 : vector<8x128xi32>
    %c131072_i32_682 = arith.constant 131072 : i32
    %1823 = vector.broadcast %c131072_i32_682 : i32 to vector<8x128xi32>
    %1824 = arith.andi %1822, %1823 : vector<8x128xi32>
    %1825 = arith.ori %1818, %1824 : vector<8x128xi32>
    %c128_i32_683 = arith.constant 128 : i32
    %1826 = vector.broadcast %c128_i32_683 : i32 to vector<8x128xi32>
    %1827 = arith.andi %1812, %1826 : vector<8x128xi32>
    %c4_i32_684 = arith.constant 4 : i32
    %1828 = vector.broadcast %c4_i32_684 : i32 to vector<8x128xi32>
    %1829 = arith.shrsi %1827, %1828 : vector<8x128xi32>
    %c8_i32_685 = arith.constant 8 : i32
    %1830 = vector.broadcast %c8_i32_685 : i32 to vector<8x128xi32>
    %1831 = arith.andi %1829, %1830 : vector<8x128xi32>
    %1832 = arith.ori %1825, %1831 : vector<8x128xi32>
    %c32768_i32_686 = arith.constant 32768 : i32
    %1833 = vector.broadcast %c32768_i32_686 : i32 to vector<8x128xi32>
    %1834 = arith.andi %1812, %1833 : vector<8x128xi32>
    %c3_i32_687 = arith.constant 3 : i32
    %1835 = vector.broadcast %c3_i32_687 : i32 to vector<8x128xi32>
    %1836 = arith.shrsi %1834, %1835 : vector<8x128xi32>
    %c4096_i32_688 = arith.constant 4096 : i32
    %1837 = vector.broadcast %c4096_i32_688 : i32 to vector<8x128xi32>
    %1838 = arith.andi %1836, %1837 : vector<8x128xi32>
    %1839 = arith.ori %1832, %1838 : vector<8x128xi32>
    %c268570632_i32_689 = arith.constant 268570632 : i32
    %1840 = vector.broadcast %c268570632_i32_689 : i32 to vector<8x128xi32>
    %1841 = arith.andi %1812, %1840 : vector<8x128xi32>
    %c2_i32_690 = arith.constant 2 : i32
    %1842 = vector.broadcast %c2_i32_690 : i32 to vector<8x128xi32>
    %1843 = arith.shrsi %1841, %1842 : vector<8x128xi32>
    %c67142658_i32_691 = arith.constant 67142658 : i32
    %1844 = vector.broadcast %c67142658_i32_691 : i32 to vector<8x128xi32>
    %1845 = arith.andi %1843, %1844 : vector<8x128xi32>
    %1846 = arith.ori %1839, %1845 : vector<8x128xi32>
    %c276959240_i32_692 = arith.constant 276959240 : i32
    %1847 = vector.broadcast %c276959240_i32_692 : i32 to vector<8x128xi32>
    %1848 = arith.andi %1812, %1847 : vector<8x128xi32>
    %c1_i32_693 = arith.constant 1 : i32
    %1849 = vector.broadcast %c1_i32_693 : i32 to vector<8x128xi32>
    %1850 = arith.shrsi %1848, %1849 : vector<8x128xi32>
    %c138479620_i32_694 = arith.constant 138479620 : i32
    %1851 = vector.broadcast %c138479620_i32_694 : i32 to vector<8x128xi32>
    %1852 = arith.andi %1850, %1851 : vector<8x128xi32>
    %1853 = arith.ori %1846, %1852 : vector<8x128xi32>
    %c8192_i32_695 = arith.constant 8192 : i32
    %1854 = vector.broadcast %c8192_i32_695 : i32 to vector<8x128xi32>
    %1855 = arith.andi %1812, %1854 : vector<8x128xi32>
    %c1_i32_696 = arith.constant 1 : i32
    %1856 = vector.broadcast %c1_i32_696 : i32 to vector<8x128xi32>
    %1857 = arith.shli %1855, %1856 : vector<8x128xi32>
    %1858 = arith.ori %1853, %1857 : vector<8x128xi32>
    %c524304_i32_697 = arith.constant 524304 : i32
    %1859 = vector.broadcast %c524304_i32_697 : i32 to vector<8x128xi32>
    %1860 = arith.andi %1812, %1859 : vector<8x128xi32>
    %c2_i32_698 = arith.constant 2 : i32
    %1861 = vector.broadcast %c2_i32_698 : i32 to vector<8x128xi32>
    %1862 = arith.shli %1860, %1861 : vector<8x128xi32>
    %1863 = arith.ori %1858, %1862 : vector<8x128xi32>
    %c2097152_i32_699 = arith.constant 2097152 : i32
    %1864 = vector.broadcast %c2097152_i32_699 : i32 to vector<8x128xi32>
    %1865 = arith.andi %1812, %1864 : vector<8x128xi32>
    %c3_i32_700 = arith.constant 3 : i32
    %1866 = vector.broadcast %c3_i32_700 : i32 to vector<8x128xi32>
    %1867 = arith.shli %1865, %1866 : vector<8x128xi32>
    %1868 = arith.ori %1863, %1867 : vector<8x128xi32>
    %c33571329_i32_701 = arith.constant 33571329 : i32
    %1869 = vector.broadcast %c33571329_i32_701 : i32 to vector<8x128xi32>
    %1870 = arith.andi %1812, %1869 : vector<8x128xi32>
    %c4_i32_702 = arith.constant 4 : i32
    %1871 = vector.broadcast %c4_i32_702 : i32 to vector<8x128xi32>
    %1872 = arith.shli %1870, %1871 : vector<8x128xi32>
    %1873 = arith.ori %1868, %1872 : vector<8x128xi32>
    %c1_i32_703 = arith.constant 1 : i32
    %1874 = vector.broadcast %c1_i32_703 : i32 to vector<8x128xi32>
    %1875 = arith.andi %1812, %1874 : vector<8x128xi32>
    %c5_i32_704 = arith.constant 5 : i32
    %1876 = vector.broadcast %c5_i32_704 : i32 to vector<8x128xi32>
    %1877 = arith.shli %1875, %1876 : vector<8x128xi32>
    %1878 = arith.ori %1873, %1877 : vector<8x128xi32>
    %c2_i32_705 = arith.constant 2 : i32
    %1879 = vector.broadcast %c2_i32_705 : i32 to vector<8x128xi32>
    %1880 = arith.andi %1812, %1879 : vector<8x128xi32>
    %c24_i32_706 = arith.constant 24 : i32
    %1881 = vector.broadcast %c24_i32_706 : i32 to vector<8x128xi32>
    %1882 = arith.shli %1880, %1881 : vector<8x128xi32>
    %1883 = arith.ori %1878, %1882 : vector<8x128xi32>
    %1884 = arith.ori %46, %1883 : vector<8x128xi32>
    %c67108864_i32_707 = arith.constant 67108864 : i32
    %1885 = vector.broadcast %c67108864_i32_707 : i32 to vector<8x128xi32>
    %1886 = arith.andi %1812, %1885 : vector<8x128xi32>
    %c24_i32_708 = arith.constant 24 : i32
    %1887 = vector.broadcast %c24_i32_708 : i32 to vector<8x128xi32>
    %1888 = arith.shrsi %1886, %1887 : vector<8x128xi32>
    %c4_i32_709 = arith.constant 4 : i32
    %1889 = vector.broadcast %c4_i32_709 : i32 to vector<8x128xi32>
    %1890 = arith.andi %1888, %1889 : vector<8x128xi32>
    %c1048576_i32_710 = arith.constant 1048576 : i32
    %1891 = vector.broadcast %c1048576_i32_710 : i32 to vector<8x128xi32>
    %1892 = arith.andi %1812, %1891 : vector<8x128xi32>
    %c17_i32_711 = arith.constant 17 : i32
    %1893 = vector.broadcast %c17_i32_711 : i32 to vector<8x128xi32>
    %1894 = arith.shrsi %1892, %1893 : vector<8x128xi32>
    %c8_i32_712 = arith.constant 8 : i32
    %1895 = vector.broadcast %c8_i32_712 : i32 to vector<8x128xi32>
    %1896 = arith.andi %1894, %1895 : vector<8x128xi32>
    %1897 = arith.ori %1890, %1896 : vector<8x128xi32>
    %c1114112_i32_713 = arith.constant 1114112 : i32
    %1898 = vector.broadcast %c1114112_i32_713 : i32 to vector<8x128xi32>
    %1899 = arith.andi %1812, %1898 : vector<8x128xi32>
    %c16_i32_714 = arith.constant 16 : i32
    %1900 = vector.broadcast %c16_i32_714 : i32 to vector<8x128xi32>
    %1901 = arith.shrsi %1899, %1900 : vector<8x128xi32>
    %c17_i32_715 = arith.constant 17 : i32
    %1902 = vector.broadcast %c17_i32_715 : i32 to vector<8x128xi32>
    %1903 = arith.andi %1901, %1902 : vector<8x128xi32>
    %1904 = arith.ori %1897, %1903 : vector<8x128xi32>
    %c65536_i32_716 = arith.constant 65536 : i32
    %1905 = vector.broadcast %c65536_i32_716 : i32 to vector<8x128xi32>
    %1906 = arith.andi %1812, %1905 : vector<8x128xi32>
    %c15_i32_717 = arith.constant 15 : i32
    %1907 = vector.broadcast %c15_i32_717 : i32 to vector<8x128xi32>
    %1908 = arith.shrsi %1906, %1907 : vector<8x128xi32>
    %c2_i32_718 = arith.constant 2 : i32
    %1909 = vector.broadcast %c2_i32_718 : i32 to vector<8x128xi32>
    %1910 = arith.andi %1908, %1909 : vector<8x128xi32>
    %1911 = arith.ori %1904, %1910 : vector<8x128xi32>
    %c2048_i32_719 = arith.constant 2048 : i32
    %1912 = vector.broadcast %c2048_i32_719 : i32 to vector<8x128xi32>
    %1913 = arith.andi %1812, %1912 : vector<8x128xi32>
    %c5_i32_720 = arith.constant 5 : i32
    %1914 = vector.broadcast %c5_i32_720 : i32 to vector<8x128xi32>
    %1915 = arith.shrsi %1913, %1914 : vector<8x128xi32>
    %c64_i32_721 = arith.constant 64 : i32
    %1916 = vector.broadcast %c64_i32_721 : i32 to vector<8x128xi32>
    %1917 = arith.andi %1915, %1916 : vector<8x128xi32>
    %1918 = arith.ori %1911, %1917 : vector<8x128xi32>
    %c134219776_i32_722 = arith.constant 134219776 : i32
    %1919 = vector.broadcast %c134219776_i32_722 : i32 to vector<8x128xi32>
    %1920 = arith.andi %1812, %1919 : vector<8x128xi32>
    %c4_i32_723 = arith.constant 4 : i32
    %1921 = vector.broadcast %c4_i32_723 : i32 to vector<8x128xi32>
    %1922 = arith.shrsi %1920, %1921 : vector<8x128xi32>
    %c8388736_i32_724 = arith.constant 8388736 : i32
    %1923 = vector.broadcast %c8388736_i32_724 : i32 to vector<8x128xi32>
    %1924 = arith.andi %1922, %1923 : vector<8x128xi32>
    %1925 = arith.ori %1918, %1924 : vector<8x128xi32>
    %c-2147483648_i32_725 = arith.constant -2147483648 : i32
    %1926 = vector.broadcast %c-2147483648_i32_725 : i32 to vector<8x128xi32>
    %1927 = arith.andi %1812, %1926 : vector<8x128xi32>
    %c3_i32_726 = arith.constant 3 : i32
    %1928 = vector.broadcast %c3_i32_726 : i32 to vector<8x128xi32>
    %1929 = arith.shrsi %1927, %1928 : vector<8x128xi32>
    %c268435456_i32_727 = arith.constant 268435456 : i32
    %1930 = vector.broadcast %c268435456_i32_727 : i32 to vector<8x128xi32>
    %1931 = arith.andi %1929, %1930 : vector<8x128xi32>
    %1932 = arith.ori %1925, %1931 : vector<8x128xi32>
    %c4194432_i32_728 = arith.constant 4194432 : i32
    %1933 = vector.broadcast %c4194432_i32_728 : i32 to vector<8x128xi32>
    %1934 = arith.andi %1812, %1933 : vector<8x128xi32>
    %c2_i32_729 = arith.constant 2 : i32
    %1935 = vector.broadcast %c2_i32_729 : i32 to vector<8x128xi32>
    %1936 = arith.shrsi %1934, %1935 : vector<8x128xi32>
    %c1048608_i32_730 = arith.constant 1048608 : i32
    %1937 = vector.broadcast %c1048608_i32_730 : i32 to vector<8x128xi32>
    %1938 = arith.andi %1936, %1937 : vector<8x128xi32>
    %1939 = arith.ori %1932, %1938 : vector<8x128xi32>
    %c553648384_i32_731 = arith.constant 553648384 : i32
    %1940 = vector.broadcast %c553648384_i32_731 : i32 to vector<8x128xi32>
    %1941 = arith.andi %1812, %1940 : vector<8x128xi32>
    %c1_i32_732 = arith.constant 1 : i32
    %1942 = vector.broadcast %c1_i32_732 : i32 to vector<8x128xi32>
    %1943 = arith.shli %1941, %1942 : vector<8x128xi32>
    %1944 = arith.ori %1939, %1943 : vector<8x128xi32>
    %c16777472_i32_733 = arith.constant 16777472 : i32
    %1945 = vector.broadcast %c16777472_i32_733 : i32 to vector<8x128xi32>
    %1946 = arith.andi %1812, %1945 : vector<8x128xi32>
    %c2_i32_734 = arith.constant 2 : i32
    %1947 = vector.broadcast %c2_i32_734 : i32 to vector<8x128xi32>
    %1948 = arith.shli %1946, %1947 : vector<8x128xi32>
    %1949 = arith.ori %1944, %1948 : vector<8x128xi32>
    %c8192_i32_735 = arith.constant 8192 : i32
    %1950 = vector.broadcast %c8192_i32_735 : i32 to vector<8x128xi32>
    %1951 = arith.andi %1812, %1950 : vector<8x128xi32>
    %c3_i32_736 = arith.constant 3 : i32
    %1952 = vector.broadcast %c3_i32_736 : i32 to vector<8x128xi32>
    %1953 = arith.shli %1951, %1952 : vector<8x128xi32>
    %1954 = arith.ori %1949, %1953 : vector<8x128xi32>
    %c16_i32_737 = arith.constant 16 : i32
    %1955 = vector.broadcast %c16_i32_737 : i32 to vector<8x128xi32>
    %1956 = arith.andi %1812, %1955 : vector<8x128xi32>
    %c4_i32_738 = arith.constant 4 : i32
    %1957 = vector.broadcast %c4_i32_738 : i32 to vector<8x128xi32>
    %1958 = arith.shli %1956, %1957 : vector<8x128xi32>
    %1959 = arith.ori %1954, %1958 : vector<8x128xi32>
    %c4_i32_739 = arith.constant 4 : i32
    %1960 = vector.broadcast %c4_i32_739 : i32 to vector<8x128xi32>
    %1961 = arith.andi %1812, %1960 : vector<8x128xi32>
    %c12_i32_740 = arith.constant 12 : i32
    %1962 = vector.broadcast %c12_i32_740 : i32 to vector<8x128xi32>
    %1963 = arith.shli %1961, %1962 : vector<8x128xi32>
    %1964 = arith.ori %1959, %1963 : vector<8x128xi32>
    %c262148_i32_741 = arith.constant 262148 : i32
    %1965 = vector.broadcast %c262148_i32_741 : i32 to vector<8x128xi32>
    %1966 = arith.andi %1812, %1965 : vector<8x128xi32>
    %c13_i32_742 = arith.constant 13 : i32
    %1967 = vector.broadcast %c13_i32_742 : i32 to vector<8x128xi32>
    %1968 = arith.shli %1966, %1967 : vector<8x128xi32>
    %1969 = arith.ori %1964, %1968 : vector<8x128xi32>
    %c32_i32_743 = arith.constant 32 : i32
    %1970 = vector.broadcast %c32_i32_743 : i32 to vector<8x128xi32>
    %1971 = arith.andi %1812, %1970 : vector<8x128xi32>
    %c14_i32_744 = arith.constant 14 : i32
    %1972 = vector.broadcast %c14_i32_744 : i32 to vector<8x128xi32>
    %1973 = arith.shli %1971, %1972 : vector<8x128xi32>
    %1974 = arith.ori %1969, %1973 : vector<8x128xi32>
    %c2_i32_745 = arith.constant 2 : i32
    %1975 = vector.broadcast %c2_i32_745 : i32 to vector<8x128xi32>
    %1976 = arith.andi %1812, %1975 : vector<8x128xi32>
    %c26_i32_746 = arith.constant 26 : i32
    %1977 = vector.broadcast %c26_i32_746 : i32 to vector<8x128xi32>
    %1978 = arith.shli %1976, %1977 : vector<8x128xi32>
    %1979 = arith.ori %1974, %1978 : vector<8x128xi32>
    %1980 = arith.ori %51, %1979 : vector<8x128xi32>
    %1981 = arith.andi %7, %1884 : vector<8x128xi32>
    %1982 = arith.xori %4, %1981 : vector<8x128xi32>
    %1983 = arith.andi %9, %1884 : vector<8x128xi32>
    %1984 = arith.xori %5, %1983 : vector<8x128xi32>
    %1985 = arith.xori %1982, %1984 : vector<8x128xi32>
    %1986 = arith.andi %1985, %1980 : vector<8x128xi32>
    %1987 = arith.xori %1982, %1986 : vector<8x128xi32>
    %c11_i32 = arith.constant 11 : i32
    %c67108864_i32_747 = arith.constant 67108864 : i32
    %1988 = vector.broadcast %c67108864_i32_747 : i32 to vector<8x128xi32>
    %1989 = arith.andi %1987, %1988 : vector<8x128xi32>
    %c26_i32_748 = arith.constant 26 : i32
    %1990 = vector.broadcast %c26_i32_748 : i32 to vector<8x128xi32>
    %1991 = arith.shrsi %1989, %1990 : vector<8x128xi32>
    %c1_i32_749 = arith.constant 1 : i32
    %1992 = vector.broadcast %c1_i32_749 : i32 to vector<8x128xi32>
    %1993 = arith.andi %1991, %1992 : vector<8x128xi32>
    %c1073741824_i32_750 = arith.constant 1073741824 : i32
    %1994 = vector.broadcast %c1073741824_i32_750 : i32 to vector<8x128xi32>
    %1995 = arith.andi %1987, %1994 : vector<8x128xi32>
    %c13_i32_751 = arith.constant 13 : i32
    %1996 = vector.broadcast %c13_i32_751 : i32 to vector<8x128xi32>
    %1997 = arith.shrsi %1995, %1996 : vector<8x128xi32>
    %c131072_i32_752 = arith.constant 131072 : i32
    %1998 = vector.broadcast %c131072_i32_752 : i32 to vector<8x128xi32>
    %1999 = arith.andi %1997, %1998 : vector<8x128xi32>
    %2000 = arith.ori %1993, %1999 : vector<8x128xi32>
    %c128_i32_753 = arith.constant 128 : i32
    %2001 = vector.broadcast %c128_i32_753 : i32 to vector<8x128xi32>
    %2002 = arith.andi %1987, %2001 : vector<8x128xi32>
    %c4_i32_754 = arith.constant 4 : i32
    %2003 = vector.broadcast %c4_i32_754 : i32 to vector<8x128xi32>
    %2004 = arith.shrsi %2002, %2003 : vector<8x128xi32>
    %c8_i32_755 = arith.constant 8 : i32
    %2005 = vector.broadcast %c8_i32_755 : i32 to vector<8x128xi32>
    %2006 = arith.andi %2004, %2005 : vector<8x128xi32>
    %2007 = arith.ori %2000, %2006 : vector<8x128xi32>
    %c32768_i32_756 = arith.constant 32768 : i32
    %2008 = vector.broadcast %c32768_i32_756 : i32 to vector<8x128xi32>
    %2009 = arith.andi %1987, %2008 : vector<8x128xi32>
    %c3_i32_757 = arith.constant 3 : i32
    %2010 = vector.broadcast %c3_i32_757 : i32 to vector<8x128xi32>
    %2011 = arith.shrsi %2009, %2010 : vector<8x128xi32>
    %c4096_i32_758 = arith.constant 4096 : i32
    %2012 = vector.broadcast %c4096_i32_758 : i32 to vector<8x128xi32>
    %2013 = arith.andi %2011, %2012 : vector<8x128xi32>
    %2014 = arith.ori %2007, %2013 : vector<8x128xi32>
    %c268570632_i32_759 = arith.constant 268570632 : i32
    %2015 = vector.broadcast %c268570632_i32_759 : i32 to vector<8x128xi32>
    %2016 = arith.andi %1987, %2015 : vector<8x128xi32>
    %c2_i32_760 = arith.constant 2 : i32
    %2017 = vector.broadcast %c2_i32_760 : i32 to vector<8x128xi32>
    %2018 = arith.shrsi %2016, %2017 : vector<8x128xi32>
    %c67142658_i32_761 = arith.constant 67142658 : i32
    %2019 = vector.broadcast %c67142658_i32_761 : i32 to vector<8x128xi32>
    %2020 = arith.andi %2018, %2019 : vector<8x128xi32>
    %2021 = arith.ori %2014, %2020 : vector<8x128xi32>
    %c276959240_i32_762 = arith.constant 276959240 : i32
    %2022 = vector.broadcast %c276959240_i32_762 : i32 to vector<8x128xi32>
    %2023 = arith.andi %1987, %2022 : vector<8x128xi32>
    %c1_i32_763 = arith.constant 1 : i32
    %2024 = vector.broadcast %c1_i32_763 : i32 to vector<8x128xi32>
    %2025 = arith.shrsi %2023, %2024 : vector<8x128xi32>
    %c138479620_i32_764 = arith.constant 138479620 : i32
    %2026 = vector.broadcast %c138479620_i32_764 : i32 to vector<8x128xi32>
    %2027 = arith.andi %2025, %2026 : vector<8x128xi32>
    %2028 = arith.ori %2021, %2027 : vector<8x128xi32>
    %c8192_i32_765 = arith.constant 8192 : i32
    %2029 = vector.broadcast %c8192_i32_765 : i32 to vector<8x128xi32>
    %2030 = arith.andi %1987, %2029 : vector<8x128xi32>
    %c1_i32_766 = arith.constant 1 : i32
    %2031 = vector.broadcast %c1_i32_766 : i32 to vector<8x128xi32>
    %2032 = arith.shli %2030, %2031 : vector<8x128xi32>
    %2033 = arith.ori %2028, %2032 : vector<8x128xi32>
    %c524304_i32_767 = arith.constant 524304 : i32
    %2034 = vector.broadcast %c524304_i32_767 : i32 to vector<8x128xi32>
    %2035 = arith.andi %1987, %2034 : vector<8x128xi32>
    %c2_i32_768 = arith.constant 2 : i32
    %2036 = vector.broadcast %c2_i32_768 : i32 to vector<8x128xi32>
    %2037 = arith.shli %2035, %2036 : vector<8x128xi32>
    %2038 = arith.ori %2033, %2037 : vector<8x128xi32>
    %c2097152_i32_769 = arith.constant 2097152 : i32
    %2039 = vector.broadcast %c2097152_i32_769 : i32 to vector<8x128xi32>
    %2040 = arith.andi %1987, %2039 : vector<8x128xi32>
    %c3_i32_770 = arith.constant 3 : i32
    %2041 = vector.broadcast %c3_i32_770 : i32 to vector<8x128xi32>
    %2042 = arith.shli %2040, %2041 : vector<8x128xi32>
    %2043 = arith.ori %2038, %2042 : vector<8x128xi32>
    %c33571329_i32_771 = arith.constant 33571329 : i32
    %2044 = vector.broadcast %c33571329_i32_771 : i32 to vector<8x128xi32>
    %2045 = arith.andi %1987, %2044 : vector<8x128xi32>
    %c4_i32_772 = arith.constant 4 : i32
    %2046 = vector.broadcast %c4_i32_772 : i32 to vector<8x128xi32>
    %2047 = arith.shli %2045, %2046 : vector<8x128xi32>
    %2048 = arith.ori %2043, %2047 : vector<8x128xi32>
    %c1_i32_773 = arith.constant 1 : i32
    %2049 = vector.broadcast %c1_i32_773 : i32 to vector<8x128xi32>
    %2050 = arith.andi %1987, %2049 : vector<8x128xi32>
    %c5_i32_774 = arith.constant 5 : i32
    %2051 = vector.broadcast %c5_i32_774 : i32 to vector<8x128xi32>
    %2052 = arith.shli %2050, %2051 : vector<8x128xi32>
    %2053 = arith.ori %2048, %2052 : vector<8x128xi32>
    %c2_i32_775 = arith.constant 2 : i32
    %2054 = vector.broadcast %c2_i32_775 : i32 to vector<8x128xi32>
    %2055 = arith.andi %1987, %2054 : vector<8x128xi32>
    %c24_i32_776 = arith.constant 24 : i32
    %2056 = vector.broadcast %c24_i32_776 : i32 to vector<8x128xi32>
    %2057 = arith.shli %2055, %2056 : vector<8x128xi32>
    %2058 = arith.ori %2053, %2057 : vector<8x128xi32>
    %2059 = arith.ori %46, %2058 : vector<8x128xi32>
    %c67108864_i32_777 = arith.constant 67108864 : i32
    %2060 = vector.broadcast %c67108864_i32_777 : i32 to vector<8x128xi32>
    %2061 = arith.andi %1987, %2060 : vector<8x128xi32>
    %c24_i32_778 = arith.constant 24 : i32
    %2062 = vector.broadcast %c24_i32_778 : i32 to vector<8x128xi32>
    %2063 = arith.shrsi %2061, %2062 : vector<8x128xi32>
    %c4_i32_779 = arith.constant 4 : i32
    %2064 = vector.broadcast %c4_i32_779 : i32 to vector<8x128xi32>
    %2065 = arith.andi %2063, %2064 : vector<8x128xi32>
    %c1048576_i32_780 = arith.constant 1048576 : i32
    %2066 = vector.broadcast %c1048576_i32_780 : i32 to vector<8x128xi32>
    %2067 = arith.andi %1987, %2066 : vector<8x128xi32>
    %c17_i32_781 = arith.constant 17 : i32
    %2068 = vector.broadcast %c17_i32_781 : i32 to vector<8x128xi32>
    %2069 = arith.shrsi %2067, %2068 : vector<8x128xi32>
    %c8_i32_782 = arith.constant 8 : i32
    %2070 = vector.broadcast %c8_i32_782 : i32 to vector<8x128xi32>
    %2071 = arith.andi %2069, %2070 : vector<8x128xi32>
    %2072 = arith.ori %2065, %2071 : vector<8x128xi32>
    %c1114112_i32_783 = arith.constant 1114112 : i32
    %2073 = vector.broadcast %c1114112_i32_783 : i32 to vector<8x128xi32>
    %2074 = arith.andi %1987, %2073 : vector<8x128xi32>
    %c16_i32_784 = arith.constant 16 : i32
    %2075 = vector.broadcast %c16_i32_784 : i32 to vector<8x128xi32>
    %2076 = arith.shrsi %2074, %2075 : vector<8x128xi32>
    %c17_i32_785 = arith.constant 17 : i32
    %2077 = vector.broadcast %c17_i32_785 : i32 to vector<8x128xi32>
    %2078 = arith.andi %2076, %2077 : vector<8x128xi32>
    %2079 = arith.ori %2072, %2078 : vector<8x128xi32>
    %c65536_i32_786 = arith.constant 65536 : i32
    %2080 = vector.broadcast %c65536_i32_786 : i32 to vector<8x128xi32>
    %2081 = arith.andi %1987, %2080 : vector<8x128xi32>
    %c15_i32_787 = arith.constant 15 : i32
    %2082 = vector.broadcast %c15_i32_787 : i32 to vector<8x128xi32>
    %2083 = arith.shrsi %2081, %2082 : vector<8x128xi32>
    %c2_i32_788 = arith.constant 2 : i32
    %2084 = vector.broadcast %c2_i32_788 : i32 to vector<8x128xi32>
    %2085 = arith.andi %2083, %2084 : vector<8x128xi32>
    %2086 = arith.ori %2079, %2085 : vector<8x128xi32>
    %c2048_i32_789 = arith.constant 2048 : i32
    %2087 = vector.broadcast %c2048_i32_789 : i32 to vector<8x128xi32>
    %2088 = arith.andi %1987, %2087 : vector<8x128xi32>
    %c5_i32_790 = arith.constant 5 : i32
    %2089 = vector.broadcast %c5_i32_790 : i32 to vector<8x128xi32>
    %2090 = arith.shrsi %2088, %2089 : vector<8x128xi32>
    %c64_i32_791 = arith.constant 64 : i32
    %2091 = vector.broadcast %c64_i32_791 : i32 to vector<8x128xi32>
    %2092 = arith.andi %2090, %2091 : vector<8x128xi32>
    %2093 = arith.ori %2086, %2092 : vector<8x128xi32>
    %c134219776_i32_792 = arith.constant 134219776 : i32
    %2094 = vector.broadcast %c134219776_i32_792 : i32 to vector<8x128xi32>
    %2095 = arith.andi %1987, %2094 : vector<8x128xi32>
    %c4_i32_793 = arith.constant 4 : i32
    %2096 = vector.broadcast %c4_i32_793 : i32 to vector<8x128xi32>
    %2097 = arith.shrsi %2095, %2096 : vector<8x128xi32>
    %c8388736_i32_794 = arith.constant 8388736 : i32
    %2098 = vector.broadcast %c8388736_i32_794 : i32 to vector<8x128xi32>
    %2099 = arith.andi %2097, %2098 : vector<8x128xi32>
    %2100 = arith.ori %2093, %2099 : vector<8x128xi32>
    %c-2147483648_i32_795 = arith.constant -2147483648 : i32
    %2101 = vector.broadcast %c-2147483648_i32_795 : i32 to vector<8x128xi32>
    %2102 = arith.andi %1987, %2101 : vector<8x128xi32>
    %c3_i32_796 = arith.constant 3 : i32
    %2103 = vector.broadcast %c3_i32_796 : i32 to vector<8x128xi32>
    %2104 = arith.shrsi %2102, %2103 : vector<8x128xi32>
    %c268435456_i32_797 = arith.constant 268435456 : i32
    %2105 = vector.broadcast %c268435456_i32_797 : i32 to vector<8x128xi32>
    %2106 = arith.andi %2104, %2105 : vector<8x128xi32>
    %2107 = arith.ori %2100, %2106 : vector<8x128xi32>
    %c4194432_i32_798 = arith.constant 4194432 : i32
    %2108 = vector.broadcast %c4194432_i32_798 : i32 to vector<8x128xi32>
    %2109 = arith.andi %1987, %2108 : vector<8x128xi32>
    %c2_i32_799 = arith.constant 2 : i32
    %2110 = vector.broadcast %c2_i32_799 : i32 to vector<8x128xi32>
    %2111 = arith.shrsi %2109, %2110 : vector<8x128xi32>
    %c1048608_i32_800 = arith.constant 1048608 : i32
    %2112 = vector.broadcast %c1048608_i32_800 : i32 to vector<8x128xi32>
    %2113 = arith.andi %2111, %2112 : vector<8x128xi32>
    %2114 = arith.ori %2107, %2113 : vector<8x128xi32>
    %c553648384_i32_801 = arith.constant 553648384 : i32
    %2115 = vector.broadcast %c553648384_i32_801 : i32 to vector<8x128xi32>
    %2116 = arith.andi %1987, %2115 : vector<8x128xi32>
    %c1_i32_802 = arith.constant 1 : i32
    %2117 = vector.broadcast %c1_i32_802 : i32 to vector<8x128xi32>
    %2118 = arith.shli %2116, %2117 : vector<8x128xi32>
    %2119 = arith.ori %2114, %2118 : vector<8x128xi32>
    %c16777472_i32_803 = arith.constant 16777472 : i32
    %2120 = vector.broadcast %c16777472_i32_803 : i32 to vector<8x128xi32>
    %2121 = arith.andi %1987, %2120 : vector<8x128xi32>
    %c2_i32_804 = arith.constant 2 : i32
    %2122 = vector.broadcast %c2_i32_804 : i32 to vector<8x128xi32>
    %2123 = arith.shli %2121, %2122 : vector<8x128xi32>
    %2124 = arith.ori %2119, %2123 : vector<8x128xi32>
    %c8192_i32_805 = arith.constant 8192 : i32
    %2125 = vector.broadcast %c8192_i32_805 : i32 to vector<8x128xi32>
    %2126 = arith.andi %1987, %2125 : vector<8x128xi32>
    %c3_i32_806 = arith.constant 3 : i32
    %2127 = vector.broadcast %c3_i32_806 : i32 to vector<8x128xi32>
    %2128 = arith.shli %2126, %2127 : vector<8x128xi32>
    %2129 = arith.ori %2124, %2128 : vector<8x128xi32>
    %c16_i32_807 = arith.constant 16 : i32
    %2130 = vector.broadcast %c16_i32_807 : i32 to vector<8x128xi32>
    %2131 = arith.andi %1987, %2130 : vector<8x128xi32>
    %c4_i32_808 = arith.constant 4 : i32
    %2132 = vector.broadcast %c4_i32_808 : i32 to vector<8x128xi32>
    %2133 = arith.shli %2131, %2132 : vector<8x128xi32>
    %2134 = arith.ori %2129, %2133 : vector<8x128xi32>
    %c4_i32_809 = arith.constant 4 : i32
    %2135 = vector.broadcast %c4_i32_809 : i32 to vector<8x128xi32>
    %2136 = arith.andi %1987, %2135 : vector<8x128xi32>
    %c12_i32_810 = arith.constant 12 : i32
    %2137 = vector.broadcast %c12_i32_810 : i32 to vector<8x128xi32>
    %2138 = arith.shli %2136, %2137 : vector<8x128xi32>
    %2139 = arith.ori %2134, %2138 : vector<8x128xi32>
    %c262148_i32_811 = arith.constant 262148 : i32
    %2140 = vector.broadcast %c262148_i32_811 : i32 to vector<8x128xi32>
    %2141 = arith.andi %1987, %2140 : vector<8x128xi32>
    %c13_i32_812 = arith.constant 13 : i32
    %2142 = vector.broadcast %c13_i32_812 : i32 to vector<8x128xi32>
    %2143 = arith.shli %2141, %2142 : vector<8x128xi32>
    %2144 = arith.ori %2139, %2143 : vector<8x128xi32>
    %c32_i32_813 = arith.constant 32 : i32
    %2145 = vector.broadcast %c32_i32_813 : i32 to vector<8x128xi32>
    %2146 = arith.andi %1987, %2145 : vector<8x128xi32>
    %c14_i32_814 = arith.constant 14 : i32
    %2147 = vector.broadcast %c14_i32_814 : i32 to vector<8x128xi32>
    %2148 = arith.shli %2146, %2147 : vector<8x128xi32>
    %2149 = arith.ori %2144, %2148 : vector<8x128xi32>
    %c2_i32_815 = arith.constant 2 : i32
    %2150 = vector.broadcast %c2_i32_815 : i32 to vector<8x128xi32>
    %2151 = arith.andi %1987, %2150 : vector<8x128xi32>
    %c26_i32_816 = arith.constant 26 : i32
    %2152 = vector.broadcast %c26_i32_816 : i32 to vector<8x128xi32>
    %2153 = arith.shli %2151, %2152 : vector<8x128xi32>
    %2154 = arith.ori %2149, %2153 : vector<8x128xi32>
    %2155 = arith.ori %51, %2154 : vector<8x128xi32>
    %2156 = arith.andi %7, %2059 : vector<8x128xi32>
    %2157 = arith.xori %4, %2156 : vector<8x128xi32>
    %2158 = arith.andi %9, %2059 : vector<8x128xi32>
    %2159 = arith.xori %5, %2158 : vector<8x128xi32>
    %2160 = arith.xori %2157, %2159 : vector<8x128xi32>
    %2161 = arith.andi %2160, %2155 : vector<8x128xi32>
    %2162 = arith.xori %2157, %2161 : vector<8x128xi32>
    %c12_i32_817 = arith.constant 12 : i32
    %c67108864_i32_818 = arith.constant 67108864 : i32
    %2163 = vector.broadcast %c67108864_i32_818 : i32 to vector<8x128xi32>
    %2164 = arith.andi %2162, %2163 : vector<8x128xi32>
    %c26_i32_819 = arith.constant 26 : i32
    %2165 = vector.broadcast %c26_i32_819 : i32 to vector<8x128xi32>
    %2166 = arith.shrsi %2164, %2165 : vector<8x128xi32>
    %c1_i32_820 = arith.constant 1 : i32
    %2167 = vector.broadcast %c1_i32_820 : i32 to vector<8x128xi32>
    %2168 = arith.andi %2166, %2167 : vector<8x128xi32>
    %c1073741824_i32_821 = arith.constant 1073741824 : i32
    %2169 = vector.broadcast %c1073741824_i32_821 : i32 to vector<8x128xi32>
    %2170 = arith.andi %2162, %2169 : vector<8x128xi32>
    %c13_i32_822 = arith.constant 13 : i32
    %2171 = vector.broadcast %c13_i32_822 : i32 to vector<8x128xi32>
    %2172 = arith.shrsi %2170, %2171 : vector<8x128xi32>
    %c131072_i32_823 = arith.constant 131072 : i32
    %2173 = vector.broadcast %c131072_i32_823 : i32 to vector<8x128xi32>
    %2174 = arith.andi %2172, %2173 : vector<8x128xi32>
    %2175 = arith.ori %2168, %2174 : vector<8x128xi32>
    %c128_i32_824 = arith.constant 128 : i32
    %2176 = vector.broadcast %c128_i32_824 : i32 to vector<8x128xi32>
    %2177 = arith.andi %2162, %2176 : vector<8x128xi32>
    %c4_i32_825 = arith.constant 4 : i32
    %2178 = vector.broadcast %c4_i32_825 : i32 to vector<8x128xi32>
    %2179 = arith.shrsi %2177, %2178 : vector<8x128xi32>
    %c8_i32_826 = arith.constant 8 : i32
    %2180 = vector.broadcast %c8_i32_826 : i32 to vector<8x128xi32>
    %2181 = arith.andi %2179, %2180 : vector<8x128xi32>
    %2182 = arith.ori %2175, %2181 : vector<8x128xi32>
    %c32768_i32_827 = arith.constant 32768 : i32
    %2183 = vector.broadcast %c32768_i32_827 : i32 to vector<8x128xi32>
    %2184 = arith.andi %2162, %2183 : vector<8x128xi32>
    %c3_i32_828 = arith.constant 3 : i32
    %2185 = vector.broadcast %c3_i32_828 : i32 to vector<8x128xi32>
    %2186 = arith.shrsi %2184, %2185 : vector<8x128xi32>
    %c4096_i32_829 = arith.constant 4096 : i32
    %2187 = vector.broadcast %c4096_i32_829 : i32 to vector<8x128xi32>
    %2188 = arith.andi %2186, %2187 : vector<8x128xi32>
    %2189 = arith.ori %2182, %2188 : vector<8x128xi32>
    %c268570632_i32_830 = arith.constant 268570632 : i32
    %2190 = vector.broadcast %c268570632_i32_830 : i32 to vector<8x128xi32>
    %2191 = arith.andi %2162, %2190 : vector<8x128xi32>
    %c2_i32_831 = arith.constant 2 : i32
    %2192 = vector.broadcast %c2_i32_831 : i32 to vector<8x128xi32>
    %2193 = arith.shrsi %2191, %2192 : vector<8x128xi32>
    %c67142658_i32_832 = arith.constant 67142658 : i32
    %2194 = vector.broadcast %c67142658_i32_832 : i32 to vector<8x128xi32>
    %2195 = arith.andi %2193, %2194 : vector<8x128xi32>
    %2196 = arith.ori %2189, %2195 : vector<8x128xi32>
    %c276959240_i32_833 = arith.constant 276959240 : i32
    %2197 = vector.broadcast %c276959240_i32_833 : i32 to vector<8x128xi32>
    %2198 = arith.andi %2162, %2197 : vector<8x128xi32>
    %c1_i32_834 = arith.constant 1 : i32
    %2199 = vector.broadcast %c1_i32_834 : i32 to vector<8x128xi32>
    %2200 = arith.shrsi %2198, %2199 : vector<8x128xi32>
    %c138479620_i32_835 = arith.constant 138479620 : i32
    %2201 = vector.broadcast %c138479620_i32_835 : i32 to vector<8x128xi32>
    %2202 = arith.andi %2200, %2201 : vector<8x128xi32>
    %2203 = arith.ori %2196, %2202 : vector<8x128xi32>
    %c8192_i32_836 = arith.constant 8192 : i32
    %2204 = vector.broadcast %c8192_i32_836 : i32 to vector<8x128xi32>
    %2205 = arith.andi %2162, %2204 : vector<8x128xi32>
    %c1_i32_837 = arith.constant 1 : i32
    %2206 = vector.broadcast %c1_i32_837 : i32 to vector<8x128xi32>
    %2207 = arith.shli %2205, %2206 : vector<8x128xi32>
    %2208 = arith.ori %2203, %2207 : vector<8x128xi32>
    %c524304_i32_838 = arith.constant 524304 : i32
    %2209 = vector.broadcast %c524304_i32_838 : i32 to vector<8x128xi32>
    %2210 = arith.andi %2162, %2209 : vector<8x128xi32>
    %c2_i32_839 = arith.constant 2 : i32
    %2211 = vector.broadcast %c2_i32_839 : i32 to vector<8x128xi32>
    %2212 = arith.shli %2210, %2211 : vector<8x128xi32>
    %2213 = arith.ori %2208, %2212 : vector<8x128xi32>
    %c2097152_i32_840 = arith.constant 2097152 : i32
    %2214 = vector.broadcast %c2097152_i32_840 : i32 to vector<8x128xi32>
    %2215 = arith.andi %2162, %2214 : vector<8x128xi32>
    %c3_i32_841 = arith.constant 3 : i32
    %2216 = vector.broadcast %c3_i32_841 : i32 to vector<8x128xi32>
    %2217 = arith.shli %2215, %2216 : vector<8x128xi32>
    %2218 = arith.ori %2213, %2217 : vector<8x128xi32>
    %c33571329_i32_842 = arith.constant 33571329 : i32
    %2219 = vector.broadcast %c33571329_i32_842 : i32 to vector<8x128xi32>
    %2220 = arith.andi %2162, %2219 : vector<8x128xi32>
    %c4_i32_843 = arith.constant 4 : i32
    %2221 = vector.broadcast %c4_i32_843 : i32 to vector<8x128xi32>
    %2222 = arith.shli %2220, %2221 : vector<8x128xi32>
    %2223 = arith.ori %2218, %2222 : vector<8x128xi32>
    %c1_i32_844 = arith.constant 1 : i32
    %2224 = vector.broadcast %c1_i32_844 : i32 to vector<8x128xi32>
    %2225 = arith.andi %2162, %2224 : vector<8x128xi32>
    %c5_i32_845 = arith.constant 5 : i32
    %2226 = vector.broadcast %c5_i32_845 : i32 to vector<8x128xi32>
    %2227 = arith.shli %2225, %2226 : vector<8x128xi32>
    %2228 = arith.ori %2223, %2227 : vector<8x128xi32>
    %c2_i32_846 = arith.constant 2 : i32
    %2229 = vector.broadcast %c2_i32_846 : i32 to vector<8x128xi32>
    %2230 = arith.andi %2162, %2229 : vector<8x128xi32>
    %c24_i32_847 = arith.constant 24 : i32
    %2231 = vector.broadcast %c24_i32_847 : i32 to vector<8x128xi32>
    %2232 = arith.shli %2230, %2231 : vector<8x128xi32>
    %2233 = arith.ori %2228, %2232 : vector<8x128xi32>
    %2234 = arith.ori %46, %2233 : vector<8x128xi32>
    %c67108864_i32_848 = arith.constant 67108864 : i32
    %2235 = vector.broadcast %c67108864_i32_848 : i32 to vector<8x128xi32>
    %2236 = arith.andi %2162, %2235 : vector<8x128xi32>
    %c24_i32_849 = arith.constant 24 : i32
    %2237 = vector.broadcast %c24_i32_849 : i32 to vector<8x128xi32>
    %2238 = arith.shrsi %2236, %2237 : vector<8x128xi32>
    %c4_i32_850 = arith.constant 4 : i32
    %2239 = vector.broadcast %c4_i32_850 : i32 to vector<8x128xi32>
    %2240 = arith.andi %2238, %2239 : vector<8x128xi32>
    %c1048576_i32_851 = arith.constant 1048576 : i32
    %2241 = vector.broadcast %c1048576_i32_851 : i32 to vector<8x128xi32>
    %2242 = arith.andi %2162, %2241 : vector<8x128xi32>
    %c17_i32_852 = arith.constant 17 : i32
    %2243 = vector.broadcast %c17_i32_852 : i32 to vector<8x128xi32>
    %2244 = arith.shrsi %2242, %2243 : vector<8x128xi32>
    %c8_i32_853 = arith.constant 8 : i32
    %2245 = vector.broadcast %c8_i32_853 : i32 to vector<8x128xi32>
    %2246 = arith.andi %2244, %2245 : vector<8x128xi32>
    %2247 = arith.ori %2240, %2246 : vector<8x128xi32>
    %c1114112_i32_854 = arith.constant 1114112 : i32
    %2248 = vector.broadcast %c1114112_i32_854 : i32 to vector<8x128xi32>
    %2249 = arith.andi %2162, %2248 : vector<8x128xi32>
    %c16_i32_855 = arith.constant 16 : i32
    %2250 = vector.broadcast %c16_i32_855 : i32 to vector<8x128xi32>
    %2251 = arith.shrsi %2249, %2250 : vector<8x128xi32>
    %c17_i32_856 = arith.constant 17 : i32
    %2252 = vector.broadcast %c17_i32_856 : i32 to vector<8x128xi32>
    %2253 = arith.andi %2251, %2252 : vector<8x128xi32>
    %2254 = arith.ori %2247, %2253 : vector<8x128xi32>
    %c65536_i32_857 = arith.constant 65536 : i32
    %2255 = vector.broadcast %c65536_i32_857 : i32 to vector<8x128xi32>
    %2256 = arith.andi %2162, %2255 : vector<8x128xi32>
    %c15_i32_858 = arith.constant 15 : i32
    %2257 = vector.broadcast %c15_i32_858 : i32 to vector<8x128xi32>
    %2258 = arith.shrsi %2256, %2257 : vector<8x128xi32>
    %c2_i32_859 = arith.constant 2 : i32
    %2259 = vector.broadcast %c2_i32_859 : i32 to vector<8x128xi32>
    %2260 = arith.andi %2258, %2259 : vector<8x128xi32>
    %2261 = arith.ori %2254, %2260 : vector<8x128xi32>
    %c2048_i32_860 = arith.constant 2048 : i32
    %2262 = vector.broadcast %c2048_i32_860 : i32 to vector<8x128xi32>
    %2263 = arith.andi %2162, %2262 : vector<8x128xi32>
    %c5_i32_861 = arith.constant 5 : i32
    %2264 = vector.broadcast %c5_i32_861 : i32 to vector<8x128xi32>
    %2265 = arith.shrsi %2263, %2264 : vector<8x128xi32>
    %c64_i32_862 = arith.constant 64 : i32
    %2266 = vector.broadcast %c64_i32_862 : i32 to vector<8x128xi32>
    %2267 = arith.andi %2265, %2266 : vector<8x128xi32>
    %2268 = arith.ori %2261, %2267 : vector<8x128xi32>
    %c134219776_i32_863 = arith.constant 134219776 : i32
    %2269 = vector.broadcast %c134219776_i32_863 : i32 to vector<8x128xi32>
    %2270 = arith.andi %2162, %2269 : vector<8x128xi32>
    %c4_i32_864 = arith.constant 4 : i32
    %2271 = vector.broadcast %c4_i32_864 : i32 to vector<8x128xi32>
    %2272 = arith.shrsi %2270, %2271 : vector<8x128xi32>
    %c8388736_i32_865 = arith.constant 8388736 : i32
    %2273 = vector.broadcast %c8388736_i32_865 : i32 to vector<8x128xi32>
    %2274 = arith.andi %2272, %2273 : vector<8x128xi32>
    %2275 = arith.ori %2268, %2274 : vector<8x128xi32>
    %c-2147483648_i32_866 = arith.constant -2147483648 : i32
    %2276 = vector.broadcast %c-2147483648_i32_866 : i32 to vector<8x128xi32>
    %2277 = arith.andi %2162, %2276 : vector<8x128xi32>
    %c3_i32_867 = arith.constant 3 : i32
    %2278 = vector.broadcast %c3_i32_867 : i32 to vector<8x128xi32>
    %2279 = arith.shrsi %2277, %2278 : vector<8x128xi32>
    %c268435456_i32_868 = arith.constant 268435456 : i32
    %2280 = vector.broadcast %c268435456_i32_868 : i32 to vector<8x128xi32>
    %2281 = arith.andi %2279, %2280 : vector<8x128xi32>
    %2282 = arith.ori %2275, %2281 : vector<8x128xi32>
    %c4194432_i32_869 = arith.constant 4194432 : i32
    %2283 = vector.broadcast %c4194432_i32_869 : i32 to vector<8x128xi32>
    %2284 = arith.andi %2162, %2283 : vector<8x128xi32>
    %c2_i32_870 = arith.constant 2 : i32
    %2285 = vector.broadcast %c2_i32_870 : i32 to vector<8x128xi32>
    %2286 = arith.shrsi %2284, %2285 : vector<8x128xi32>
    %c1048608_i32_871 = arith.constant 1048608 : i32
    %2287 = vector.broadcast %c1048608_i32_871 : i32 to vector<8x128xi32>
    %2288 = arith.andi %2286, %2287 : vector<8x128xi32>
    %2289 = arith.ori %2282, %2288 : vector<8x128xi32>
    %c553648384_i32_872 = arith.constant 553648384 : i32
    %2290 = vector.broadcast %c553648384_i32_872 : i32 to vector<8x128xi32>
    %2291 = arith.andi %2162, %2290 : vector<8x128xi32>
    %c1_i32_873 = arith.constant 1 : i32
    %2292 = vector.broadcast %c1_i32_873 : i32 to vector<8x128xi32>
    %2293 = arith.shli %2291, %2292 : vector<8x128xi32>
    %2294 = arith.ori %2289, %2293 : vector<8x128xi32>
    %c16777472_i32_874 = arith.constant 16777472 : i32
    %2295 = vector.broadcast %c16777472_i32_874 : i32 to vector<8x128xi32>
    %2296 = arith.andi %2162, %2295 : vector<8x128xi32>
    %c2_i32_875 = arith.constant 2 : i32
    %2297 = vector.broadcast %c2_i32_875 : i32 to vector<8x128xi32>
    %2298 = arith.shli %2296, %2297 : vector<8x128xi32>
    %2299 = arith.ori %2294, %2298 : vector<8x128xi32>
    %c8192_i32_876 = arith.constant 8192 : i32
    %2300 = vector.broadcast %c8192_i32_876 : i32 to vector<8x128xi32>
    %2301 = arith.andi %2162, %2300 : vector<8x128xi32>
    %c3_i32_877 = arith.constant 3 : i32
    %2302 = vector.broadcast %c3_i32_877 : i32 to vector<8x128xi32>
    %2303 = arith.shli %2301, %2302 : vector<8x128xi32>
    %2304 = arith.ori %2299, %2303 : vector<8x128xi32>
    %c16_i32_878 = arith.constant 16 : i32
    %2305 = vector.broadcast %c16_i32_878 : i32 to vector<8x128xi32>
    %2306 = arith.andi %2162, %2305 : vector<8x128xi32>
    %c4_i32_879 = arith.constant 4 : i32
    %2307 = vector.broadcast %c4_i32_879 : i32 to vector<8x128xi32>
    %2308 = arith.shli %2306, %2307 : vector<8x128xi32>
    %2309 = arith.ori %2304, %2308 : vector<8x128xi32>
    %c4_i32_880 = arith.constant 4 : i32
    %2310 = vector.broadcast %c4_i32_880 : i32 to vector<8x128xi32>
    %2311 = arith.andi %2162, %2310 : vector<8x128xi32>
    %c12_i32_881 = arith.constant 12 : i32
    %2312 = vector.broadcast %c12_i32_881 : i32 to vector<8x128xi32>
    %2313 = arith.shli %2311, %2312 : vector<8x128xi32>
    %2314 = arith.ori %2309, %2313 : vector<8x128xi32>
    %c262148_i32_882 = arith.constant 262148 : i32
    %2315 = vector.broadcast %c262148_i32_882 : i32 to vector<8x128xi32>
    %2316 = arith.andi %2162, %2315 : vector<8x128xi32>
    %c13_i32_883 = arith.constant 13 : i32
    %2317 = vector.broadcast %c13_i32_883 : i32 to vector<8x128xi32>
    %2318 = arith.shli %2316, %2317 : vector<8x128xi32>
    %2319 = arith.ori %2314, %2318 : vector<8x128xi32>
    %c32_i32_884 = arith.constant 32 : i32
    %2320 = vector.broadcast %c32_i32_884 : i32 to vector<8x128xi32>
    %2321 = arith.andi %2162, %2320 : vector<8x128xi32>
    %c14_i32_885 = arith.constant 14 : i32
    %2322 = vector.broadcast %c14_i32_885 : i32 to vector<8x128xi32>
    %2323 = arith.shli %2321, %2322 : vector<8x128xi32>
    %2324 = arith.ori %2319, %2323 : vector<8x128xi32>
    %c2_i32_886 = arith.constant 2 : i32
    %2325 = vector.broadcast %c2_i32_886 : i32 to vector<8x128xi32>
    %2326 = arith.andi %2162, %2325 : vector<8x128xi32>
    %c26_i32_887 = arith.constant 26 : i32
    %2327 = vector.broadcast %c26_i32_887 : i32 to vector<8x128xi32>
    %2328 = arith.shli %2326, %2327 : vector<8x128xi32>
    %2329 = arith.ori %2324, %2328 : vector<8x128xi32>
    %2330 = arith.ori %51, %2329 : vector<8x128xi32>
    %2331 = arith.andi %7, %2234 : vector<8x128xi32>
    %2332 = arith.xori %4, %2331 : vector<8x128xi32>
    %2333 = arith.andi %9, %2234 : vector<8x128xi32>
    %2334 = arith.xori %5, %2333 : vector<8x128xi32>
    %2335 = arith.xori %2332, %2334 : vector<8x128xi32>
    %2336 = arith.andi %2335, %2330 : vector<8x128xi32>
    %2337 = arith.xori %2332, %2336 : vector<8x128xi32>
    %c13_i32_888 = arith.constant 13 : i32
    %c67108864_i32_889 = arith.constant 67108864 : i32
    %2338 = vector.broadcast %c67108864_i32_889 : i32 to vector<8x128xi32>
    %2339 = arith.andi %2337, %2338 : vector<8x128xi32>
    %c26_i32_890 = arith.constant 26 : i32
    %2340 = vector.broadcast %c26_i32_890 : i32 to vector<8x128xi32>
    %2341 = arith.shrsi %2339, %2340 : vector<8x128xi32>
    %c1_i32_891 = arith.constant 1 : i32
    %2342 = vector.broadcast %c1_i32_891 : i32 to vector<8x128xi32>
    %2343 = arith.andi %2341, %2342 : vector<8x128xi32>
    %c1073741824_i32_892 = arith.constant 1073741824 : i32
    %2344 = vector.broadcast %c1073741824_i32_892 : i32 to vector<8x128xi32>
    %2345 = arith.andi %2337, %2344 : vector<8x128xi32>
    %c13_i32_893 = arith.constant 13 : i32
    %2346 = vector.broadcast %c13_i32_893 : i32 to vector<8x128xi32>
    %2347 = arith.shrsi %2345, %2346 : vector<8x128xi32>
    %c131072_i32_894 = arith.constant 131072 : i32
    %2348 = vector.broadcast %c131072_i32_894 : i32 to vector<8x128xi32>
    %2349 = arith.andi %2347, %2348 : vector<8x128xi32>
    %2350 = arith.ori %2343, %2349 : vector<8x128xi32>
    %c128_i32_895 = arith.constant 128 : i32
    %2351 = vector.broadcast %c128_i32_895 : i32 to vector<8x128xi32>
    %2352 = arith.andi %2337, %2351 : vector<8x128xi32>
    %c4_i32_896 = arith.constant 4 : i32
    %2353 = vector.broadcast %c4_i32_896 : i32 to vector<8x128xi32>
    %2354 = arith.shrsi %2352, %2353 : vector<8x128xi32>
    %c8_i32_897 = arith.constant 8 : i32
    %2355 = vector.broadcast %c8_i32_897 : i32 to vector<8x128xi32>
    %2356 = arith.andi %2354, %2355 : vector<8x128xi32>
    %2357 = arith.ori %2350, %2356 : vector<8x128xi32>
    %c32768_i32_898 = arith.constant 32768 : i32
    %2358 = vector.broadcast %c32768_i32_898 : i32 to vector<8x128xi32>
    %2359 = arith.andi %2337, %2358 : vector<8x128xi32>
    %c3_i32_899 = arith.constant 3 : i32
    %2360 = vector.broadcast %c3_i32_899 : i32 to vector<8x128xi32>
    %2361 = arith.shrsi %2359, %2360 : vector<8x128xi32>
    %c4096_i32_900 = arith.constant 4096 : i32
    %2362 = vector.broadcast %c4096_i32_900 : i32 to vector<8x128xi32>
    %2363 = arith.andi %2361, %2362 : vector<8x128xi32>
    %2364 = arith.ori %2357, %2363 : vector<8x128xi32>
    %c268570632_i32_901 = arith.constant 268570632 : i32
    %2365 = vector.broadcast %c268570632_i32_901 : i32 to vector<8x128xi32>
    %2366 = arith.andi %2337, %2365 : vector<8x128xi32>
    %c2_i32_902 = arith.constant 2 : i32
    %2367 = vector.broadcast %c2_i32_902 : i32 to vector<8x128xi32>
    %2368 = arith.shrsi %2366, %2367 : vector<8x128xi32>
    %c67142658_i32_903 = arith.constant 67142658 : i32
    %2369 = vector.broadcast %c67142658_i32_903 : i32 to vector<8x128xi32>
    %2370 = arith.andi %2368, %2369 : vector<8x128xi32>
    %2371 = arith.ori %2364, %2370 : vector<8x128xi32>
    %c276959240_i32_904 = arith.constant 276959240 : i32
    %2372 = vector.broadcast %c276959240_i32_904 : i32 to vector<8x128xi32>
    %2373 = arith.andi %2337, %2372 : vector<8x128xi32>
    %c1_i32_905 = arith.constant 1 : i32
    %2374 = vector.broadcast %c1_i32_905 : i32 to vector<8x128xi32>
    %2375 = arith.shrsi %2373, %2374 : vector<8x128xi32>
    %c138479620_i32_906 = arith.constant 138479620 : i32
    %2376 = vector.broadcast %c138479620_i32_906 : i32 to vector<8x128xi32>
    %2377 = arith.andi %2375, %2376 : vector<8x128xi32>
    %2378 = arith.ori %2371, %2377 : vector<8x128xi32>
    %c8192_i32_907 = arith.constant 8192 : i32
    %2379 = vector.broadcast %c8192_i32_907 : i32 to vector<8x128xi32>
    %2380 = arith.andi %2337, %2379 : vector<8x128xi32>
    %c1_i32_908 = arith.constant 1 : i32
    %2381 = vector.broadcast %c1_i32_908 : i32 to vector<8x128xi32>
    %2382 = arith.shli %2380, %2381 : vector<8x128xi32>
    %2383 = arith.ori %2378, %2382 : vector<8x128xi32>
    %c524304_i32_909 = arith.constant 524304 : i32
    %2384 = vector.broadcast %c524304_i32_909 : i32 to vector<8x128xi32>
    %2385 = arith.andi %2337, %2384 : vector<8x128xi32>
    %c2_i32_910 = arith.constant 2 : i32
    %2386 = vector.broadcast %c2_i32_910 : i32 to vector<8x128xi32>
    %2387 = arith.shli %2385, %2386 : vector<8x128xi32>
    %2388 = arith.ori %2383, %2387 : vector<8x128xi32>
    %c2097152_i32_911 = arith.constant 2097152 : i32
    %2389 = vector.broadcast %c2097152_i32_911 : i32 to vector<8x128xi32>
    %2390 = arith.andi %2337, %2389 : vector<8x128xi32>
    %c3_i32_912 = arith.constant 3 : i32
    %2391 = vector.broadcast %c3_i32_912 : i32 to vector<8x128xi32>
    %2392 = arith.shli %2390, %2391 : vector<8x128xi32>
    %2393 = arith.ori %2388, %2392 : vector<8x128xi32>
    %c33571329_i32_913 = arith.constant 33571329 : i32
    %2394 = vector.broadcast %c33571329_i32_913 : i32 to vector<8x128xi32>
    %2395 = arith.andi %2337, %2394 : vector<8x128xi32>
    %c4_i32_914 = arith.constant 4 : i32
    %2396 = vector.broadcast %c4_i32_914 : i32 to vector<8x128xi32>
    %2397 = arith.shli %2395, %2396 : vector<8x128xi32>
    %2398 = arith.ori %2393, %2397 : vector<8x128xi32>
    %c1_i32_915 = arith.constant 1 : i32
    %2399 = vector.broadcast %c1_i32_915 : i32 to vector<8x128xi32>
    %2400 = arith.andi %2337, %2399 : vector<8x128xi32>
    %c5_i32_916 = arith.constant 5 : i32
    %2401 = vector.broadcast %c5_i32_916 : i32 to vector<8x128xi32>
    %2402 = arith.shli %2400, %2401 : vector<8x128xi32>
    %2403 = arith.ori %2398, %2402 : vector<8x128xi32>
    %c2_i32_917 = arith.constant 2 : i32
    %2404 = vector.broadcast %c2_i32_917 : i32 to vector<8x128xi32>
    %2405 = arith.andi %2337, %2404 : vector<8x128xi32>
    %c24_i32_918 = arith.constant 24 : i32
    %2406 = vector.broadcast %c24_i32_918 : i32 to vector<8x128xi32>
    %2407 = arith.shli %2405, %2406 : vector<8x128xi32>
    %2408 = arith.ori %2403, %2407 : vector<8x128xi32>
    %2409 = arith.ori %46, %2408 : vector<8x128xi32>
    %c67108864_i32_919 = arith.constant 67108864 : i32
    %2410 = vector.broadcast %c67108864_i32_919 : i32 to vector<8x128xi32>
    %2411 = arith.andi %2337, %2410 : vector<8x128xi32>
    %c24_i32_920 = arith.constant 24 : i32
    %2412 = vector.broadcast %c24_i32_920 : i32 to vector<8x128xi32>
    %2413 = arith.shrsi %2411, %2412 : vector<8x128xi32>
    %c4_i32_921 = arith.constant 4 : i32
    %2414 = vector.broadcast %c4_i32_921 : i32 to vector<8x128xi32>
    %2415 = arith.andi %2413, %2414 : vector<8x128xi32>
    %c1048576_i32_922 = arith.constant 1048576 : i32
    %2416 = vector.broadcast %c1048576_i32_922 : i32 to vector<8x128xi32>
    %2417 = arith.andi %2337, %2416 : vector<8x128xi32>
    %c17_i32_923 = arith.constant 17 : i32
    %2418 = vector.broadcast %c17_i32_923 : i32 to vector<8x128xi32>
    %2419 = arith.shrsi %2417, %2418 : vector<8x128xi32>
    %c8_i32_924 = arith.constant 8 : i32
    %2420 = vector.broadcast %c8_i32_924 : i32 to vector<8x128xi32>
    %2421 = arith.andi %2419, %2420 : vector<8x128xi32>
    %2422 = arith.ori %2415, %2421 : vector<8x128xi32>
    %c1114112_i32_925 = arith.constant 1114112 : i32
    %2423 = vector.broadcast %c1114112_i32_925 : i32 to vector<8x128xi32>
    %2424 = arith.andi %2337, %2423 : vector<8x128xi32>
    %c16_i32_926 = arith.constant 16 : i32
    %2425 = vector.broadcast %c16_i32_926 : i32 to vector<8x128xi32>
    %2426 = arith.shrsi %2424, %2425 : vector<8x128xi32>
    %c17_i32_927 = arith.constant 17 : i32
    %2427 = vector.broadcast %c17_i32_927 : i32 to vector<8x128xi32>
    %2428 = arith.andi %2426, %2427 : vector<8x128xi32>
    %2429 = arith.ori %2422, %2428 : vector<8x128xi32>
    %c65536_i32_928 = arith.constant 65536 : i32
    %2430 = vector.broadcast %c65536_i32_928 : i32 to vector<8x128xi32>
    %2431 = arith.andi %2337, %2430 : vector<8x128xi32>
    %c15_i32_929 = arith.constant 15 : i32
    %2432 = vector.broadcast %c15_i32_929 : i32 to vector<8x128xi32>
    %2433 = arith.shrsi %2431, %2432 : vector<8x128xi32>
    %c2_i32_930 = arith.constant 2 : i32
    %2434 = vector.broadcast %c2_i32_930 : i32 to vector<8x128xi32>
    %2435 = arith.andi %2433, %2434 : vector<8x128xi32>
    %2436 = arith.ori %2429, %2435 : vector<8x128xi32>
    %c2048_i32_931 = arith.constant 2048 : i32
    %2437 = vector.broadcast %c2048_i32_931 : i32 to vector<8x128xi32>
    %2438 = arith.andi %2337, %2437 : vector<8x128xi32>
    %c5_i32_932 = arith.constant 5 : i32
    %2439 = vector.broadcast %c5_i32_932 : i32 to vector<8x128xi32>
    %2440 = arith.shrsi %2438, %2439 : vector<8x128xi32>
    %c64_i32_933 = arith.constant 64 : i32
    %2441 = vector.broadcast %c64_i32_933 : i32 to vector<8x128xi32>
    %2442 = arith.andi %2440, %2441 : vector<8x128xi32>
    %2443 = arith.ori %2436, %2442 : vector<8x128xi32>
    %c134219776_i32_934 = arith.constant 134219776 : i32
    %2444 = vector.broadcast %c134219776_i32_934 : i32 to vector<8x128xi32>
    %2445 = arith.andi %2337, %2444 : vector<8x128xi32>
    %c4_i32_935 = arith.constant 4 : i32
    %2446 = vector.broadcast %c4_i32_935 : i32 to vector<8x128xi32>
    %2447 = arith.shrsi %2445, %2446 : vector<8x128xi32>
    %c8388736_i32_936 = arith.constant 8388736 : i32
    %2448 = vector.broadcast %c8388736_i32_936 : i32 to vector<8x128xi32>
    %2449 = arith.andi %2447, %2448 : vector<8x128xi32>
    %2450 = arith.ori %2443, %2449 : vector<8x128xi32>
    %c-2147483648_i32_937 = arith.constant -2147483648 : i32
    %2451 = vector.broadcast %c-2147483648_i32_937 : i32 to vector<8x128xi32>
    %2452 = arith.andi %2337, %2451 : vector<8x128xi32>
    %c3_i32_938 = arith.constant 3 : i32
    %2453 = vector.broadcast %c3_i32_938 : i32 to vector<8x128xi32>
    %2454 = arith.shrsi %2452, %2453 : vector<8x128xi32>
    %c268435456_i32_939 = arith.constant 268435456 : i32
    %2455 = vector.broadcast %c268435456_i32_939 : i32 to vector<8x128xi32>
    %2456 = arith.andi %2454, %2455 : vector<8x128xi32>
    %2457 = arith.ori %2450, %2456 : vector<8x128xi32>
    %c4194432_i32_940 = arith.constant 4194432 : i32
    %2458 = vector.broadcast %c4194432_i32_940 : i32 to vector<8x128xi32>
    %2459 = arith.andi %2337, %2458 : vector<8x128xi32>
    %c2_i32_941 = arith.constant 2 : i32
    %2460 = vector.broadcast %c2_i32_941 : i32 to vector<8x128xi32>
    %2461 = arith.shrsi %2459, %2460 : vector<8x128xi32>
    %c1048608_i32_942 = arith.constant 1048608 : i32
    %2462 = vector.broadcast %c1048608_i32_942 : i32 to vector<8x128xi32>
    %2463 = arith.andi %2461, %2462 : vector<8x128xi32>
    %2464 = arith.ori %2457, %2463 : vector<8x128xi32>
    %c553648384_i32_943 = arith.constant 553648384 : i32
    %2465 = vector.broadcast %c553648384_i32_943 : i32 to vector<8x128xi32>
    %2466 = arith.andi %2337, %2465 : vector<8x128xi32>
    %c1_i32_944 = arith.constant 1 : i32
    %2467 = vector.broadcast %c1_i32_944 : i32 to vector<8x128xi32>
    %2468 = arith.shli %2466, %2467 : vector<8x128xi32>
    %2469 = arith.ori %2464, %2468 : vector<8x128xi32>
    %c16777472_i32_945 = arith.constant 16777472 : i32
    %2470 = vector.broadcast %c16777472_i32_945 : i32 to vector<8x128xi32>
    %2471 = arith.andi %2337, %2470 : vector<8x128xi32>
    %c2_i32_946 = arith.constant 2 : i32
    %2472 = vector.broadcast %c2_i32_946 : i32 to vector<8x128xi32>
    %2473 = arith.shli %2471, %2472 : vector<8x128xi32>
    %2474 = arith.ori %2469, %2473 : vector<8x128xi32>
    %c8192_i32_947 = arith.constant 8192 : i32
    %2475 = vector.broadcast %c8192_i32_947 : i32 to vector<8x128xi32>
    %2476 = arith.andi %2337, %2475 : vector<8x128xi32>
    %c3_i32_948 = arith.constant 3 : i32
    %2477 = vector.broadcast %c3_i32_948 : i32 to vector<8x128xi32>
    %2478 = arith.shli %2476, %2477 : vector<8x128xi32>
    %2479 = arith.ori %2474, %2478 : vector<8x128xi32>
    %c16_i32_949 = arith.constant 16 : i32
    %2480 = vector.broadcast %c16_i32_949 : i32 to vector<8x128xi32>
    %2481 = arith.andi %2337, %2480 : vector<8x128xi32>
    %c4_i32_950 = arith.constant 4 : i32
    %2482 = vector.broadcast %c4_i32_950 : i32 to vector<8x128xi32>
    %2483 = arith.shli %2481, %2482 : vector<8x128xi32>
    %2484 = arith.ori %2479, %2483 : vector<8x128xi32>
    %c4_i32_951 = arith.constant 4 : i32
    %2485 = vector.broadcast %c4_i32_951 : i32 to vector<8x128xi32>
    %2486 = arith.andi %2337, %2485 : vector<8x128xi32>
    %c12_i32_952 = arith.constant 12 : i32
    %2487 = vector.broadcast %c12_i32_952 : i32 to vector<8x128xi32>
    %2488 = arith.shli %2486, %2487 : vector<8x128xi32>
    %2489 = arith.ori %2484, %2488 : vector<8x128xi32>
    %c262148_i32_953 = arith.constant 262148 : i32
    %2490 = vector.broadcast %c262148_i32_953 : i32 to vector<8x128xi32>
    %2491 = arith.andi %2337, %2490 : vector<8x128xi32>
    %c13_i32_954 = arith.constant 13 : i32
    %2492 = vector.broadcast %c13_i32_954 : i32 to vector<8x128xi32>
    %2493 = arith.shli %2491, %2492 : vector<8x128xi32>
    %2494 = arith.ori %2489, %2493 : vector<8x128xi32>
    %c32_i32_955 = arith.constant 32 : i32
    %2495 = vector.broadcast %c32_i32_955 : i32 to vector<8x128xi32>
    %2496 = arith.andi %2337, %2495 : vector<8x128xi32>
    %c14_i32_956 = arith.constant 14 : i32
    %2497 = vector.broadcast %c14_i32_956 : i32 to vector<8x128xi32>
    %2498 = arith.shli %2496, %2497 : vector<8x128xi32>
    %2499 = arith.ori %2494, %2498 : vector<8x128xi32>
    %c2_i32_957 = arith.constant 2 : i32
    %2500 = vector.broadcast %c2_i32_957 : i32 to vector<8x128xi32>
    %2501 = arith.andi %2337, %2500 : vector<8x128xi32>
    %c26_i32_958 = arith.constant 26 : i32
    %2502 = vector.broadcast %c26_i32_958 : i32 to vector<8x128xi32>
    %2503 = arith.shli %2501, %2502 : vector<8x128xi32>
    %2504 = arith.ori %2499, %2503 : vector<8x128xi32>
    %2505 = arith.ori %51, %2504 : vector<8x128xi32>
    %2506 = arith.andi %7, %2409 : vector<8x128xi32>
    %2507 = arith.xori %4, %2506 : vector<8x128xi32>
    %2508 = arith.andi %9, %2409 : vector<8x128xi32>
    %2509 = arith.xori %5, %2508 : vector<8x128xi32>
    %2510 = arith.xori %2507, %2509 : vector<8x128xi32>
    %2511 = arith.andi %2510, %2505 : vector<8x128xi32>
    %2512 = arith.xori %2507, %2511 : vector<8x128xi32>
    %c21_i32 = arith.constant 21 : i32
    %2513 = vector.broadcast %c21_i32 : i32 to vector<8x128xi32>
    %2514 = arith.shrsi %2512, %2513 : vector<8x128xi32>
    %c1_i32_959 = arith.constant 1 : i32
    %2515 = vector.broadcast %c1_i32_959 : i32 to vector<8x128xi32>
    %2516 = arith.andi %2514, %2515 : vector<8x128xi32>
    %c0_i32_960 = arith.constant 0 : i32
    %2517 = vector.broadcast %c0_i32_960 : i32 to vector<8x128xi32>
    %2518 = arith.cmpi ne, %2516, %2517 : vector<8x128xi32>
    %c27_i32 = arith.constant 27 : i32
    %2519 = vector.broadcast %c27_i32 : i32 to vector<8x128xi32>
    %2520 = arith.shrsi %2512, %2519 : vector<8x128xi32>
    %c1_i32_961 = arith.constant 1 : i32
    %2521 = vector.broadcast %c1_i32_961 : i32 to vector<8x128xi32>
    %2522 = arith.andi %2520, %2521 : vector<8x128xi32>
    %c0_i32_962 = arith.constant 0 : i32
    %2523 = vector.broadcast %c0_i32_962 : i32 to vector<8x128xi32>
    %2524 = arith.cmpi ne, %2522, %2523 : vector<8x128xi32>
    %2525 = vector.broadcast %16 : f32 to vector<8x128xf32>
    %2526 = vector.broadcast %15 : f32 to vector<8x128xf32>
    %2527 = arith.select %2518, %2525, %2526 : vector<8x128xi1>, vector<8x128xf32>
    %2528 = vector.broadcast %14 : f32 to vector<8x128xf32>
    %2529 = vector.broadcast %13 : f32 to vector<8x128xf32>
    %2530 = arith.select %2518, %2528, %2529 : vector<8x128xi1>, vector<8x128xf32>
    %2531 = arith.select %2524, %2527, %2530 : vector<8x128xi1>, vector<8x128xf32>
    %c0_963 = arith.constant 0 : index
    %2532 = arith.index_cast %24 : i32 to index
    %c0_964 = arith.constant 0 : index
    %c0_965 = arith.constant 0 : index
    %2533 = vector.load %arg4[%c0_963, %2532, %c0_964, %c0_965] : memref<3x1x8x128xf32, #tpu.memory_space<vmem>>, vector<1x1x8x128xf32>
    %2534 = vector.shape_cast %2533 : vector<1x1x8x128xf32> to vector<8x128xf32>
    %2535 = vector.shape_cast %2531 : vector<8x128xf32> to vector<1x1x8x128xf32>
    tpu.vector_store %arg4[%c0_963, %2532, %c0_964, %c0_965], %2535 {strides = array<i32>} : memref<3x1x8x128xf32, #tpu.memory_space<vmem>>, vector<1x1x8x128xf32>,
    %c23_i32 = arith.constant 23 : i32
    %2536 = vector.broadcast %c23_i32 : i32 to vector<8x128xi32>
    %2537 = arith.shrsi %2512, %2536 : vector<8x128xi32>
    %c1_i32_966 = arith.constant 1 : i32
    %2538 = vector.broadcast %c1_i32_966 : i32 to vector<8x128xi32>
    %2539 = arith.andi %2537, %2538 : vector<8x128xi32>
    %c0_i32_967 = arith.constant 0 : i32
    %2540 = vector.broadcast %c0_i32_967 : i32 to vector<8x128xi32>
    %2541 = arith.cmpi ne, %2539, %2540 : vector<8x128xi32>
    %c19_i32 = arith.constant 19 : i32
    %2542 = vector.broadcast %c19_i32 : i32 to vector<8x128xi32>
    %2543 = arith.shrsi %2512, %2542 : vector<8x128xi32>
    %c1_i32_968 = arith.constant 1 : i32
    %2544 = vector.broadcast %c1_i32_968 : i32 to vector<8x128xi32>
    %2545 = arith.andi %2543, %2544 : vector<8x128xi32>
    %c0_i32_969 = arith.constant 0 : i32
    %2546 = vector.broadcast %c0_i32_969 : i32 to vector<8x128xi32>
    %2547 = arith.cmpi ne, %2545, %2546 : vector<8x128xi32>
    %2548 = vector.broadcast %20 : f32 to vector<8x128xf32>
    %2549 = vector.broadcast %19 : f32 to vector<8x128xf32>
    %2550 = arith.select %2541, %2548, %2549 : vector<8x128xi1>, vector<8x128xf32>
    %2551 = vector.broadcast %18 : f32 to vector<8x128xf32>
    %2552 = vector.broadcast %17 : f32 to vector<8x128xf32>
    %2553 = arith.select %2541, %2551, %2552 : vector<8x128xi1>, vector<8x128xf32>
    %2554 = arith.select %2547, %2550, %2553 : vector<8x128xi1>, vector<8x128xf32>
    %c1_970 = arith.constant 1 : index
    %2555 = arith.index_cast %24 : i32 to index
    %c0_971 = arith.constant 0 : index
    %c0_972 = arith.constant 0 : index
    %2556 = vector.load %arg4[%c1_970, %2555, %c0_971, %c0_972] : memref<3x1x8x128xf32, #tpu.memory_space<vmem>>, vector<1x1x8x128xf32>
    %2557 = vector.shape_cast %2556 : vector<1x1x8x128xf32> to vector<8x128xf32>
    %2558 = vector.shape_cast %2554 : vector<8x128xf32> to vector<1x1x8x128xf32>
    tpu.vector_store %arg4[%c1_970, %2555, %c0_971, %c0_972], %2558 {strides = array<i32>} : memref<3x1x8x128xf32, #tpu.memory_space<vmem>>, vector<1x1x8x128xf32>,
    %c6_i32_973 = arith.constant 6 : i32
    %2559 = vector.broadcast %c6_i32_973 : i32 to vector<8x128xi32>
    %2560 = arith.shrsi %2512, %2559 : vector<8x128xi32>
    %c1_i32_974 = arith.constant 1 : i32
    %2561 = vector.broadcast %c1_i32_974 : i32 to vector<8x128xi32>
    %2562 = arith.andi %2560, %2561 : vector<8x128xi32>
    %c0_i32_975 = arith.constant 0 : i32
    %2563 = vector.broadcast %c0_i32_975 : i32 to vector<8x128xi32>
    %2564 = arith.cmpi ne, %2562, %2563 : vector<8x128xi32>
    %2565 = vector.broadcast %22 : f32 to vector<8x128xf32>
    %2566 = vector.broadcast %21 : f32 to vector<8x128xf32>
    %2567 = arith.select %2564, %2565, %2566 : vector<8x128xi1>, vector<8x128xf32>
    %c2_976 = arith.constant 2 : index
    %2568 = arith.index_cast %24 : i32 to index
    %c0_977 = arith.constant 0 : index
    %c0_978 = arith.constant 0 : index
    %2569 = vector.load %arg4[%c2_976, %2568, %c0_977, %c0_978] : memref<3x1x8x128xf32, #tpu.memory_space<vmem>>, vector<1x1x8x128xf32>
    %2570 = vector.shape_cast %2569 : vector<1x1x8x128xf32> to vector<8x128xf32>
    %2571 = vector.shape_cast %2567 : vector<8x128xf32> to vector<1x1x8x128xf32>
    tpu.vector_store %arg4[%c2_976, %2568, %c0_977, %c0_978], %2571 {strides = array<i32>} : memref<3x1x8x128xf32, #tpu.memory_space<vmem>>, vector<1x1x8x128xf32>,
    %c1_i32_979 = arith.constant 1 : i32
    return
  }
  func.func @transform_0(%arg0: i32) -> i32 {
    %c0_i32 = arith.constant 0 : i32
    %c0_i32_0 = arith.constant 0 : i32
    return %c0_i32 : i32
  }
  func.func @transform_1(%arg0: i32) -> i32 {
    %c0_i32 = arith.constant 0 : i32
    %c0_i32_0 = arith.constant 0 : i32
    return %c0_i32 : i32
  }
  func.func @transform_2(%arg0: i32) -> (i32, i32, i32, i32) {
    %c0_i32 = arith.constant 0 : i32
    %c0_i32_0 = arith.constant 0 : i32
    %c0_i32_1 = arith.constant 0 : i32
    %c0_i32_2 = arith.constant 0 : i32
    return %c0_i32, %arg0, %c0_i32_0, %c0_i32_1 : i32, i32, i32, i32
  }
  func.func @transform_3(%arg0: i32) -> (i32, i32, i32, i32) {
    %c0_i32 = arith.constant 0 : i32
    %c0_i32_0 = arith.constant 0 : i32
    %c0_i32_1 = arith.constant 0 : i32
    %c0_i32_2 = arith.constant 0 : i32
    return %c0_i32, %arg0, %c0_i32_0, %c0_i32_1 : i32, i32, i32, i32
  }
}

</mosaic_0001>

<llo_original>
// kernel: tpu_custom_call.1
$region0: #{tpu_custom_call.1}
  #allocation0 [shape = 'u32[]', space=smem, size = 0x4, offset = 0x4, fixed_abs, tag = 'smem constant byte address 0x4 - core index']
  #allocation1 [shape = 'u32[144,128]{1,0:T(1,128)}', space=vmem, size = 0x12000, scoped, tag = 'internal scratch']
  %s0 = inlined_call_operand.hbm [shape: s32[12], index: 0, kind: input, shape index: {}]
  %s1 = inlined_call_operand.vmem [shape: f32[180], index: 1, kind: input, shape index: {}]
  %s2 = inlined_call_operand.hbm [shape: f32[2,1,8,128], index: 2, kind: input, shape index: {}]
  %s3 = inlined_call_operand.hbm [shape: f32[3,1,8,128], index: 3, kind: output, shape index: {}]
  %s4 = sld [smem:[#allocation0]]
  $region34: #{tpu_custom_call.1} parent=0
    _
  %s6 = ssub.s32 1, %s4
  %s7 = scalar_select 0, %s6, %s4
  $region1: #{tpu_custom_call.1} parent=0
    #allocation2 [shape = 'u8[512]{0}', space=smem, size = 0x200, scoped, tag = 'input window, operand 0, single buffered']
    #allocation3 [shape = 's32[1]{0}', space=sflag, size = 0x4, scoped, tag = 'scoped memory for tpu_custom_call.1']
    #allocation4 [shape = 's32[1]{0}', space=sflag, size = 0x4, scoped, tag = 'scoped memory for tpu_custom_call.1']
    #allocation5 [shape = 's32[1]{0}', space=sflag, size = 0x4, scoped, tag = 'scoped memory for tpu_custom_call.1']
    #allocation6 [shape = 's32[1]{0}', space=sflag, size = 0x4, scoped, tag = 'scoped memory for tpu_custom_call.1']
    #allocation7 [shape = 'u8[1024]{0}', space=smem, size = 0x400, scoped, tag = 'input window, operand 1, single buffered']
    #allocation8 [shape = 'u8[8192]{0}', space=vmem, size = 0x2000, scoped, tag = 'input window, operand 2, single buffered']
    #allocation9 [shape = 'u8[12288]{0}', space=vmem, size = 0x3000, scoped, tag = 'output window, operand 0, single buffered']
    %8 = vsyncpa [#allocation5], 0
    %9 = vsyncpa [#allocation6], 0
    %10 = vsyncpa [#allocation3], 0
    %11 = vsyncpa [#allocation4], 0
    // Predicated region
    $region2: #{tpu_custom_call.1} parent=1 // pred_check
      _
    $region3: #{tpu_custom_call.1} parent=1 // pred_check_branch
      %13 = sbr.rel (0) target = $region5
    $region4: #{tpu_custom_call.1} parent=1 // pred_region
      %s15 = ssub.s32 16, 16
      %16 = vsyncadd [#allocation5], %s15
      %19 = dma.hbm_to_smem %s0, 16, [#allocation2], [#allocation5]
    $region5: #{tpu_custom_call.1} parent=1 // pred_fallthru
      _
    // Predicated region
    $region6: #{tpu_custom_call.1} parent=1 // pred_check
      _
    $region7: #{tpu_custom_call.1} parent=1 // pred_check_branch
      %21 = sbr.rel (0) target = $region9
    $region8: #{tpu_custom_call.1} parent=1 // pred_region
      %s23 = ssub.s32 32, 32
      %24 = vsyncadd [#allocation6], %s23
      %s26 = sshll.u32 %s1, 4
      %s27 = int_to_ptr.vmem [resolvable:$true] %s26
      %29 = dma.vmem_to_smem %s27, 32, [#allocation7], [#allocation6]
    $region9: #{tpu_custom_call.1} parent=1 // pred_fallthru
      _
    // Predicated region
    $region10: #{tpu_custom_call.1} parent=1 // pred_check
      _
    $region11: #{tpu_custom_call.1} parent=1 // pred_check_branch
      %31 = sbr.rel (0) target = $region13
    $region12: #{tpu_custom_call.1} parent=1 // pred_region
      %s33 = ssub.s32 256, 256
      %34 = vsyncadd [#allocation3], %s33
      %s35 = sshll.u32 [#allocation8], 4
      %s36 = int_to_ptr.vmem [resolvable:$true] %s35
      %41 = dma.hbm_to_vmem [thread:$0]  %s2, 256, %s36, [#allocation3], 128, 128, 8
    $region13: #{tpu_custom_call.1} parent=1 // pred_fallthru
      _
    // Predicated region
    $region14: #{tpu_custom_call.1} parent=1 // pred_check
      _
    $region15: #{tpu_custom_call.1} parent=1 // pred_check_branch
      %43 = sbr.rel (0) target = $region17
    $region16: #{tpu_custom_call.1} parent=1 // pred_region
      %44 = dma.done [#allocation5], 16
    $region17: #{tpu_custom_call.1} parent=1 // pred_fallthru
      _
    // Predicated region
    $region18: #{tpu_custom_call.1} parent=1 // pred_check
      _
    $region19: #{tpu_custom_call.1} parent=1 // pred_check_branch
      %46 = sbr.rel (0) target = $region21
    $region20: #{tpu_custom_call.1} parent=1 // pred_region
      %47 = dma.done [#allocation6], 32
    $region21: #{tpu_custom_call.1} parent=1 // pred_fallthru
      _
    // Predicated region
    $region22: #{tpu_custom_call.1} parent=1 // pred_check
      _
    $region23: #{tpu_custom_call.1} parent=1 // pred_check_branch
      %49 = sbr.rel (0) target = $region25
    $region24: #{tpu_custom_call.1} parent=1 // pred_region
      %50 = dma.done [#allocation3], 256
    $region25: #{tpu_custom_call.1} parent=1 // pred_fallthru
      _
    %51 = sfence
    %s52 = sld [smem:[#allocation2]]
    %s53 = sld [smem:[#allocation2 + $0x1]]
    %s54 = sld [smem:[#allocation2 + $0x2]]
    %s55 = sld [smem:[#allocation2 + $0x3]]
    %v56 = vstv %s52
    %v57 = vstv %s54
    %s58 = sxor.u32 %s52, %s53
    %v59 = vstv %s58
    %s60 = sxor.u32 %s54, %s55
    %v61 = vstv %s60
    %s62 = sld [smem:[#allocation2 + $0x4]]
    %s63 = sld [smem:[#allocation2 + $0x6]]
    %s64 = sld [smem:[#allocation2 + $0x8]]
    %s65 = sld [smem:[#allocation7 + $0x88]]
    %s66 = sld [smem:[#allocation7 + $0x89]]
    %s67 = sld [smem:[#allocation7 + $0x8a]]
    %s68 = sld [smem:[#allocation7 + $0x8b]]
    %s69 = sld [smem:[#allocation7 + $0x80]]
    %s70 = sld [smem:[#allocation7 + $0x81]]
    %s71 = sld [smem:[#allocation7 + $0x82]]
    %s72 = sld [smem:[#allocation7 + $0x83]]
    %s73 = sld [smem:[#allocation7 + $0x5c]]
    %s74 = sld [smem:[#allocation7 + $0x5d]]
    %v75 = vld [vmem:[#allocation8] sm:$0xff]
    %s76 = scalar_lea.vmem [#allocation8], 8
    %v77 = vld [vmem:[%s76] sm:$0xff]
    %vm78 = vcmp.gt.f32.partialorder %v75, 0.0
    %v79 = vsel %vm78, 1, 0
    %vm80 = vcmp.gt.f32.partialorder %v77, 0.0
    %v81 = vsel %vm80, 1, 0
    %s82 = ssub.s32 %s63, %s62
    %v83 = vstv %s82
    %v84 = vmul.u32 %v83, %v79
    %v85 = vstv %s62
    %v86 = vadd.s32 %v85, %v84
    %v87 = vmul.u32 %v86, 512
    %s88 = smul.u32 %s64, 384
    %v89 = vstv %s88
    %v90 = vor.u32 %v87, %v89
    %v91 = vmul.u32 %v81, 12288
    %v92 = vmul.u32 %v86, 2048
    %v93 = vor.u32 %v91, %v92
    %v94 = vxor.u32 %v56, %v57
    %v95 = vand.u32 %v94, %v91
    %v96 = vxor.u32 %v56, %v95
    %v97 = vand.u32 %v96, 67108864
    %v98 = vshra.s32 %v97, 26
    %v99 = vand.u32 %v98, 1
    %v100 = vand.u32 %v96, 1073741824
    %v101 = vshra.s32 %v100, 13
    %v102 = vand.u32 %v101, 131072
    %v103 = vor.u32 %v99, %v102
    %v104 = vand.u32 %v96, 128
    %v105 = vshra.s32 %v104, 4
    %v106 = vand.u32 %v105, 8
    %v107 = vor.u32 %v103, %v106
    %v108 = vand.u32 %v96, 32768
    %v109 = vshra.s32 %v108, 3
    %v110 = vand.u32 %v109, 4096
    %v111 = vor.u32 %v107, %v110
    %v112 = vand.u32 %v96, 268570632
    %v113 = vshra.s32 %v112, 2
    %v114 = vand.u32 %v113, 67142658
    %v115 = vor.u32 %v111, %v114
    %v116 = vand.u32 %v96, 276959240
    %v117 = vshra.s32 %v116, 1
    %v118 = vand.u32 %v117, 138479620
    %v119 = vor.u32 %v115, %v118
    %v120 = vand.u32 %v96, 8192
    %v121 = vshll.u32 %v120, 1
    %v122 = vor.u32 %v119, %v121
    %v123 = vand.u32 %v96, 524304
    %v124 = vshll.u32 %v123, 2
    %v125 = vor.u32 %v122, %v124
    %v126 = vand.u32 %v96, 2097152
    %v127 = vshll.u32 %v126, 3
    %v128 = vor.u32 %v125, %v127
    %v129 = vand.u32 %v96, 33571329
    %v130 = vshll.u32 %v129, 4
    %v131 = vor.u32 %v128, %v130
    %v132 = vand.u32 %v96, 1
    %v133 = vshll.u32 %v132, 5
    %v134 = vor.u32 %v131, %v133
    %v135 = vand.u32 %v96, 2
    %v136 = vshll.u32 %v135, 24
    %v137 = vor.u32 %v134, %v136
    %v138 = vor.u32 %v90, %v137
    %v139 = vshra.s32 %v97, 24
    %v140 = vand.u32 %v139, 4
    %v141 = vand.u32 %v96, 1048576
    %v142 = vshra.s32 %v141, 17
    %v143 = vand.u32 %v142, 8
    %v144 = vor.u32 %v140, %v143
    %v145 = vand.u32 %v96, 1114112
    %v146 = vshra.s32 %v145, 16
    %v147 = vand.u32 %v146, 17
    %v148 = vor.u32 %v144, %v147
    %v149 = vand.u32 %v96, 65536
    %v150 = vshra.s32 %v149, 15
    %v151 = vand.u32 %v150, 2
    %v152 = vor.u32 %v148, %v151
    %v153 = vand.u32 %v96, 2048
    %v154 = vshra.s32 %v153, 5
    %v155 = vand.u32 %v154, 64
    %v156 = vor.u32 %v152, %v155
    %v157 = vand.u32 %v96, 134219776
    %v158 = vshra.s32 %v157, 4
    %v159 = vand.u32 %v158, 8388736
    %v160 = vor.u32 %v156, %v159
    %v161 = vand.u32 %v96, 2147483648
    %v162 = vshra.s32 %v161, 3
    %v163 = vand.u32 %v162, 268435456
    %v164 = vor.u32 %v160, %v163
    %v165 = vand.u32 %v96, 4194432
    %v166 = vshra.s32 %v165, 2
    %v167 = vand.u32 %v166, 1048608
    %v168 = vor.u32 %v164, %v167
    %v169 = vand.u32 %v96, 553648384
    %v170 = vshll.u32 %v169, 1
    %v171 = vor.u32 %v168, %v170
    %v172 = vand.u32 %v96, 16777472
    %v173 = vshll.u32 %v172, 2
    %v174 = vor.u32 %v171, %v173
    %v175 = vshll.u32 %v120, 3
    %v176 = vor.u32 %v174, %v175
    %v177 = vand.u32 %v96, 16
    %v178 = vshll.u32 %v177, 4
    %v179 = vor.u32 %v176, %v178
    %v180 = vand.u32 %v96, 4
    %v181 = vshll.u32 %v180, 12
    %v182 = vor.u32 %v179, %v181
    %v183 = vand.u32 %v96, 262148
    %v184 = vshll.u32 %v183, 13
    %v185 = vor.u32 %v182, %v184
    %v186 = vand.u32 %v96, 32
    %v187 = vshll.u32 %v186, 14
    %v188 = vor.u32 %v185, %v187
    %v189 = vshll.u32 %v135, 26
    %v190 = vor.u32 %v188, %v189
    %v191 = vor.u32 %v93, %v190
    %v192 = vand.u32 %v59, %v138
    %v193 = vxor.u32 %v56, %v192
    %v194 = vand.u32 %v61, %v138
    %v195 = vxor.u32 %v57, %v194
    %v196 = vxor.u32 %v193, %v195
    %v197 = vand.u32 %v196, %v191
    %v198 = vxor.u32 %v193, %v197
    %v199 = vand.u32 %v198, 67108864
    %v200 = vshra.s32 %v199, 26
    %v201 = vand.u32 %v200, 1
    %v202 = vand.u32 %v198, 1073741824
    %v203 = vshra.s32 %v202, 13
    %v204 = vand.u32 %v203, 131072
    %v205 = vor.u32 %v201, %v204
    %v206 = vand.u32 %v198, 128
    %v207 = vshra.s32 %v206, 4
    %v208 = vand.u32 %v207, 8
    %v209 = vor.u32 %v205, %v208
    %v210 = vand.u32 %v198, 32768
    %v211 = vshra.s32 %v210, 3
    %v212 = vand.u32 %v211, 4096
    %v213 = vor.u32 %v209, %v212
    %v214 = vand.u32 %v198, 268570632
    %v215 = vshra.s32 %v214, 2
    %v216 = vand.u32 %v215, 67142658
    %v217 = vor.u32 %v213, %v216
    %v218 = vand.u32 %v198, 276959240
    %v219 = vshra.s32 %v218, 1
    %v220 = vand.u32 %v219, 138479620
    %v221 = vor.u32 %v217, %v220
    %v222 = vand.u32 %v198, 8192
    %v223 = vshll.u32 %v222, 1
    %v224 = vor.u32 %v221, %v223
    %v225 = vand.u32 %v198, 524304
    %v226 = vshll.u32 %v225, 2
    %v227 = vor.u32 %v224, %v226
    %v228 = vand.u32 %v198, 2097152
    %v229 = vshll.u32 %v228, 3
    %v230 = vor.u32 %v227, %v229
    %v231 = vand.u32 %v198, 33571329
    %v232 = vshll.u32 %v231, 4
    %v233 = vor.u32 %v230, %v232
    %v234 = vand.u32 %v198, 1
    %v235 = vshll.u32 %v234, 5
    %v236 = vor.u32 %v233, %v235
    %v237 = vand.u32 %v198, 2
    %v238 = vshll.u32 %v237, 24
    %v239 = vor.u32 %v236, %v238
    %v240 = vor.u32 %v90, %v239
    %v241 = vshra.s32 %v199, 24
    %v242 = vand.u32 %v241, 4
    %v243 = vand.u32 %v198, 1048576
    %v244 = vshra.s32 %v243, 17
    %v245 = vand.u32 %v244, 8
    %v246 = vor.u32 %v242, %v245
    %v247 = vand.u32 %v198, 1114112
    %v248 = vshra.s32 %v247, 16
    %v249 = vand.u32 %v248, 17
    %v250 = vor.u32 %v246, %v249
    %v251 = vand.u32 %v198, 65536
    %v252 = vshra.s32 %v251, 15
    %v253 = vand.u32 %v252, 2
    %v254 = vor.u32 %v250, %v253
    %v255 = vand.u32 %v198, 2048
    %v256 = vshra.s32 %v255, 5
    %v257 = vand.u32 %v256, 64
    %v258 = vor.u32 %v254, %v257
    %v259 = vand.u32 %v198, 134219776
    %v260 = vshra.s32 %v259, 4
    %v261 = vand.u32 %v260, 8388736
    %v262 = vor.u32 %v258, %v261
    %v263 = vand.u32 %v198, 2147483648
    %v264 = vshra.s32 %v263, 3
    %v265 = vand.u32 %v264, 268435456
    %v266 = vor.u32 %v262, %v265
    %v267 = vand.u32 %v198, 4194432
    %v268 = vshra.s32 %v267, 2
    %v269 = vand.u32 %v268, 1048608
    %v270 = vor.u32 %v266, %v269
    %v271 = vand.u32 %v198, 553648384
    %v272 = vshll.u32 %v271, 1
    %v273 = vor.u32 %v270, %v272
    %v274 = vand.u32 %v198, 16777472
    %v275 = vshll.u32 %v274, 2
    %v276 = vor.u32 %v273, %v275
    %v277 = vshll.u32 %v222, 3
    %v278 = vor.u32 %v276, %v277
    %v279 = vand.u32 %v198, 16
    %v280 = vshll.u32 %v279, 4
    %v281 = vor.u32 %v278, %v280
    %v282 = vand.u32 %v198, 4
    %v283 = vshll.u32 %v282, 12
    %v284 = vor.u32 %v281, %v283
    %v285 = vand.u32 %v198, 262148
    %v286 = vshll.u32 %v285, 13
    %v287 = vor.u32 %v284, %v286
    %v288 = vand.u32 %v198, 32
    %v289 = vshll.u32 %v288, 14
    %v290 = vor.u32 %v287, %v289
    %v291 = vshll.u32 %v237, 26
    %v292 = vor.u32 %v290, %v291
    %v293 = vor.u32 %v93, %v292
    %v294 = vand.u32 %v59, %v240
    %v295 = vxor.u32 %v56, %v294
    %v296 = vand.u32 %v61, %v240
    %v297 = vxor.u32 %v57, %v296
    %v298 = vxor.u32 %v295, %v297
    %v299 = vand.u32 %v298, %v293
    %v300 = vxor.u32 %v295, %v299
    %v301 = vand.u32 %v300, 67108864
    %v302 = vshra.s32 %v301, 26
    %v303 = vand.u32 %v302, 1
    %v304 = vand.u32 %v300, 1073741824
    %v305 = vshra.s32 %v304, 13
    %v306 = vand.u32 %v305, 131072
    %v307 = vor.u32 %v303, %v306
    %v308 = vand.u32 %v300, 128
    %v309 = vshra.s32 %v308, 4
    %v310 = vand.u32 %v309, 8
    %v311 = vor.u32 %v307, %v310
    %v312 = vand.u32 %v300, 32768
    %v313 = vshra.s32 %v312, 3
    %v314 = vand.u32 %v313, 4096
    %v315 = vor.u32 %v311, %v314
    %v316 = vand.u32 %v300, 268570632
    %v317 = vshra.s32 %v316, 2
    %v318 = vand.u32 %v317, 67142658
    %v319 = vor.u32 %v315, %v318
    %v320 = vand.u32 %v300, 276959240
    %v321 = vshra.s32 %v320, 1
    %v322 = vand.u32 %v321, 138479620
    %v323 = vor.u32 %v319, %v322
    %v324 = vand.u32 %v300, 8192
    %v325 = vshll.u32 %v324, 1
    %v326 = vor.u32 %v323, %v325
    %v327 = vand.u32 %v300, 524304
    %v328 = vshll.u32 %v327, 2
    %v329 = vor.u32 %v326, %v328
    %v330 = vand.u32 %v300, 2097152
    %v331 = vshll.u32 %v330, 3
    %v332 = vor.u32 %v329, %v331
    %v333 = vand.u32 %v300, 33571329
    %v334 = vshll.u32 %v333, 4
    %v335 = vor.u32 %v332, %v334
    %v336 = vand.u32 %v300, 1
    %v337 = vshll.u32 %v336, 5
    %v338 = vor.u32 %v335, %v337
    %v339 = vand.u32 %v300, 2
    %v340 = vshll.u32 %v339, 24
    %v341 = vor.u32 %v338, %v340
    %v342 = vor.u32 %v90, %v341
    %v343 = vshra.s32 %v301, 24
    %v344 = vand.u32 %v343, 4
    %v345 = vand.u32 %v300, 1048576
    %v346 = vshra.s32 %v345, 17
    %v347 = vand.u32 %v346, 8
    %v348 = vor.u32 %v344, %v347
    %v349 = vand.u32 %v300, 1114112
    %v350 = vshra.s32 %v349, 16
    %v351 = vand.u32 %v350, 17
    %v352 = vor.u32 %v348, %v351
    %v353 = vand.u32 %v300, 65536
    %v354 = vshra.s32 %v353, 15
    %v355 = vand.u32 %v354, 2
    %v356 = vor.u32 %v352, %v355
    %v357 = vand.u32 %v300, 2048
    %v358 = vshra.s32 %v357, 5
    %v359 = vand.u32 %v358, 64
    %v360 = vor.u32 %v356, %v359
    %v361 = vand.u32 %v300, 134219776
    %v362 = vshra.s32 %v361, 4
    %v363 = vand.u32 %v362, 8388736
    %v364 = vor.u32 %v360, %v363
    %v365 = vand.u32 %v300, 2147483648
    %v366 = vshra.s32 %v365, 3
    %v367 = vand.u32 %v366, 268435456
    %v368 = vor.u32 %v364, %v367
    %v369 = vand.u32 %v300, 4194432
    %v370 = vshra.s32 %v369, 2
    %v371 = vand.u32 %v370, 1048608
    %v372 = vor.u32 %v368, %v371
    %v373 = vand.u32 %v300, 553648384
    %v374 = vshll.u32 %v373, 1
    %v375 = vor.u32 %v372, %v374
    %v376 = vand.u32 %v300, 16777472
    %v377 = vshll.u32 %v376, 2
    %v378 = vor.u32 %v375, %v377
    %v379 = vshll.u32 %v324, 3
    %v380 = vor.u32 %v378, %v379
    %v381 = vand.u32 %v300, 16
    %v382 = vshll.u32 %v381, 4
    %v383 = vor.u32 %v380, %v382
    %v384 = vand.u32 %v300, 4
    %v385 = vshll.u32 %v384, 12
    %v386 = vor.u32 %v383, %v385
    %v387 = vand.u32 %v300, 262148
    %v388 = vshll.u32 %v387, 13
    %v389 = vor.u32 %v386, %v388
    %v390 = vand.u32 %v300, 32
    %v391 = vshll.u32 %v390, 14
    %v392 = vor.u32 %v389, %v391
    %v393 = vshll.u32 %v339, 26
    %v394 = vor.u32 %v392, %v393
    %v395 = vor.u32 %v93, %v394
    %v396 = vand.u32 %v59, %v342
    %v397 = vxor.u32 %v56, %v396
    %v398 = vand.u32 %v61, %v342
    %v399 = vxor.u32 %v57, %v398
    %v400 = vxor.u32 %v397, %v399
    %v401 = vand.u32 %v400, %v395
    %v402 = vxor.u32 %v397, %v401
    %v403 = vand.u32 %v402, 67108864
    %v404 = vshra.s32 %v403, 26
    %v405 = vand.u32 %v404, 1
    %v406 = vand.u32 %v402, 1073741824
    %v407 = vshra.s32 %v406, 13
    %v408 = vand.u32 %v407, 131072
    %v409 = vor.u32 %v405, %v408
    %v410 = vand.u32 %v402, 128
    %v411 = vshra.s32 %v410, 4
    %v412 = vand.u32 %v411, 8
    %v413 = vor.u32 %v409, %v412
    %v414 = vand.u32 %v402, 32768
    %v415 = vshra.s32 %v414, 3
    %v416 = vand.u32 %v415, 4096
    %v417 = vor.u32 %v413, %v416
    %v418 = vand.u32 %v402, 268570632
    %v419 = vshra.s32 %v418, 2
    %v420 = vand.u32 %v419, 67142658
    %v421 = vor.u32 %v417, %v420
    %v422 = vand.u32 %v402, 276959240
    %v423 = vshra.s32 %v422, 1
    %v424 = vand.u32 %v423, 138479620
    %v425 = vor.u32 %v421, %v424
    %v426 = vand.u32 %v402, 8192
    %v427 = vshll.u32 %v426, 1
    %v428 = vor.u32 %v425, %v427
    %v429 = vand.u32 %v402, 524304
    %v430 = vshll.u32 %v429, 2
    %v431 = vor.u32 %v428, %v430
    %v432 = vand.u32 %v402, 2097152
    %v433 = vshll.u32 %v432, 3
    %v434 = vor.u32 %v431, %v433
    %v435 = vand.u32 %v402, 33571329
    %v436 = vshll.u32 %v435, 4
    %v437 = vor.u32 %v434, %v436
    %v438 = vand.u32 %v402, 1
    %v439 = vshll.u32 %v438, 5
    %v440 = vor.u32 %v437, %v439
    %v441 = vand.u32 %v402, 2
    %v442 = vshll.u32 %v441, 24
    %v443 = vor.u32 %v440, %v442
    %v444 = vor.u32 %v90, %v443
    %v445 = vshra.s32 %v403, 24
    %v446 = vand.u32 %v445, 4
    %v447 = vand.u32 %v402, 1048576
    %v448 = vshra.s32 %v447, 17
    %v449 = vand.u32 %v448, 8
    %v450 = vor.u32 %v446, %v449
    %v451 = vand.u32 %v402, 1114112
    %v452 = vshra.s32 %v451, 16
    %v453 = vand.u32 %v452, 17
    %v454 = vor.u32 %v450, %v453
    %v455 = vand.u32 %v402, 65536
    %v456 = vshra.s32 %v455, 15
    %v457 = vand.u32 %v456, 2
    %v458 = vor.u32 %v454, %v457
    %v459 = vand.u32 %v402, 2048
    %v460 = vshra.s32 %v459, 5
    %v461 = vand.u32 %v460, 64
    %v462 = vor.u32 %v458, %v461
    %v463 = vand.u32 %v402, 134219776
    %v464 = vshra.s32 %v463, 4
    %v465 = vand.u32 %v464, 8388736
    %v466 = vor.u32 %v462, %v465
    %v467 = vand.u32 %v402, 2147483648
    %v468 = vshra.s32 %v467, 3
    %v469 = vand.u32 %v468, 268435456
    %v470 = vor.u32 %v466, %v469
    %v471 = vand.u32 %v402, 4194432
    %v472 = vshra.s32 %v471, 2
    %v473 = vand.u32 %v472, 1048608
    %v474 = vor.u32 %v470, %v473
    %v475 = vand.u32 %v402, 553648384
    %v476 = vshll.u32 %v475, 1
    %v477 = vor.u32 %v474, %v476
    %v478 = vand.u32 %v402, 16777472
    %v479 = vshll.u32 %v478, 2
    %v480 = vor.u32 %v477, %v479
    %v481 = vshll.u32 %v426, 3
    %v482 = vor.u32 %v480, %v481
    %v483 = vand.u32 %v402, 16
    %v484 = vshll.u32 %v483, 4
    %v485 = vor.u32 %v482, %v484
    %v486 = vand.u32 %v402, 4
    %v487 = vshll.u32 %v486, 12
    %v488 = vor.u32 %v485, %v487
    %v489 = vand.u32 %v402, 262148
    %v490 = vshll.u32 %v489, 13
    %v491 = vor.u32 %v488, %v490
    %v492 = vand.u32 %v402, 32
    %v493 = vshll.u32 %v492, 14
    %v494 = vor.u32 %v491, %v493
    %v495 = vshll.u32 %v441, 26
    %v496 = vor.u32 %v494, %v495
    %v497 = vor.u32 %v93, %v496
    %v498 = vand.u32 %v59, %v444
    %v499 = vxor.u32 %v56, %v498
    %v500 = vand.u32 %v61, %v444
    %v501 = vxor.u32 %v57, %v500
    %v502 = vxor.u32 %v499, %v501
    %v503 = vand.u32 %v502, %v497
    %v504 = vxor.u32 %v499, %v503
    %v505 = vand.u32 %v504, 67108864
    %v506 = vshra.s32 %v505, 26
    %v507 = vand.u32 %v506, 1
    %v508 = vand.u32 %v504, 1073741824
    %v509 = vshra.s32 %v508, 13
    %v510 = vand.u32 %v509, 131072
    %v511 = vor.u32 %v507, %v510
    %v512 = vand.u32 %v504, 128
    %v513 = vshra.s32 %v512, 4
    %v514 = vand.u32 %v513, 8
    %v515 = vor.u32 %v511, %v514
    %v516 = vand.u32 %v504, 32768
    %v517 = vshra.s32 %v516, 3
    %v518 = vand.u32 %v517, 4096
    %v519 = vor.u32 %v515, %v518
    %v520 = vand.u32 %v504, 268570632
    %v521 = vshra.s32 %v520, 2
    %v522 = vand.u32 %v521, 67142658
    %v523 = vor.u32 %v519, %v522
    %v524 = vand.u32 %v504, 276959240
    %v525 = vshra.s32 %v524, 1
    %v526 = vand.u32 %v525, 138479620
    %v527 = vor.u32 %v523, %v526
    %v528 = vand.u32 %v504, 8192
    %v529 = vshll.u32 %v528, 1
    %v530 = vor.u32 %v527, %v529
    %v531 = vand.u32 %v504, 524304
    %v532 = vshll.u32 %v531, 2
    %v533 = vor.u32 %v530, %v532
    %v534 = vand.u32 %v504, 2097152
    %v535 = vshll.u32 %v534, 3
    %v536 = vor.u32 %v533, %v535
    %v537 = vand.u32 %v504, 33571329
    %v538 = vshll.u32 %v537, 4
    %v539 = vor.u32 %v536, %v538
    %v540 = vand.u32 %v504, 1
    %v541 = vshll.u32 %v540, 5
    %v542 = vor.u32 %v539, %v541
    %v543 = vand.u32 %v504, 2
    %v544 = vshll.u32 %v543, 24
    %v545 = vor.u32 %v542, %v544
    %v546 = vor.u32 %v90, %v545
    %v547 = vshra.s32 %v505, 24
    %v548 = vand.u32 %v547, 4
    %v549 = vand.u32 %v504, 1048576
    %v550 = vshra.s32 %v549, 17
    %v551 = vand.u32 %v550, 8
    %v552 = vor.u32 %v548, %v551
    %v553 = vand.u32 %v504, 1114112
    %v554 = vshra.s32 %v553, 16
    %v555 = vand.u32 %v554, 17
    %v556 = vor.u32 %v552, %v555
    %v557 = vand.u32 %v504, 65536
    %v558 = vshra.s32 %v557, 15
    %v559 = vand.u32 %v558, 2
    %v560 = vor.u32 %v556, %v559
    %v561 = vand.u32 %v504, 2048
    %v562 = vshra.s32 %v561, 5
    %v563 = vand.u32 %v562, 64
    %v564 = vor.u32 %v560, %v563
    %v565 = vand.u32 %v504, 134219776
    %v566 = vshra.s32 %v565, 4
    %v567 = vand.u32 %v566, 8388736
    %v568 = vor.u32 %v564, %v567
    %v569 = vand.u32 %v504, 2147483648
    %v570 = vshra.s32 %v569, 3
    %v571 = vand.u32 %v570, 268435456
    %v572 = vor.u32 %v568, %v571
    %v573 = vand.u32 %v504, 4194432
    %v574 = vshra.s32 %v573, 2
    %v575 = vand.u32 %v574, 1048608
    %v576 = vor.u32 %v572, %v575
    %v577 = vand.u32 %v504, 553648384
    %v578 = vshll.u32 %v577, 1
    %v579 = vor.u32 %v576, %v578
    %v580 = vand.u32 %v504, 16777472
    %v581 = vshll.u32 %v580, 2
    %v582 = vor.u32 %v579, %v581
    %v583 = vshll.u32 %v528, 3
    %v584 = vor.u32 %v582, %v583
    %v585 = vand.u32 %v504, 16
    %v586 = vshll.u32 %v585, 4
    %v587 = vor.u32 %v584, %v586
    %v588 = vand.u32 %v504, 4
    %v589 = vshll.u32 %v588, 12
    %v590 = vor.u32 %v587, %v589
    %v591 = vand.u32 %v504, 262148
    %v592 = vshll.u32 %v591, 13
    %v593 = vor.u32 %v590, %v592
    %v594 = vand.u32 %v504, 32
    %v595 = vshll.u32 %v594, 14
    %v596 = vor.u32 %v593, %v595
    %v597 = vshll.u32 %v543, 26
    %v598 = vor.u32 %v596, %v597
    %v599 = vor.u32 %v93, %v598
    %v600 = vand.u32 %v59, %v546
    %v601 = vxor.u32 %v56, %v600
    %v602 = vand.u32 %v61, %v546
    %v603 = vxor.u32 %v57, %v602
    %v604 = vxor.u32 %v601, %v603
    %v605 = vand.u32 %v604, %v599
    %v606 = vxor.u32 %v601, %v605
    %v607 = vand.u32 %v606, 67108864
    %v608 = vshra.s32 %v607, 26
    %v609 = vand.u32 %v608, 1
    %v610 = vand.u32 %v606, 1073741824
    %v611 = vshra.s32 %v610, 13
    %v612 = vand.u32 %v611, 131072
    %v613 = vor.u32 %v609, %v612
    %v614 = vand.u32 %v606, 128
    %v615 = vshra.s32 %v614, 4
    %v616 = vand.u32 %v615, 8
    %v617 = vor.u32 %v613, %v616
    %v618 = vand.u32 %v606, 32768
    %v619 = vshra.s32 %v618, 3
    %v620 = vand.u32 %v619, 4096
    %v621 = vor.u32 %v617, %v620
    %v622 = vand.u32 %v606, 268570632
    %v623 = vshra.s32 %v622, 2
    %v624 = vand.u32 %v623, 67142658
    %v625 = vor.u32 %v621, %v624
    %v626 = vand.u32 %v606, 276959240
    %v627 = vshra.s32 %v626, 1
    %v628 = vand.u32 %v627, 138479620
    %v629 = vor.u32 %v625, %v628
    %v630 = vand.u32 %v606, 8192
    %v631 = vshll.u32 %v630, 1
    %v632 = vor.u32 %v629, %v631
    %v633 = vand.u32 %v606, 524304
    %v634 = vshll.u32 %v633, 2
    %v635 = vor.u32 %v632, %v634
    %v636 = vand.u32 %v606, 2097152
    %v637 = vshll.u32 %v636, 3
    %v638 = vor.u32 %v635, %v637
    %v639 = vand.u32 %v606, 33571329
    %v640 = vshll.u32 %v639, 4
    %v641 = vor.u32 %v638, %v640
    %v642 = vand.u32 %v606, 1
    %v643 = vshll.u32 %v642, 5
    %v644 = vor.u32 %v641, %v643
    %v645 = vand.u32 %v606, 2
    %v646 = vshll.u32 %v645, 24
    %v647 = vor.u32 %v644, %v646
    %v648 = vor.u32 %v90, %v647
    %v649 = vshra.s32 %v607, 24
    %v650 = vand.u32 %v649, 4
    %v651 = vand.u32 %v606, 1048576
    %v652 = vshra.s32 %v651, 17
    %v653 = vand.u32 %v652, 8
    %v654 = vor.u32 %v650, %v653
    %v655 = vand.u32 %v606, 1114112
    %v656 = vshra.s32 %v655, 16
    %v657 = vand.u32 %v656, 17
    %v658 = vor.u32 %v654, %v657
    %v659 = vand.u32 %v606, 65536
    %v660 = vshra.s32 %v659, 15
    %v661 = vand.u32 %v660, 2
    %v662 = vor.u32 %v658, %v661
    %v663 = vand.u32 %v606, 2048
    %v664 = vshra.s32 %v663, 5
    %v665 = vand.u32 %v664, 64
    %v666 = vor.u32 %v662, %v665
    %v667 = vand.u32 %v606, 134219776
    %v668 = vshra.s32 %v667, 4
    %v669 = vand.u32 %v668, 8388736
    %v670 = vor.u32 %v666, %v669
    %v671 = vand.u32 %v606, 2147483648
    %v672 = vshra.s32 %v671, 3
    %v673 = vand.u32 %v672, 268435456
    %v674 = vor.u32 %v670, %v673
    %v675 = vand.u32 %v606, 4194432
    %v676 = vshra.s32 %v675, 2
    %v677 = vand.u32 %v676, 1048608
    %v678 = vor.u32 %v674, %v677
    %v679 = vand.u32 %v606, 553648384
    %v680 = vshll.u32 %v679, 1
    %v681 = vor.u32 %v678, %v680
    %v682 = vand.u32 %v606, 16777472
    %v683 = vshll.u32 %v682, 2
    %v684 = vor.u32 %v681, %v683
    %v685 = vshll.u32 %v630, 3
    %v686 = vor.u32 %v684, %v685
    %v687 = vand.u32 %v606, 16
    %v688 = vshll.u32 %v687, 4
    %v689 = vor.u32 %v686, %v688
    %v690 = vand.u32 %v606, 4
    %v691 = vshll.u32 %v690, 12
    %v692 = vor.u32 %v689, %v691
    %v693 = vand.u32 %v606, 262148
    %v694 = vshll.u32 %v693, 13
    %v695 = vor.u32 %v692, %v694
    %v696 = vand.u32 %v606, 32
    %v697 = vshll.u32 %v696, 14
    %v698 = vor.u32 %v695, %v697
    %v699 = vshll.u32 %v645, 26
    %v700 = vor.u32 %v698, %v699
    %v701 = vor.u32 %v93, %v700
    %v702 = vand.u32 %v59, %v648
    %v703 = vxor.u32 %v56, %v702
    %v704 = vand.u32 %v61, %v648
    %v705 = vxor.u32 %v57, %v704
    %v706 = vxor.u32 %v703, %v705
    %v707 = vand.u32 %v706, %v701
    %v708 = vxor.u32 %v703, %v707
    %v709 = vand.u32 %v708, 67108864
    %v710 = vshra.s32 %v709, 26
    %v711 = vand.u32 %v710, 1
    %v712 = vand.u32 %v708, 1073741824
    %v713 = vshra.s32 %v712, 13
    %v714 = vand.u32 %v713, 131072
    %v715 = vor.u32 %v711, %v714
    %v716 = vand.u32 %v708, 128
    %v717 = vshra.s32 %v716, 4
    %v718 = vand.u32 %v717, 8
    %v719 = vor.u32 %v715, %v718
    %v720 = vand.u32 %v708, 32768
    %v721 = vshra.s32 %v720, 3
    %v722 = vand.u32 %v721, 4096
    %v723 = vor.u32 %v719, %v722
    %v724 = vand.u32 %v708, 268570632
    %v725 = vshra.s32 %v724, 2
    %v726 = vand.u32 %v725, 67142658
    %v727 = vor.u32 %v723, %v726
    %v728 = vand.u32 %v708, 276959240
    %v729 = vshra.s32 %v728, 1
    %v730 = vand.u32 %v729, 138479620
    %v731 = vor.u32 %v727, %v730
    %v732 = vand.u32 %v708, 8192
    %v733 = vshll.u32 %v732, 1
    %v734 = vor.u32 %v731, %v733
    %v735 = vand.u32 %v708, 524304
    %v736 = vshll.u32 %v735, 2
    %v737 = vor.u32 %v734, %v736
    %v738 = vand.u32 %v708, 2097152
    %v739 = vshll.u32 %v738, 3
    %v740 = vor.u32 %v737, %v739
    %v741 = vand.u32 %v708, 33571329
    %v742 = vshll.u32 %v741, 4
    %v743 = vor.u32 %v740, %v742
    %v744 = vand.u32 %v708, 1
    %v745 = vshll.u32 %v744, 5
    %v746 = vor.u32 %v743, %v745
    %v747 = vand.u32 %v708, 2
    %v748 = vshll.u32 %v747, 24
    %v749 = vor.u32 %v746, %v748
    %v750 = vor.u32 %v90, %v749
    %v751 = vshra.s32 %v709, 24
    %v752 = vand.u32 %v751, 4
    %v753 = vand.u32 %v708, 1048576
    %v754 = vshra.s32 %v753, 17
    %v755 = vand.u32 %v754, 8
    %v756 = vor.u32 %v752, %v755
    %v757 = vand.u32 %v708, 1114112
    %v758 = vshra.s32 %v757, 16
    %v759 = vand.u32 %v758, 17
    %v760 = vor.u32 %v756, %v759
    %v761 = vand.u32 %v708, 65536
    %v762 = vshra.s32 %v761, 15
    %v763 = vand.u32 %v762, 2
    %v764 = vor.u32 %v760, %v763
    %v765 = vand.u32 %v708, 2048
    %v766 = vshra.s32 %v765, 5
    %v767 = vand.u32 %v766, 64
    %v768 = vor.u32 %v764, %v767
    %v769 = vand.u32 %v708, 134219776
    %v770 = vshra.s32 %v769, 4
    %v771 = vand.u32 %v770, 8388736
    %v772 = vor.u32 %v768, %v771
    %v773 = vand.u32 %v708, 2147483648
    %v774 = vshra.s32 %v773, 3
    %v775 = vand.u32 %v774, 268435456
    %v776 = vor.u32 %v772, %v775
    %v777 = vand.u32 %v708, 4194432
    %v778 = vshra.s32 %v777, 2
    %v779 = vand.u32 %v778, 1048608
    %v780 = vor.u32 %v776, %v779
    %v781 = vand.u32 %v708, 553648384
    %v782 = vshll.u32 %v781, 1
    %v783 = vor.u32 %v780, %v782
    %v784 = vand.u32 %v708, 16777472
    %v785 = vshll.u32 %v784, 2
    %v786 = vor.u32 %v783, %v785
    %v787 = vshll.u32 %v732, 3
    %v788 = vor.u32 %v786, %v787
    %v789 = vand.u32 %v708, 16
    %v790 = vshll.u32 %v789, 4
    %v791 = vor.u32 %v788, %v790
    %v792 = vand.u32 %v708, 4
    %v793 = vshll.u32 %v792, 12
    %v794 = vor.u32 %v791, %v793
    %v795 = vand.u32 %v708, 262148
    %v796 = vshll.u32 %v795, 13
    %v797 = vor.u32 %v794, %v796
    %v798 = vand.u32 %v708, 32
    %v799 = vshll.u32 %v798, 14
    %v800 = vor.u32 %v797, %v799
    %v801 = vshll.u32 %v747, 26
    %v802 = vor.u32 %v800, %v801
    %v803 = vor.u32 %v93, %v802
    %v804 = vand.u32 %v59, %v750
    %v805 = vxor.u32 %v56, %v804
    %v806 = vand.u32 %v61, %v750
    %v807 = vxor.u32 %v57, %v806
    %v808 = vxor.u32 %v805, %v807
    %v809 = vand.u32 %v808, %v803
    %v810 = vxor.u32 %v805, %v809
    %v811 = vand.u32 %v810, 67108864
    %v812 = vshra.s32 %v811, 26
    %v813 = vand.u32 %v812, 1
    %v814 = vand.u32 %v810, 1073741824
    %v815 = vshra.s32 %v814, 13
    %v816 = vand.u32 %v815, 131072
    %v817 = vor.u32 %v813, %v816
    %v818 = vand.u32 %v810, 128
    %v819 = vshra.s32 %v818, 4
    %v820 = vand.u32 %v819, 8
    %v821 = vor.u32 %v817, %v820
    %v822 = vand.u32 %v810, 32768
    %v823 = vshra.s32 %v822, 3
    %v824 = vand.u32 %v823, 4096
    %v825 = vor.u32 %v821, %v824
    %v826 = vand.u32 %v810, 268570632
    %v827 = vshra.s32 %v826, 2
    %v828 = vand.u32 %v827, 67142658
    %v829 = vor.u32 %v825, %v828
    %v830 = vand.u32 %v810, 276959240
    %v831 = vshra.s32 %v830, 1
    %v832 = vand.u32 %v831, 138479620
    %v833 = vor.u32 %v829, %v832
    %v834 = vand.u32 %v810, 8192
    %v835 = vshll.u32 %v834, 1
    %v836 = vor.u32 %v833, %v835
    %v837 = vand.u32 %v810, 524304
    %v838 = vshll.u32 %v837, 2
    %v839 = vor.u32 %v836, %v838
    %v840 = vand.u32 %v810, 2097152
    %v841 = vshll.u32 %v840, 3
    %v842 = vor.u32 %v839, %v841
    %v843 = vand.u32 %v810, 33571329
    %v844 = vshll.u32 %v843, 4
    %v845 = vor.u32 %v842, %v844
    %v846 = vand.u32 %v810, 1
    %v847 = vshll.u32 %v846, 5
    %v848 = vor.u32 %v845, %v847
    %v849 = vand.u32 %v810, 2
    %v850 = vshll.u32 %v849, 24
    %v851 = vor.u32 %v848, %v850
    %v852 = vor.u32 %v90, %v851
    %v853 = vshra.s32 %v811, 24
    %v854 = vand.u32 %v853, 4
    %v855 = vand.u32 %v810, 1048576
    %v856 = vshra.s32 %v855, 17
    %v857 = vand.u32 %v856, 8
    %v858 = vor.u32 %v854, %v857
    %v859 = vand.u32 %v810, 1114112
    %v860 = vshra.s32 %v859, 16
    %v861 = vand.u32 %v860, 17
    %v862 = vor.u32 %v858, %v861
    %v863 = vand.u32 %v810, 65536
    %v864 = vshra.s32 %v863, 15
    %v865 = vand.u32 %v864, 2
    %v866 = vor.u32 %v862, %v865
    %v867 = vand.u32 %v810, 2048
    %v868 = vshra.s32 %v867, 5
    %v869 = vand.u32 %v868, 64
    %v870 = vor.u32 %v866, %v869
    %v871 = vand.u32 %v810, 134219776
    %v872 = vshra.s32 %v871, 4
    %v873 = vand.u32 %v872, 8388736
    %v874 = vor.u32 %v870, %v873
    %v875 = vand.u32 %v810, 2147483648
    %v876 = vshra.s32 %v875, 3
    %v877 = vand.u32 %v876, 268435456
    %v878 = vor.u32 %v874, %v877
    %v879 = vand.u32 %v810, 4194432
    %v880 = vshra.s32 %v879, 2
    %v881 = vand.u32 %v880, 1048608
    %v882 = vor.u32 %v878, %v881
    %v883 = vand.u32 %v810, 553648384
    %v884 = vshll.u32 %v883, 1
    %v885 = vor.u32 %v882, %v884
    %v886 = vand.u32 %v810, 16777472
    %v887 = vshll.u32 %v886, 2
    %v888 = vor.u32 %v885, %v887
    %v889 = vshll.u32 %v834, 3
    %v890 = vor.u32 %v888, %v889
    %v891 = vand.u32 %v810, 16
    %v892 = vshll.u32 %v891, 4
    %v893 = vor.u32 %v890, %v892
    %v894 = vand.u32 %v810, 4
    %v895 = vshll.u32 %v894, 12
    %v896 = vor.u32 %v893, %v895
    %v897 = vand.u32 %v810, 262148
    %v898 = vshll.u32 %v897, 13
    %v899 = vor.u32 %v896, %v898
    %v900 = vand.u32 %v810, 32
    %v901 = vshll.u32 %v900, 14
    %v902 = vor.u32 %v899, %v901
    %v903 = vshll.u32 %v849, 26
    %v904 = vor.u32 %v902, %v903
    %v905 = vor.u32 %v93, %v904
    %v906 = vand.u32 %v59, %v852
    %v907 = vxor.u32 %v56, %v906
    %v908 = vand.u32 %v61, %v852
    %v909 = vxor.u32 %v57, %v908
    %v910 = vxor.u32 %v907, %v909
    %v911 = vand.u32 %v910, %v905
    %v912 = vxor.u32 %v907, %v911
    %v913 = vand.u32 %v912, 67108864
    %v914 = vshra.s32 %v913, 26
    %v915 = vand.u32 %v914, 1
    %v916 = vand.u32 %v912, 1073741824
    %v917 = vshra.s32 %v916, 13
    %v918 = vand.u32 %v917, 131072
    %v919 = vor.u32 %v915, %v918
    %v920 = vand.u32 %v912, 128
    %v921 = vshra.s32 %v920, 4
    %v922 = vand.u32 %v921, 8
    %v923 = vor.u32 %v919, %v922
    %v924 = vand.u32 %v912, 32768
    %v925 = vshra.s32 %v924, 3
    %v926 = vand.u32 %v925, 4096
    %v927 = vor.u32 %v923, %v926
    %v928 = vand.u32 %v912, 268570632
    %v929 = vshra.s32 %v928, 2
    %v930 = vand.u32 %v929, 67142658
    %v931 = vor.u32 %v927, %v930
    %v932 = vand.u32 %v912, 276959240
    %v933 = vshra.s32 %v932, 1
    %v934 = vand.u32 %v933, 138479620
    %v935 = vor.u32 %v931, %v934
    %v936 = vand.u32 %v912, 8192
    %v937 = vshll.u32 %v936, 1
    %v938 = vor.u32 %v935, %v937
    %v939 = vand.u32 %v912, 524304
    %v940 = vshll.u32 %v939, 2
    %v941 = vor.u32 %v938, %v940
    %v942 = vand.u32 %v912, 2097152
    %v943 = vshll.u32 %v942, 3
    %v944 = vor.u32 %v941, %v943
    %v945 = vand.u32 %v912, 33571329
    %v946 = vshll.u32 %v945, 4
    %v947 = vor.u32 %v944, %v946
    %v948 = vand.u32 %v912, 1
    %v949 = vshll.u32 %v948, 5
    %v950 = vor.u32 %v947, %v949
    %v951 = vand.u32 %v912, 2
    %v952 = vshll.u32 %v951, 24
    %v953 = vor.u32 %v950, %v952
    %v954 = vor.u32 %v90, %v953
    %v955 = vshra.s32 %v913, 24
    %v956 = vand.u32 %v955, 4
    %v957 = vand.u32 %v912, 1048576
    %v958 = vshra.s32 %v957, 17
    %v959 = vand.u32 %v958, 8
    %v960 = vor.u32 %v956, %v959
    %v961 = vand.u32 %v912, 1114112
    %v962 = vshra.s32 %v961, 16
    %v963 = vand.u32 %v962, 17
    %v964 = vor.u32 %v960, %v963
    %v965 = vand.u32 %v912, 65536
    %v966 = vshra.s32 %v965, 15
    %v967 = vand.u32 %v966, 2
    %v968 = vor.u32 %v964, %v967
    %v969 = vand.u32 %v912, 2048
    %v970 = vshra.s32 %v969, 5
    %v971 = vand.u32 %v970, 64
    %v972 = vor.u32 %v968, %v971
    %v973 = vand.u32 %v912, 134219776
    %v974 = vshra.s32 %v973, 4
    %v975 = vand.u32 %v974, 8388736
    %v976 = vor.u32 %v972, %v975
    %v977 = vand.u32 %v912, 2147483648
    %v978 = vshra.s32 %v977, 3
    %v979 = vand.u32 %v978, 268435456
    %v980 = vor.u32 %v976, %v979
    %v981 = vand.u32 %v912, 4194432
    %v982 = vshra.s32 %v981, 2
    %v983 = vand.u32 %v982, 1048608
    %v984 = vor.u32 %v980, %v983
    %v985 = vand.u32 %v912, 553648384
    %v986 = vshll.u32 %v985, 1
    %v987 = vor.u32 %v984, %v986
    %v988 = vand.u32 %v912, 16777472
    %v989 = vshll.u32 %v988, 2
    %v990 = vor.u32 %v987, %v989
    %v991 = vshll.u32 %v936, 3
    %v992 = vor.u32 %v990, %v991
    %v993 = vand.u32 %v912, 16
    %v994 = vshll.u32 %v993, 4
    %v995 = vor.u32 %v992, %v994
    %v996 = vand.u32 %v912, 4
    %v997 = vshll.u32 %v996, 12
    %v998 = vor.u32 %v995, %v997
    %v999 = vand.u32 %v912, 262148
    %v1000 = vshll.u32 %v999, 13
    %v1001 = vor.u32 %v998, %v1000
    %v1002 = vand.u32 %v912, 32
    %v1003 = vshll.u32 %v1002, 14
    %v1004 = vor.u32 %v1001, %v1003
    %v1005 = vshll.u32 %v951, 26
    %v1006 = vor.u32 %v1004, %v1005
    %v1007 = vor.u32 %v93, %v1006
    %v1008 = vand.u32 %v59, %v954
    %v1009 = vxor.u32 %v56, %v1008
    %v1010 = vand.u32 %v61, %v954
    %v1011 = vxor.u32 %v57, %v1010
    %v1012 = vxor.u32 %v1009, %v1011
    %v1013 = vand.u32 %v1012, %v1007
    %v1014 = vxor.u32 %v1009, %v1013
    %v1015 = vand.u32 %v1014, 67108864
    %v1016 = vshra.s32 %v1015, 26
    %v1017 = vand.u32 %v1016, 1
    %v1018 = vand.u32 %v1014, 1073741824
    %v1019 = vshra.s32 %v1018, 13
    %v1020 = vand.u32 %v1019, 131072
    %v1021 = vor.u32 %v1017, %v1020
    %v1022 = vand.u32 %v1014, 128
    %v1023 = vshra.s32 %v1022, 4
    %v1024 = vand.u32 %v1023, 8
    %v1025 = vor.u32 %v1021, %v1024
    %v1026 = vand.u32 %v1014, 32768
    %v1027 = vshra.s32 %v1026, 3
    %v1028 = vand.u32 %v1027, 4096
    %v1029 = vor.u32 %v1025, %v1028
    %v1030 = vand.u32 %v1014, 268570632
    %v1031 = vshra.s32 %v1030, 2
    %v1032 = vand.u32 %v1031, 67142658
    %v1033 = vor.u32 %v1029, %v1032
    %v1034 = vand.u32 %v1014, 276959240
    %v1035 = vshra.s32 %v1034, 1
    %v1036 = vand.u32 %v1035, 138479620
    %v1037 = vor.u32 %v1033, %v1036
    %v1038 = vand.u32 %v1014, 8192
    %v1039 = vshll.u32 %v1038, 1
    %v1040 = vor.u32 %v1037, %v1039
    %v1041 = vand.u32 %v1014, 524304
    %v1042 = vshll.u32 %v1041, 2
    %v1043 = vor.u32 %v1040, %v1042
    %v1044 = vand.u32 %v1014, 2097152
    %v1045 = vshll.u32 %v1044, 3
    %v1046 = vor.u32 %v1043, %v1045
    %v1047 = vand.u32 %v1014, 33571329
    %v1048 = vshll.u32 %v1047, 4
    %v1049 = vor.u32 %v1046, %v1048
    %v1050 = vand.u32 %v1014, 1
    %v1051 = vshll.u32 %v1050, 5
    %v1052 = vor.u32 %v1049, %v1051
    %v1053 = vand.u32 %v1014, 2
    %v1054 = vshll.u32 %v1053, 24
    %v1055 = vor.u32 %v1052, %v1054
    %v1056 = vor.u32 %v90, %v1055
    %v1057 = vshra.s32 %v1015, 24
    %v1058 = vand.u32 %v1057, 4
    %v1059 = vand.u32 %v1014, 1048576
    %v1060 = vshra.s32 %v1059, 17
    %v1061 = vand.u32 %v1060, 8
    %v1062 = vor.u32 %v1058, %v1061
    %v1063 = vand.u32 %v1014, 1114112
    %v1064 = vshra.s32 %v1063, 16
    %v1065 = vand.u32 %v1064, 17
    %v1066 = vor.u32 %v1062, %v1065
    %v1067 = vand.u32 %v1014, 65536
    %v1068 = vshra.s32 %v1067, 15
    %v1069 = vand.u32 %v1068, 2
    %v1070 = vor.u32 %v1066, %v1069
    %v1071 = vand.u32 %v1014, 2048
    %v1072 = vshra.s32 %v1071, 5
    %v1073 = vand.u32 %v1072, 64
    %v1074 = vor.u32 %v1070, %v1073
    %v1075 = vand.u32 %v1014, 134219776
    %v1076 = vshra.s32 %v1075, 4
    %v1077 = vand.u32 %v1076, 8388736
    %v1078 = vor.u32 %v1074, %v1077
    %v1079 = vand.u32 %v1014, 2147483648
    %v1080 = vshra.s32 %v1079, 3
    %v1081 = vand.u32 %v1080, 268435456
    %v1082 = vor.u32 %v1078, %v1081
    %v1083 = vand.u32 %v1014, 4194432
    %v1084 = vshra.s32 %v1083, 2
    %v1085 = vand.u32 %v1084, 1048608
    %v1086 = vor.u32 %v1082, %v1085
    %v1087 = vand.u32 %v1014, 553648384
    %v1088 = vshll.u32 %v1087, 1
    %v1089 = vor.u32 %v1086, %v1088
    %v1090 = vand.u32 %v1014, 16777472
    %v1091 = vshll.u32 %v1090, 2
    %v1092 = vor.u32 %v1089, %v1091
    %v1093 = vshll.u32 %v1038, 3
    %v1094 = vor.u32 %v1092, %v1093
    %v1095 = vand.u32 %v1014, 16
    %v1096 = vshll.u32 %v1095, 4
    %v1097 = vor.u32 %v1094, %v1096
    %v1098 = vand.u32 %v1014, 4
    %v1099 = vshll.u32 %v1098, 12
    %v1100 = vor.u32 %v1097, %v1099
    %v1101 = vand.u32 %v1014, 262148
    %v1102 = vshll.u32 %v1101, 13
    %v1103 = vor.u32 %v1100, %v1102
    %v1104 = vand.u32 %v1014, 32
    %v1105 = vshll.u32 %v1104, 14
    %v1106 = vor.u32 %v1103, %v1105
    %v1107 = vshll.u32 %v1053, 26
    %v1108 = vor.u32 %v1106, %v1107
    %v1109 = vor.u32 %v93, %v1108
    %v1110 = vand.u32 %v59, %v1056
    %v1111 = vxor.u32 %v56, %v1110
    %v1112 = vand.u32 %v61, %v1056
    %v1113 = vxor.u32 %v57, %v1112
    %v1114 = vxor.u32 %v1111, %v1113
    %v1115 = vand.u32 %v1114, %v1109
    %v1116 = vxor.u32 %v1111, %v1115
    %v1117 = vand.u32 %v1116, 67108864
    %v1118 = vshra.s32 %v1117, 26
    %v1119 = vand.u32 %v1118, 1
    %v1120 = vand.u32 %v1116, 1073741824
    %v1121 = vshra.s32 %v1120, 13
    %v1122 = vand.u32 %v1121, 131072
    %v1123 = vor.u32 %v1119, %v1122
    %v1124 = vand.u32 %v1116, 128
    %v1125 = vshra.s32 %v1124, 4
    %v1126 = vand.u32 %v1125, 8
    %v1127 = vor.u32 %v1123, %v1126
    %v1128 = vand.u32 %v1116, 32768
    %v1129 = vshra.s32 %v1128, 3
    %v1130 = vand.u32 %v1129, 4096
    %v1131 = vor.u32 %v1127, %v1130
    %v1132 = vand.u32 %v1116, 268570632
    %v1133 = vshra.s32 %v1132, 2
    %v1134 = vand.u32 %v1133, 67142658
    %v1135 = vor.u32 %v1131, %v1134
    %v1136 = vand.u32 %v1116, 276959240
    %v1137 = vshra.s32 %v1136, 1
    %v1138 = vand.u32 %v1137, 138479620
    %v1139 = vor.u32 %v1135, %v1138
    %v1140 = vand.u32 %v1116, 8192
    %v1141 = vshll.u32 %v1140, 1
    %v1142 = vor.u32 %v1139, %v1141
    %v1143 = vand.u32 %v1116, 524304
    %v1144 = vshll.u32 %v1143, 2
    %v1145 = vor.u32 %v1142, %v1144
    %v1146 = vand.u32 %v1116, 2097152
    %v1147 = vshll.u32 %v1146, 3
    %v1148 = vor.u32 %v1145, %v1147
    %v1149 = vand.u32 %v1116, 33571329
    %v1150 = vshll.u32 %v1149, 4
    %v1151 = vor.u32 %v1148, %v1150
    %v1152 = vand.u32 %v1116, 1
    %v1153 = vshll.u32 %v1152, 5
    %v1154 = vor.u32 %v1151, %v1153
    %v1155 = vand.u32 %v1116, 2
    %v1156 = vshll.u32 %v1155, 24
    %v1157 = vor.u32 %v1154, %v1156
    %v1158 = vor.u32 %v90, %v1157
    %v1159 = vshra.s32 %v1117, 24
    %v1160 = vand.u32 %v1159, 4
    %v1161 = vand.u32 %v1116, 1048576
    %v1162 = vshra.s32 %v1161, 17
    %v1163 = vand.u32 %v1162, 8
    %v1164 = vor.u32 %v1160, %v1163
    %v1165 = vand.u32 %v1116, 1114112
    %v1166 = vshra.s32 %v1165, 16
    %v1167 = vand.u32 %v1166, 17
    %v1168 = vor.u32 %v1164, %v1167
    %v1169 = vand.u32 %v1116, 65536
    %v1170 = vshra.s32 %v1169, 15
    %v1171 = vand.u32 %v1170, 2
    %v1172 = vor.u32 %v1168, %v1171
    %v1173 = vand.u32 %v1116, 2048
    %v1174 = vshra.s32 %v1173, 5
    %v1175 = vand.u32 %v1174, 64
    %v1176 = vor.u32 %v1172, %v1175
    %v1177 = vand.u32 %v1116, 134219776
    %v1178 = vshra.s32 %v1177, 4
    %v1179 = vand.u32 %v1178, 8388736
    %v1180 = vor.u32 %v1176, %v1179
    %v1181 = vand.u32 %v1116, 2147483648
    %v1182 = vshra.s32 %v1181, 3
    %v1183 = vand.u32 %v1182, 268435456
    %v1184 = vor.u32 %v1180, %v1183
    %v1185 = vand.u32 %v1116, 4194432
    %v1186 = vshra.s32 %v1185, 2
    %v1187 = vand.u32 %v1186, 1048608
    %v1188 = vor.u32 %v1184, %v1187
    %v1189 = vand.u32 %v1116, 553648384
    %v1190 = vshll.u32 %v1189, 1
    %v1191 = vor.u32 %v1188, %v1190
    %v1192 = vand.u32 %v1116, 16777472
    %v1193 = vshll.u32 %v1192, 2
    %v1194 = vor.u32 %v1191, %v1193
    %v1195 = vshll.u32 %v1140, 3
    %v1196 = vor.u32 %v1194, %v1195
    %v1197 = vand.u32 %v1116, 16
    %v1198 = vshll.u32 %v1197, 4
    %v1199 = vor.u32 %v1196, %v1198
    %v1200 = vand.u32 %v1116, 4
    %v1201 = vshll.u32 %v1200, 12
    %v1202 = vor.u32 %v1199, %v1201
    %v1203 = vand.u32 %v1116, 262148
    %v1204 = vshll.u32 %v1203, 13
    %v1205 = vor.u32 %v1202, %v1204
    %v1206 = vand.u32 %v1116, 32
    %v1207 = vshll.u32 %v1206, 14
    %v1208 = vor.u32 %v1205, %v1207
    %v1209 = vshll.u32 %v1155, 26
    %v1210 = vor.u32 %v1208, %v1209
    %v1211 = vor.u32 %v93, %v1210
    %v1212 = vand.u32 %v59, %v1158
    %v1213 = vxor.u32 %v56, %v1212
    %v1214 = vand.u32 %v61, %v1158
    %v1215 = vxor.u32 %v57, %v1214
    %v1216 = vxor.u32 %v1213, %v1215
    %v1217 = vand.u32 %v1216, %v1211
    %v1218 = vxor.u32 %v1213, %v1217
    %v1219 = vand.u32 %v1218, 67108864
    %v1220 = vshra.s32 %v1219, 26
    %v1221 = vand.u32 %v1220, 1
    %v1222 = vand.u32 %v1218, 1073741824
    %v1223 = vshra.s32 %v1222, 13
    %v1224 = vand.u32 %v1223, 131072
    %v1225 = vor.u32 %v1221, %v1224
    %v1226 = vand.u32 %v1218, 128
    %v1227 = vshra.s32 %v1226, 4
    %v1228 = vand.u32 %v1227, 8
    %v1229 = vor.u32 %v1225, %v1228
    %v1230 = vand.u32 %v1218, 32768
    %v1231 = vshra.s32 %v1230, 3
    %v1232 = vand.u32 %v1231, 4096
    %v1233 = vor.u32 %v1229, %v1232
    %v1234 = vand.u32 %v1218, 268570632
    %v1235 = vshra.s32 %v1234, 2
    %v1236 = vand.u32 %v1235, 67142658
    %v1237 = vor.u32 %v1233, %v1236
    %v1238 = vand.u32 %v1218, 276959240
    %v1239 = vshra.s32 %v1238, 1
    %v1240 = vand.u32 %v1239, 138479620
    %v1241 = vor.u32 %v1237, %v1240
    %v1242 = vand.u32 %v1218, 8192
    %v1243 = vshll.u32 %v1242, 1
    %v1244 = vor.u32 %v1241, %v1243
    %v1245 = vand.u32 %v1218, 524304
    %v1246 = vshll.u32 %v1245, 2
    %v1247 = vor.u32 %v1244, %v1246
    %v1248 = vand.u32 %v1218, 2097152
    %v1249 = vshll.u32 %v1248, 3
    %v1250 = vor.u32 %v1247, %v1249
    %v1251 = vand.u32 %v1218, 33571329
    %v1252 = vshll.u32 %v1251, 4
    %v1253 = vor.u32 %v1250, %v1252
    %v1254 = vand.u32 %v1218, 1
    %v1255 = vshll.u32 %v1254, 5
    %v1256 = vor.u32 %v1253, %v1255
    %v1257 = vand.u32 %v1218, 2
    %v1258 = vshll.u32 %v1257, 24
    %v1259 = vor.u32 %v1256, %v1258
    %v1260 = vor.u32 %v90, %v1259
    %v1261 = vshra.s32 %v1219, 24
    %v1262 = vand.u32 %v1261, 4
    %v1263 = vand.u32 %v1218, 1048576
    %v1264 = vshra.s32 %v1263, 17
    %v1265 = vand.u32 %v1264, 8
    %v1266 = vor.u32 %v1262, %v1265
    %v1267 = vand.u32 %v1218, 1114112
    %v1268 = vshra.s32 %v1267, 16
    %v1269 = vand.u32 %v1268, 17
    %v1270 = vor.u32 %v1266, %v1269
    %v1271 = vand.u32 %v1218, 65536
    %v1272 = vshra.s32 %v1271, 15
    %v1273 = vand.u32 %v1272, 2
    %v1274 = vor.u32 %v1270, %v1273
    %v1275 = vand.u32 %v1218, 2048
    %v1276 = vshra.s32 %v1275, 5
    %v1277 = vand.u32 %v1276, 64
    %v1278 = vor.u32 %v1274, %v1277
    %v1279 = vand.u32 %v1218, 134219776
    %v1280 = vshra.s32 %v1279, 4
    %v1281 = vand.u32 %v1280, 8388736
    %v1282 = vor.u32 %v1278, %v1281
    %v1283 = vand.u32 %v1218, 2147483648
    %v1284 = vshra.s32 %v1283, 3
    %v1285 = vand.u32 %v1284, 268435456
    %v1286 = vor.u32 %v1282, %v1285
    %v1287 = vand.u32 %v1218, 4194432
    %v1288 = vshra.s32 %v1287, 2
    %v1289 = vand.u32 %v1288, 1048608
    %v1290 = vor.u32 %v1286, %v1289
    %v1291 = vand.u32 %v1218, 553648384
    %v1292 = vshll.u32 %v1291, 1
    %v1293 = vor.u32 %v1290, %v1292
    %v1294 = vand.u32 %v1218, 16777472
    %v1295 = vshll.u32 %v1294, 2
    %v1296 = vor.u32 %v1293, %v1295
    %v1297 = vshll.u32 %v1242, 3
    %v1298 = vor.u32 %v1296, %v1297
    %v1299 = vand.u32 %v1218, 16
    %v1300 = vshll.u32 %v1299, 4
    %v1301 = vor.u32 %v1298, %v1300
    %v1302 = vand.u32 %v1218, 4
    %v1303 = vshll.u32 %v1302, 12
    %v1304 = vor.u32 %v1301, %v1303
    %v1305 = vand.u32 %v1218, 262148
    %v1306 = vshll.u32 %v1305, 13
    %v1307 = vor.u32 %v1304, %v1306
    %v1308 = vand.u32 %v1218, 32
    %v1309 = vshll.u32 %v1308, 14
    %v1310 = vor.u32 %v1307, %v1309
    %v1311 = vshll.u32 %v1257, 26
    %v1312 = vor.u32 %v1310, %v1311
    %v1313 = vor.u32 %v93, %v1312
    %v1314 = vand.u32 %v59, %v1260
    %v1315 = vxor.u32 %v56, %v1314
    %v1316 = vand.u32 %v61, %v1260
    %v1317 = vxor.u32 %v57, %v1316
    %v1318 = vxor.u32 %v1315, %v1317
    %v1319 = vand.u32 %v1318, %v1313
    %v1320 = vxor.u32 %v1315, %v1319
    %v1321 = vand.u32 %v1320, 67108864
    %v1322 = vshra.s32 %v1321, 26
    %v1323 = vand.u32 %v1322, 1
    %v1324 = vand.u32 %v1320, 1073741824
    %v1325 = vshra.s32 %v1324, 13
    %v1326 = vand.u32 %v1325, 131072
    %v1327 = vor.u32 %v1323, %v1326
    %v1328 = vand.u32 %v1320, 128
    %v1329 = vshra.s32 %v1328, 4
    %v1330 = vand.u32 %v1329, 8
    %v1331 = vor.u32 %v1327, %v1330
    %v1332 = vand.u32 %v1320, 32768
    %v1333 = vshra.s32 %v1332, 3
    %v1334 = vand.u32 %v1333, 4096
    %v1335 = vor.u32 %v1331, %v1334
    %v1336 = vand.u32 %v1320, 268570632
    %v1337 = vshra.s32 %v1336, 2
    %v1338 = vand.u32 %v1337, 67142658
    %v1339 = vor.u32 %v1335, %v1338
    %v1340 = vand.u32 %v1320, 276959240
    %v1341 = vshra.s32 %v1340, 1
    %v1342 = vand.u32 %v1341, 138479620
    %v1343 = vor.u32 %v1339, %v1342
    %v1344 = vand.u32 %v1320, 8192
    %v1345 = vshll.u32 %v1344, 1
    %v1346 = vor.u32 %v1343, %v1345
    %v1347 = vand.u32 %v1320, 524304
    %v1348 = vshll.u32 %v1347, 2
    %v1349 = vor.u32 %v1346, %v1348
    %v1350 = vand.u32 %v1320, 2097152
    %v1351 = vshll.u32 %v1350, 3
    %v1352 = vor.u32 %v1349, %v1351
    %v1353 = vand.u32 %v1320, 33571329
    %v1354 = vshll.u32 %v1353, 4
    %v1355 = vor.u32 %v1352, %v1354
    %v1356 = vand.u32 %v1320, 1
    %v1357 = vshll.u32 %v1356, 5
    %v1358 = vor.u32 %v1355, %v1357
    %v1359 = vand.u32 %v1320, 2
    %v1360 = vshll.u32 %v1359, 24
    %v1361 = vor.u32 %v1358, %v1360
    %v1362 = vor.u32 %v90, %v1361
    %v1363 = vshra.s32 %v1321, 24
    %v1364 = vand.u32 %v1363, 4
    %v1365 = vand.u32 %v1320, 1048576
    %v1366 = vshra.s32 %v1365, 17
    %v1367 = vand.u32 %v1366, 8
    %v1368 = vor.u32 %v1364, %v1367
    %v1369 = vand.u32 %v1320, 1114112
    %v1370 = vshra.s32 %v1369, 16
    %v1371 = vand.u32 %v1370, 17
    %v1372 = vor.u32 %v1368, %v1371
    %v1373 = vand.u32 %v1320, 65536
    %v1374 = vshra.s32 %v1373, 15
    %v1375 = vand.u32 %v1374, 2
    %v1376 = vor.u32 %v1372, %v1375
    %v1377 = vand.u32 %v1320, 2048
    %v1378 = vshra.s32 %v1377, 5
    %v1379 = vand.u32 %v1378, 64
    %v1380 = vor.u32 %v1376, %v1379
    %v1381 = vand.u32 %v1320, 134219776
    %v1382 = vshra.s32 %v1381, 4
    %v1383 = vand.u32 %v1382, 8388736
    %v1384 = vor.u32 %v1380, %v1383
    %v1385 = vand.u32 %v1320, 2147483648
    %v1386 = vshra.s32 %v1385, 3
    %v1387 = vand.u32 %v1386, 268435456
    %v1388 = vor.u32 %v1384, %v1387
    %v1389 = vand.u32 %v1320, 4194432
    %v1390 = vshra.s32 %v1389, 2
    %v1391 = vand.u32 %v1390, 1048608
    %v1392 = vor.u32 %v1388, %v1391
    %v1393 = vand.u32 %v1320, 553648384
    %v1394 = vshll.u32 %v1393, 1
    %v1395 = vor.u32 %v1392, %v1394
    %v1396 = vand.u32 %v1320, 16777472
    %v1397 = vshll.u32 %v1396, 2
    %v1398 = vor.u32 %v1395, %v1397
    %v1399 = vshll.u32 %v1344, 3
    %v1400 = vor.u32 %v1398, %v1399
    %v1401 = vand.u32 %v1320, 16
    %v1402 = vshll.u32 %v1401, 4
    %v1403 = vor.u32 %v1400, %v1402
    %v1404 = vand.u32 %v1320, 4
    %v1405 = vshll.u32 %v1404, 12
    %v1406 = vor.u32 %v1403, %v1405
    %v1407 = vand.u32 %v1320, 262148
    %v1408 = vshll.u32 %v1407, 13
    %v1409 = vor.u32 %v1406, %v1408
    %v1410 = vand.u32 %v1320, 32
    %v1411 = vshll.u32 %v1410, 14
    %v1412 = vor.u32 %v1409, %v1411
    %v1413 = vshll.u32 %v1359, 26
    %v1414 = vor.u32 %v1412, %v1413
    %v1415 = vor.u32 %v93, %v1414
    %v1416 = vand.u32 %v59, %v1362
    %v1417 = vxor.u32 %v56, %v1416
    %v1418 = vand.u32 %v61, %v1362
    %v1419 = vxor.u32 %v57, %v1418
    %v1420 = vxor.u32 %v1417, %v1419
    %v1421 = vand.u32 %v1420, %v1415
    %v1422 = vxor.u32 %v1417, %v1421
    %v1423 = vand.u32 %v1422, 67108864
    %v1424 = vshra.s32 %v1423, 26
    %v1425 = vand.u32 %v1424, 1
    %v1426 = vand.u32 %v1422, 1073741824
    %v1427 = vshra.s32 %v1426, 13
    %v1428 = vand.u32 %v1427, 131072
    %v1429 = vor.u32 %v1425, %v1428
    %v1430 = vand.u32 %v1422, 128
    %v1431 = vshra.s32 %v1430, 4
    %v1432 = vand.u32 %v1431, 8
    %v1433 = vor.u32 %v1429, %v1432
    %v1434 = vand.u32 %v1422, 32768
    %v1435 = vshra.s32 %v1434, 3
    %v1436 = vand.u32 %v1435, 4096
    %v1437 = vor.u32 %v1433, %v1436
    %v1438 = vand.u32 %v1422, 268570632
    %v1439 = vshra.s32 %v1438, 2
    %v1440 = vand.u32 %v1439, 67142658
    %v1441 = vor.u32 %v1437, %v1440
    %v1442 = vand.u32 %v1422, 276959240
    %v1443 = vshra.s32 %v1442, 1
    %v1444 = vand.u32 %v1443, 138479620
    %v1445 = vor.u32 %v1441, %v1444
    %v1446 = vand.u32 %v1422, 8192
    %v1447 = vshll.u32 %v1446, 1
    %v1448 = vor.u32 %v1445, %v1447
    %v1449 = vand.u32 %v1422, 524304
    %v1450 = vshll.u32 %v1449, 2
    %v1451 = vor.u32 %v1448, %v1450
    %v1452 = vand.u32 %v1422, 2097152
    %v1453 = vshll.u32 %v1452, 3
    %v1454 = vor.u32 %v1451, %v1453
    %v1455 = vand.u32 %v1422, 33571329
    %v1456 = vshll.u32 %v1455, 4
    %v1457 = vor.u32 %v1454, %v1456
    %v1458 = vand.u32 %v1422, 1
    %v1459 = vshll.u32 %v1458, 5
    %v1460 = vor.u32 %v1457, %v1459
    %v1461 = vand.u32 %v1422, 2
    %v1462 = vshll.u32 %v1461, 24
    %v1463 = vor.u32 %v1460, %v1462
    %v1464 = vor.u32 %v90, %v1463
    %v1465 = vshra.s32 %v1423, 24
    %v1466 = vand.u32 %v1465, 4
    %v1467 = vand.u32 %v1422, 1048576
    %v1468 = vshra.s32 %v1467, 17
    %v1469 = vand.u32 %v1468, 8
    %v1470 = vor.u32 %v1466, %v1469
    %v1471 = vand.u32 %v1422, 1114112
    %v1472 = vshra.s32 %v1471, 16
    %v1473 = vand.u32 %v1472, 17
    %v1474 = vor.u32 %v1470, %v1473
    %v1475 = vand.u32 %v1422, 65536
    %v1476 = vshra.s32 %v1475, 15
    %v1477 = vand.u32 %v1476, 2
    %v1478 = vor.u32 %v1474, %v1477
    %v1479 = vand.u32 %v1422, 2048
    %v1480 = vshra.s32 %v1479, 5
    %v1481 = vand.u32 %v1480, 64
    %v1482 = vor.u32 %v1478, %v1481
    %v1483 = vand.u32 %v1422, 134219776
    %v1484 = vshra.s32 %v1483, 4
    %v1485 = vand.u32 %v1484, 8388736
    %v1486 = vor.u32 %v1482, %v1485
    %v1487 = vand.u32 %v1422, 2147483648
    %v1488 = vshra.s32 %v1487, 3
    %v1489 = vand.u32 %v1488, 268435456
    %v1490 = vor.u32 %v1486, %v1489
    %v1491 = vand.u32 %v1422, 4194432
    %v1492 = vshra.s32 %v1491, 2
    %v1493 = vand.u32 %v1492, 1048608
    %v1494 = vor.u32 %v1490, %v1493
    %v1495 = vand.u32 %v1422, 553648384
    %v1496 = vshll.u32 %v1495, 1
    %v1497 = vor.u32 %v1494, %v1496
    %v1498 = vand.u32 %v1422, 16777472
    %v1499 = vshll.u32 %v1498, 2
    %v1500 = vor.u32 %v1497, %v1499
    %v1501 = vshll.u32 %v1446, 3
    %v1502 = vor.u32 %v1500, %v1501
    %v1503 = vand.u32 %v1422, 16
    %v1504 = vshll.u32 %v1503, 4
    %v1505 = vor.u32 %v1502, %v1504
    %v1506 = vand.u32 %v1422, 4
    %v1507 = vshll.u32 %v1506, 12
    %v1508 = vor.u32 %v1505, %v1507
    %v1509 = vand.u32 %v1422, 262148
    %v1510 = vshll.u32 %v1509, 13
    %v1511 = vor.u32 %v1508, %v1510
    %v1512 = vand.u32 %v1422, 32
    %v1513 = vshll.u32 %v1512, 14
    %v1514 = vor.u32 %v1511, %v1513
    %v1515 = vshll.u32 %v1461, 26
    %v1516 = vor.u32 %v1514, %v1515
    %v1517 = vor.u32 %v93, %v1516
    %v1518 = vand.u32 %v59, %v1464
    %v1519 = vxor.u32 %v56, %v1518
    %v1520 = vand.u32 %v61, %v1464
    %v1521 = vxor.u32 %v57, %v1520
    %v1522 = vxor.u32 %v1519, %v1521
    %v1523 = vand.u32 %v1522, %v1517
    %v1524 = vxor.u32 %v1519, %v1523
    %v1525 = vshra.s32 %v1524, 21
    %v1526 = vand.u32 %v1525, 1
    %vm1527 = vcmp.ne.s32.totalorder %v1526, 0
    %v1528 = vshra.s32 %v1524, 27
    %v1529 = vand.u32 %v1528, 1
    %vm1530 = vcmp.ne.s32.totalorder %v1529, 0
    %v1531 = vstv %s68
    %v1532 = vstv %s67
    %v1533 = vsel %vm1527, %v1531, %v1532
    %v1534 = vstv %s66
    %v1535 = vstv %s65
    %v1536 = vsel %vm1527, %v1534, %v1535
    %v1537 = vsel %vm1530, %v1533, %v1536
    %1538 = vst [vmem:[#allocation9] sm:$0xff] %v1537
    %v1539 = vshra.s32 %v1524, 23
    %v1540 = vand.u32 %v1539, 1
    %vm1541 = vcmp.ne.s32.totalorder %v1540, 0
    %v1542 = vshra.s32 %v1524, 19
    %v1543 = vand.u32 %v1542, 1
    %vm1544 = vcmp.ne.s32.totalorder %v1543, 0
    %v1545 = vstv %s72
    %v1546 = vstv %s71
    %v1547 = vsel %vm1541, %v1545, %v1546
    %v1548 = vstv %s70
    %v1549 = vstv %s69
    %v1550 = vsel %vm1541, %v1548, %v1549
    %v1551 = vsel %vm1544, %v1547, %v1550
    %s1552 = scalar_lea.vmem [#allocation9], 8
    %1553 = vst [vmem:[%s1552] sm:$0xff] %v1551
    %v1554 = vshra.s32 %v1524, 6
    %v1555 = vand.u32 %v1554, 1
    %vm1556 = vcmp.ne.s32.totalorder %v1555, 0
    %v1557 = vstv %s74
    %v1558 = vstv %s73
    %v1559 = vsel %vm1556, %v1557, %v1558
    %s1560 = scalar_lea.vmem [#allocation9], 16
    %1561 = vst [vmem:[%s1560] sm:$0xff] %v1559
    // Predicated region
    $region26: #{tpu_custom_call.1} parent=1 // pred_check
      _
    $region27: #{tpu_custom_call.1} parent=1 // pred_check_branch
      %1563 = sbr.rel (0) target = $region29
    $region28: #{tpu_custom_call.1} parent=1 // pred_region
      %s1565 = ssub.s32 384, 384
      %1566 = vsyncadd [#allocation4], %s1565
      %s1567 = sshll.u32 [#allocation9], 4
      %s1568 = int_to_ptr.vmem [resolvable:$true] %s1567
      %1573 = dma.vmem_to_hbm [thread:$0]  %s1568, 384, %s3, [#allocation4], 128, 128, 8
    $region29: #{tpu_custom_call.1} parent=1 // pred_fallthru
      _
    // Predicated region
    $region30: #{tpu_custom_call.1} parent=1 // pred_check
      _
    $region31: #{tpu_custom_call.1} parent=1 // pred_check_branch
      %1575 = sbr.rel (0) target = $region33
    $region32: #{tpu_custom_call.1} parent=1 // pred_region
      %1576 = dma.done [#allocation4], 384
    $region33: #{tpu_custom_call.1} parent=1 // pred_fallthru
      _
    %1577 = vsyncpa [#allocation3], 1
    %1578 = vsyncpa [#allocation4], 1
    %1579 = vsyncpa [#allocation5], 1
    %1580 = vsyncpa [#allocation6], 1

</llo_original>
